<compile_context>
chip_gen: v7x
topology: tpu7x:2x2x1
jax: 0.10.0
libtpu: 0.0.40
codegen_flags: <defaults>
</compile_context>

<pallas_src>
import jax
import jax.numpy as jnp
from jax.experimental import pallas as pl
from jax.experimental.pallas import tpu as pltpu

# Fixed LeNet/CIFAR geometry implied by Net.forward (32x32x3 input).
_H0, _W0, _C0 = 32, 32, 3
_K = 5
_C1, _C2 = 6, 16
_H1, _W1 = _H0 - _K + 1, _W0 - _K + 1          # 28, 28
_HP1, _WP1 = _H1 // 2, _W1 // 2                # 14, 14
_H2, _W2 = _HP1 - _K + 1, _WP1 - _K + 1        # 10, 10
_HP2, _WP2 = _H2 // 2, _W2 // 2                # 5, 5
_F1, _F2, _F3 = 120, 84, 10


# ---------------------------------------------------------------------------
# Fused forward kernel (one image per grid step, everything VMEM-resident)
# ---------------------------------------------------------------------------
def _lenet_kernel(x_ref, wb1_ref, b1_ref, rs1_ref, cs1_ref,
                  wb2_ref, b2_ref, rs2_ref, cs2_ref,
                  wf1_ref, bf1_ref, wf2_ref, bf2_ref, wf3_ref, bf3_ref,
                  o_ref):
    f32, bf16 = jnp.float32, jnp.bfloat16

    x = x_ref[0]                                         # (32, 96) f32

    # conv1 (+bias+ReLU): (32, W0*C0) -> (28, W1*C1), banded bf16 matmuls
    acc1 = jnp.zeros((_H1, _W1 * _C1), f32)
    for ki in range(_K):
        acc1 = acc1 + jnp.dot(x[ki:ki + _H1, :].astype(bf16), wb1_ref[ki],
                              preferred_element_type=f32)
    h1 = jnp.maximum(acc1 + b1_ref[...], 0.0)

    # maxpool 2x2: (28, 28*6) -> (14, 14*6) via max + 0/1 selection matmuls
    rmax1 = jnp.maximum(jnp.dot(rs1_ref[0], h1, preferred_element_type=f32),
                        jnp.dot(rs1_ref[1], h1, preferred_element_type=f32))
    p1 = jnp.maximum(jnp.dot(rmax1, cs1_ref[0], preferred_element_type=f32),
                     jnp.dot(rmax1, cs1_ref[1], preferred_element_type=f32))

    # conv2 (+bias+ReLU): (14, 14*6) -> (10, 10*16)
    acc2 = jnp.zeros((_H2, _W2 * _C2), f32)
    for ki in range(_K):
        acc2 = acc2 + jnp.dot(p1[ki:ki + _H2, :].astype(bf16), wb2_ref[ki],
                              preferred_element_type=f32)
    h2 = jnp.maximum(acc2 + b2_ref[...], 0.0)

    # maxpool 2x2: (10, 10*16) -> (5, 5*16)
    rmax2 = jnp.maximum(jnp.dot(rs2_ref[0], h2, preferred_element_type=f32),
                        jnp.dot(rs2_ref[1], h2, preferred_element_type=f32))
    p2 = jnp.maximum(jnp.dot(rmax2, cs2_ref[0], preferred_element_type=f32),
                     jnp.dot(rmax2, cs2_ref[1], preferred_element_type=f32))

    # fc1 (+ReLU): contract the (5, 80) slab row-by-row -> (1, 120)
    f1 = jnp.zeros((1, _F1), f32)
    for hh in range(_HP2):
        f1 = f1 + jnp.dot(p2[hh:hh + 1, :].astype(bf16), wf1_ref[hh],
                          preferred_element_type=f32)
    f1 = jnp.maximum(f1 + bf1_ref[...], 0.0)

    # fc2 (+ReLU): (1, 120) -> (1, 84)
    f2 = jnp.dot(f1.astype(bf16), wf2_ref[...], preferred_element_type=f32)
    f2 = jnp.maximum(f2 + bf2_ref[...], 0.0)

    # fc3: (1, 84) -> (1, 10)
    f3 = jnp.dot(f2.astype(bf16), wf3_ref[...], preferred_element_type=f32)
    f3 = f3 + bf3_ref[...]

    o_ref[0] = f3.astype(o_ref.dtype)


# ---------------------------------------------------------------------------
# One-time weight re-layout (outside the forward)
# ---------------------------------------------------------------------------
def _band_conv_weight(w_oihw, in_w):
    """(Cout,Cin,KH,KW) -> (KH, in_w*Cin, out_w*Cout) banded matmul weight.

    Row index = in_col*Cin + cin   (matches the (H, W*Cin) activation slab)
    Col index = out_col*Cout + cout (lane-dense conv output layout)
    """
    cout, cin, kh, kw = w_oihw.shape
    out_w = in_w - kw + 1
    ic = jnp.arange(in_w)[:, None, None]
    oc = jnp.arange(out_w)[None, :, None]
    kj = jnp.arange(kw)[None, None, :]
    sel = (ic == oc + kj).astype(w_oihw.dtype)          # (in_w, out_w, kw)
    wb = jnp.einsum("iwj,dckj->kicwd", sel, w_oihw)     # (kh,in_w,cin,out_w,cout)
    return wb.reshape(kh, in_w * cin, out_w * cout)


def _pool_selectors(h, w, c):
    """0/1 matrices for 2x2 stride-2 pooling on a lane-dense (h, w*c) slab."""
    oh, ow = h // 2, w // 2
    ri = jnp.arange(h)[None, :]
    ro = jnp.arange(oh)[:, None]
    rs = jnp.stack([(ri == 2 * ro).astype(jnp.float32),
                    (ri == 2 * ro + 1).astype(jnp.float32)])       # (2, oh, h)
    li = jnp.arange(w * c)[:, None]
    lo = jnp.arange(ow * c)[None, :]
    wi, ci = li // c, li % c
    wo, co = lo // c, lo % c
    cs = jnp.stack([((wi == 2 * wo) & (ci == co)).astype(jnp.float32),
                    ((wi == 2 * wo + 1) & (ci == co)).astype(jnp.float32)])
    return rs, cs                                       # cs: (2, w*c, ow*c)


def prepare_params(params):
    """Re-layout PyTorch-style parameters for the fused kernel (done once)."""
    bf16, f32 = jnp.bfloat16, jnp.float32
    rs1, cs1 = _pool_selectors(_H1, _W1, _C1)
    rs2, cs2 = _pool_selectors(_H2, _W2, _C2)

    # fc1 consumes the pooled (HP2, WP2*C2) slab row-by-row; PyTorch flattens
    # NCHW, i.e. input index c*25 + h*5 + w.
    wf1 = params["fc1_w"].reshape(_F1, _C2, _HP2, _WP2)
    wf1 = jnp.transpose(wf1, (2, 3, 1, 0)).reshape(_HP2, _WP2 * _C2, _F1)

    return {
        "wb1": _band_conv_weight(params["conv1_w"], _W0).astype(bf16),
        "b1": jnp.tile(params["conv1_b"], _W1).reshape(1, _W1 * _C1).astype(f32),
        "rs1": rs1, "cs1": cs1,
        "wb2": _band_conv_weight(params["conv2_w"], _WP1).astype(bf16),
        "b2": jnp.tile(params["conv2_b"], _W2).reshape(1, _W2 * _C2).astype(f32),
        "rs2": rs2, "cs2": cs2,
        "wf1": wf1.astype(bf16),
        "bf1": params["fc1_b"].reshape(1, _F1).astype(f32),
        "wf2": params["fc2_w"].T.astype(bf16),
        "bf2": params["fc2_b"].reshape(1, _F2).astype(f32),
        "wf3": params["fc3_w"].T.astype(bf16),
        "bf3": params["fc3_b"].reshape(1, _F3).astype(f32),
    }


# ---------------------------------------------------------------------------
# Parameter init (deterministic, PyTorch-default-style uniform(+-1/sqrt(fan_in)))
# ---------------------------------------------------------------------------
def init_params(key):
    def u(key, shape, fan_in):
        bound = 1.0 / jnp.sqrt(float(fan_in))
        return jax.random.uniform(key, shape, jnp.float32, -bound, bound)

    ks = jax.random.split(key, 10)
    p = {}
    p["conv1_w"] = u(ks[0], (6, 3, 5, 5), 3 * 5 * 5)
    p["conv1_b"] = u(ks[1], (6,), 3 * 5 * 5)
    p["conv2_w"] = u(ks[2], (16, 6, 5, 5), 6 * 5 * 5)
    p["conv2_b"] = u(ks[3], (16,), 6 * 5 * 5)
    p["fc1_w"] = u(ks[4], (120, 400), 400)   # PyTorch (out, in)
    p["fc1_b"] = u(ks[5], (120,), 400)
    p["fc2_w"] = u(ks[6], (84, 120), 120)
    p["fc2_b"] = u(ks[7], (84,), 120)
    p["fc3_w"] = u(ks[8], (10, 84), 84)
    p["fc3_b"] = u(ks[9], (10,), 84)
    return p


# ---------------------------------------------------------------------------
# Forward pass (mirrors Net.forward) — single fused pallas_call
# ---------------------------------------------------------------------------
def _const_spec(shape):
    zero = (0,) * len(shape)
    return pl.BlockSpec(shape, lambda b, _z=zero: _z)


def net_forward(prep, x_nchw):
    B = x_nchw.shape[0]
    # NCHW -> NHWC -> lane-dense (B, H, W*C) slab (glue on the raw input only).
    x = jnp.transpose(x_nchw, (0, 2, 3, 1)).reshape(B, _H0, _W0 * _C0)
    x = x.astype(jnp.float32)

    args = (x, prep["wb1"], prep["b1"], prep["rs1"], prep["cs1"],
            prep["wb2"], prep["b2"], prep["rs2"], prep["cs2"],
            prep["wf1"], prep["bf1"], prep["wf2"], prep["bf2"],
            prep["wf3"], prep["bf3"])

    in_specs = [pl.BlockSpec((1, _H0, _W0 * _C0), lambda b: (b, 0, 0))]
    in_specs += [_const_spec(tuple(a.shape)) for a in args[1:]]

    out = pl.pallas_call(
        _lenet_kernel,
        out_shape=jax.ShapeDtypeStruct((B, 1, _F3), jnp.float32),
        grid=(B,),
        in_specs=in_specs,
        out_specs=pl.BlockSpec((1, 1, _F3), lambda b: (b, 0, 0)),
        compiler_params=pltpu.CompilerParams(
            dimension_semantics=("parallel",)),
    )(*args)
    return out.reshape(B, _F3)


if __name__ == "__main__":
    key = jax.random.PRNGKey(0)
    k_param, k_x = jax.random.split(key)
    params = init_params(k_param)
    prep = prepare_params(params)            # one-time weight re-layout
    # Forward implies 32x32 input (LeNet/CIFAR): (B=2, C=3, H=32, W=32), NCHW.
    x = jax.random.normal(k_x, (2, 3, 32, 32), dtype=jnp.float32)

    fwd = jax.jit(net_forward)
    out = jax.block_until_ready(fwd(prep, x))
    assert out.shape == (2, 10) and out.dtype == jnp.float32
    print("KERNEL_OK")
</pallas_src>

<mosaic_0001>
module attributes {stable_mosaic.version = 11 : i64} {
  func.func @_lenet_kernel(%arg0: i32, %arg1: memref<1x32x96xf32, #tpu.memory_space<vmem>>, %arg2: memref<5x96x168xbf16, #tpu.memory_space<vmem>>, %arg3: memref<1x168xf32, #tpu.memory_space<vmem>>, %arg4: memref<2x14x28xf32, #tpu.memory_space<vmem>>, %arg5: memref<2x168x84xf32, #tpu.memory_space<vmem>>, %arg6: memref<5x84x160xbf16, #tpu.memory_space<vmem>>, %arg7: memref<1x160xf32, #tpu.memory_space<vmem>>, %arg8: memref<2x5x10xf32, #tpu.memory_space<vmem>>, %arg9: memref<2x160x80xf32, #tpu.memory_space<vmem>>, %arg10: memref<5x80x120xbf16, #tpu.memory_space<vmem>>, %arg11: memref<1x120xf32, #tpu.memory_space<vmem>>, %arg12: memref<120x84xbf16, #tpu.memory_space<vmem>>, %arg13: memref<1x84xf32, #tpu.memory_space<vmem>>, %arg14: memref<84x10xbf16, #tpu.memory_space<vmem>>, %arg15: memref<1x10xf32, #tpu.memory_space<vmem>>, %arg16: memref<1x1x10xf32, #tpu.memory_space<vmem>>) attributes {dimension_semantics = [#tpu.dimension_semantics<parallel>], iteration_bounds = array<i64: 2>, scalar_prefetch = 0 : i64, scratch_operands = 0 : i64, tpu.core_type = #tpu.core_type<tc>, window_params = [{transform_indices = @transform_0, window_bounds = array<i64: 1, 32, 96>}, {pipeline_mode = #tpu.pipeline_mode<synchronous>, transform_indices = @transform_1, window_bounds = array<i64: 5, 96, 168>}, {pipeline_mode = #tpu.pipeline_mode<synchronous>, transform_indices = @transform_2, window_bounds = array<i64: 1, 168>}, {pipeline_mode = #tpu.pipeline_mode<synchronous>, transform_indices = @transform_3, window_bounds = array<i64: 2, 14, 28>}, {pipeline_mode = #tpu.pipeline_mode<synchronous>, transform_indices = @transform_4, window_bounds = array<i64: 2, 168, 84>}, {pipeline_mode = #tpu.pipeline_mode<synchronous>, transform_indices = @transform_5, window_bounds = array<i64: 5, 84, 160>}, {pipeline_mode = #tpu.pipeline_mode<synchronous>, transform_indices = @transform_6, window_bounds = array<i64: 1, 160>}, {pipeline_mode = #tpu.pipeline_mode<synchronous>, transform_indices = @transform_7, window_bounds = array<i64: 2, 5, 10>}, {pipeline_mode = #tpu.pipeline_mode<synchronous>, transform_indices = @transform_8, window_bounds = array<i64: 2, 160, 80>}, {pipeline_mode = #tpu.pipeline_mode<synchronous>, transform_indices = @transform_9, window_bounds = array<i64: 5, 80, 120>}, {pipeline_mode = #tpu.pipeline_mode<synchronous>, transform_indices = @transform_10, window_bounds = array<i64: 1, 120>}, {pipeline_mode = #tpu.pipeline_mode<synchronous>, transform_indices = @transform_11, window_bounds = array<i64: 120, 84>}, {pipeline_mode = #tpu.pipeline_mode<synchronous>, transform_indices = @transform_12, window_bounds = array<i64: 1, 84>}, {pipeline_mode = #tpu.pipeline_mode<synchronous>, transform_indices = @transform_13, window_bounds = array<i64: 84, 10>}, {pipeline_mode = #tpu.pipeline_mode<synchronous>, transform_indices = @transform_14, window_bounds = array<i64: 1, 10>}, {transform_indices = @transform_15, window_bounds = array<i64: 1, 1, 10>}]} {
    %c0 = arith.constant 0 : index
    %c0_0 = arith.constant 0 : index
    %c0_1 = arith.constant 0 : index
    %0 = vector.load %arg1[%c0, %c0_0, %c0_1] : memref<1x32x96xf32, #tpu.memory_space<vmem>>, vector<1x32x96xf32>
    %1 = vector.shape_cast %0 : vector<1x32x96xf32> to vector<32x96xf32>
    %cst = arith.constant 0.000000e+00 : f32
    %2 = vector.broadcast %cst : f32 to vector<28x168xf32>
    %3 = vector.extract_strided_slice %1 {offsets = [0, 0], sizes = [28, 96], strides = [1, 1]} : vector<32x96xf32> to vector<28x96xf32>
    %4 = arith.truncf %3 : vector<28x96xf32> to vector<28x96xbf16>
    %c0_2 = arith.constant 0 : index
    %c0_3 = arith.constant 0 : index
    %c0_4 = arith.constant 0 : index
    %5 = vector.load %arg2[%c0_2, %c0_3, %c0_4] : memref<5x96x168xbf16, #tpu.memory_space<vmem>>, vector<1x96x168xbf16>
    %6 = vector.shape_cast %5 : vector<1x96x168xbf16> to vector<96x168xbf16>
    %cst_5 = arith.constant dense<0.000000e+00> : vector<28x168xf32>
    %7 = tpu.matmul %4, %6, %cst_5 {dimension_numbers = #tpu.dot_dimension_numbers<[1], [0], [0], [1], [0, 0, 1, 1], [], []>} : vector<28x96xbf16>, vector<96x168xbf16>, vector<28x168xf32> -> vector<28x168xf32>
    %8 = arith.addf %2, %7 : vector<28x168xf32>
    %9 = vector.extract_strided_slice %1 {offsets = [1, 0], sizes = [28, 96], strides = [1, 1]} : vector<32x96xf32> to vector<28x96xf32>
    %10 = arith.truncf %9 : vector<28x96xf32> to vector<28x96xbf16>
    %c1 = arith.constant 1 : index
    %c0_6 = arith.constant 0 : index
    %c0_7 = arith.constant 0 : index
    %11 = vector.load %arg2[%c1, %c0_6, %c0_7] : memref<5x96x168xbf16, #tpu.memory_space<vmem>>, vector<1x96x168xbf16>
    %12 = vector.shape_cast %11 : vector<1x96x168xbf16> to vector<96x168xbf16>
    %cst_8 = arith.constant dense<0.000000e+00> : vector<28x168xf32>
    %13 = tpu.matmul %10, %12, %cst_8 {dimension_numbers = #tpu.dot_dimension_numbers<[1], [0], [0], [1], [0, 0, 1, 1], [], []>} : vector<28x96xbf16>, vector<96x168xbf16>, vector<28x168xf32> -> vector<28x168xf32>
    %14 = arith.addf %8, %13 : vector<28x168xf32>
    %15 = vector.extract_strided_slice %1 {offsets = [2, 0], sizes = [28, 96], strides = [1, 1]} : vector<32x96xf32> to vector<28x96xf32>
    %16 = arith.truncf %15 : vector<28x96xf32> to vector<28x96xbf16>
    %c2 = arith.constant 2 : index
    %c0_9 = arith.constant 0 : index
    %c0_10 = arith.constant 0 : index
    %17 = vector.load %arg2[%c2, %c0_9, %c0_10] : memref<5x96x168xbf16, #tpu.memory_space<vmem>>, vector<1x96x168xbf16>
    %18 = vector.shape_cast %17 : vector<1x96x168xbf16> to vector<96x168xbf16>
    %cst_11 = arith.constant dense<0.000000e+00> : vector<28x168xf32>
    %19 = tpu.matmul %16, %18, %cst_11 {dimension_numbers = #tpu.dot_dimension_numbers<[1], [0], [0], [1], [0, 0, 1, 1], [], []>} : vector<28x96xbf16>, vector<96x168xbf16>, vector<28x168xf32> -> vector<28x168xf32>
    %20 = arith.addf %14, %19 : vector<28x168xf32>
    %21 = vector.extract_strided_slice %1 {offsets = [3, 0], sizes = [28, 96], strides = [1, 1]} : vector<32x96xf32> to vector<28x96xf32>
    %22 = arith.truncf %21 : vector<28x96xf32> to vector<28x96xbf16>
    %c3 = arith.constant 3 : index
    %c0_12 = arith.constant 0 : index
    %c0_13 = arith.constant 0 : index
    %23 = vector.load %arg2[%c3, %c0_12, %c0_13] : memref<5x96x168xbf16, #tpu.memory_space<vmem>>, vector<1x96x168xbf16>
    %24 = vector.shape_cast %23 : vector<1x96x168xbf16> to vector<96x168xbf16>
    %cst_14 = arith.constant dense<0.000000e+00> : vector<28x168xf32>
    %25 = tpu.matmul %22, %24, %cst_14 {dimension_numbers = #tpu.dot_dimension_numbers<[1], [0], [0], [1], [0, 0, 1, 1], [], []>} : vector<28x96xbf16>, vector<96x168xbf16>, vector<28x168xf32> -> vector<28x168xf32>
    %26 = arith.addf %20, %25 : vector<28x168xf32>
    %27 = vector.extract_strided_slice %1 {offsets = [4, 0], sizes = [28, 96], strides = [1, 1]} : vector<32x96xf32> to vector<28x96xf32>
    %28 = arith.truncf %27 : vector<28x96xf32> to vector<28x96xbf16>
    %c4 = arith.constant 4 : index
    %c0_15 = arith.constant 0 : index
    %c0_16 = arith.constant 0 : index
    %29 = vector.load %arg2[%c4, %c0_15, %c0_16] : memref<5x96x168xbf16, #tpu.memory_space<vmem>>, vector<1x96x168xbf16>
    %30 = vector.shape_cast %29 : vector<1x96x168xbf16> to vector<96x168xbf16>
    %cst_17 = arith.constant dense<0.000000e+00> : vector<28x168xf32>
    %31 = tpu.matmul %28, %30, %cst_17 {dimension_numbers = #tpu.dot_dimension_numbers<[1], [0], [0], [1], [0, 0, 1, 1], [], []>} : vector<28x96xbf16>, vector<96x168xbf16>, vector<28x168xf32> -> vector<28x168xf32>
    %32 = arith.addf %26, %31 : vector<28x168xf32>
    %c0_18 = arith.constant 0 : index
    %c0_19 = arith.constant 0 : index
    %33 = vector.load %arg3[%c0_18, %c0_19] : memref<1x168xf32, #tpu.memory_space<vmem>>, vector<1x168xf32>
    %34 = vector.broadcast %33 : vector<1x168xf32> to vector<28x168xf32>
    %35 = arith.addf %32, %34 : vector<28x168xf32>
    %cst_20 = arith.constant 0.000000e+00 : f32
    %36 = vector.broadcast %cst_20 : f32 to vector<28x168xf32>
    %37 = arith.maximumf %35, %36 : vector<28x168xf32>
    %c0_21 = arith.constant 0 : index
    %c0_22 = arith.constant 0 : index
    %c0_23 = arith.constant 0 : index
    %38 = vector.load %arg4[%c0_21, %c0_22, %c0_23] : memref<2x14x28xf32, #tpu.memory_space<vmem>>, vector<1x14x28xf32>
    %39 = vector.shape_cast %38 : vector<1x14x28xf32> to vector<14x28xf32>
    %cst_24 = arith.constant dense<0.000000e+00> : vector<14x168xf32>
    %40 = tpu.matmul %39, %37, %cst_24 {dimension_numbers = #tpu.dot_dimension_numbers<[1], [0], [0], [1], [0, 0, 1, 1], [], []>} : vector<14x28xf32>, vector<28x168xf32>, vector<14x168xf32> -> vector<14x168xf32>
    %c1_25 = arith.constant 1 : index
    %c0_26 = arith.constant 0 : index
    %c0_27 = arith.constant 0 : index
    %41 = vector.load %arg4[%c1_25, %c0_26, %c0_27] : memref<2x14x28xf32, #tpu.memory_space<vmem>>, vector<1x14x28xf32>
    %42 = vector.shape_cast %41 : vector<1x14x28xf32> to vector<14x28xf32>
    %cst_28 = arith.constant dense<0.000000e+00> : vector<14x168xf32>
    %43 = tpu.matmul %42, %37, %cst_28 {dimension_numbers = #tpu.dot_dimension_numbers<[1], [0], [0], [1], [0, 0, 1, 1], [], []>} : vector<14x28xf32>, vector<28x168xf32>, vector<14x168xf32> -> vector<14x168xf32>
    %44 = arith.maximumf %40, %43 : vector<14x168xf32>
    %c0_29 = arith.constant 0 : index
    %c0_30 = arith.constant 0 : index
    %c0_31 = arith.constant 0 : index
    %45 = vector.load %arg5[%c0_29, %c0_30, %c0_31] : memref<2x168x84xf32, #tpu.memory_space<vmem>>, vector<1x168x84xf32>
    %46 = vector.shape_cast %45 : vector<1x168x84xf32> to vector<168x84xf32>
    %cst_32 = arith.constant dense<0.000000e+00> : vector<14x84xf32>
    %47 = tpu.matmul %44, %46, %cst_32 {dimension_numbers = #tpu.dot_dimension_numbers<[1], [0], [0], [1], [0, 0, 1, 1], [], []>} : vector<14x168xf32>, vector<168x84xf32>, vector<14x84xf32> -> vector<14x84xf32>
    %c1_33 = arith.constant 1 : index
    %c0_34 = arith.constant 0 : index
    %c0_35 = arith.constant 0 : index
    %48 = vector.load %arg5[%c1_33, %c0_34, %c0_35] : memref<2x168x84xf32, #tpu.memory_space<vmem>>, vector<1x168x84xf32>
    %49 = vector.shape_cast %48 : vector<1x168x84xf32> to vector<168x84xf32>
    %cst_36 = arith.constant dense<0.000000e+00> : vector<14x84xf32>
    %50 = tpu.matmul %44, %49, %cst_36 {dimension_numbers = #tpu.dot_dimension_numbers<[1], [0], [0], [1], [0, 0, 1, 1], [], []>} : vector<14x168xf32>, vector<168x84xf32>, vector<14x84xf32> -> vector<14x84xf32>
    %51 = arith.maximumf %47, %50 : vector<14x84xf32>
    %cst_37 = arith.constant 0.000000e+00 : f32
    %52 = vector.broadcast %cst_37 : f32 to vector<10x160xf32>
    %53 = vector.extract_strided_slice %51 {offsets = [0, 0], sizes = [10, 84], strides = [1, 1]} : vector<14x84xf32> to vector<10x84xf32>
    %54 = arith.truncf %53 : vector<10x84xf32> to vector<10x84xbf16>
    %c0_38 = arith.constant 0 : index
    %c0_39 = arith.constant 0 : index
    %c0_40 = arith.constant 0 : index
    %55 = vector.load %arg6[%c0_38, %c0_39, %c0_40] : memref<5x84x160xbf16, #tpu.memory_space<vmem>>, vector<1x84x160xbf16>
    %56 = vector.shape_cast %55 : vector<1x84x160xbf16> to vector<84x160xbf16>
    %cst_41 = arith.constant dense<0.000000e+00> : vector<10x160xf32>
    %57 = tpu.matmul %54, %56, %cst_41 {dimension_numbers = #tpu.dot_dimension_numbers<[1], [0], [0], [1], [0, 0, 1, 1], [], []>} : vector<10x84xbf16>, vector<84x160xbf16>, vector<10x160xf32> -> vector<10x160xf32>
    %58 = arith.addf %52, %57 : vector<10x160xf32>
    %59 = vector.extract_strided_slice %51 {offsets = [1, 0], sizes = [10, 84], strides = [1, 1]} : vector<14x84xf32> to vector<10x84xf32>
    %60 = arith.truncf %59 : vector<10x84xf32> to vector<10x84xbf16>
    %c1_42 = arith.constant 1 : index
    %c0_43 = arith.constant 0 : index
    %c0_44 = arith.constant 0 : index
    %61 = vector.load %arg6[%c1_42, %c0_43, %c0_44] : memref<5x84x160xbf16, #tpu.memory_space<vmem>>, vector<1x84x160xbf16>
    %62 = vector.shape_cast %61 : vector<1x84x160xbf16> to vector<84x160xbf16>
    %cst_45 = arith.constant dense<0.000000e+00> : vector<10x160xf32>
    %63 = tpu.matmul %60, %62, %cst_45 {dimension_numbers = #tpu.dot_dimension_numbers<[1], [0], [0], [1], [0, 0, 1, 1], [], []>} : vector<10x84xbf16>, vector<84x160xbf16>, vector<10x160xf32> -> vector<10x160xf32>
    %64 = arith.addf %58, %63 : vector<10x160xf32>
    %65 = vector.extract_strided_slice %51 {offsets = [2, 0], sizes = [10, 84], strides = [1, 1]} : vector<14x84xf32> to vector<10x84xf32>
    %66 = arith.truncf %65 : vector<10x84xf32> to vector<10x84xbf16>
    %c2_46 = arith.constant 2 : index
    %c0_47 = arith.constant 0 : index
    %c0_48 = arith.constant 0 : index
    %67 = vector.load %arg6[%c2_46, %c0_47, %c0_48] : memref<5x84x160xbf16, #tpu.memory_space<vmem>>, vector<1x84x160xbf16>
    %68 = vector.shape_cast %67 : vector<1x84x160xbf16> to vector<84x160xbf16>
    %cst_49 = arith.constant dense<0.000000e+00> : vector<10x160xf32>
    %69 = tpu.matmul %66, %68, %cst_49 {dimension_numbers = #tpu.dot_dimension_numbers<[1], [0], [0], [1], [0, 0, 1, 1], [], []>} : vector<10x84xbf16>, vector<84x160xbf16>, vector<10x160xf32> -> vector<10x160xf32>
    %70 = arith.addf %64, %69 : vector<10x160xf32>
    %71 = vector.extract_strided_slice %51 {offsets = [3, 0], sizes = [10, 84], strides = [1, 1]} : vector<14x84xf32> to vector<10x84xf32>
    %72 = arith.truncf %71 : vector<10x84xf32> to vector<10x84xbf16>
    %c3_50 = arith.constant 3 : index
    %c0_51 = arith.constant 0 : index
    %c0_52 = arith.constant 0 : index
    %73 = vector.load %arg6[%c3_50, %c0_51, %c0_52] : memref<5x84x160xbf16, #tpu.memory_space<vmem>>, vector<1x84x160xbf16>
    %74 = vector.shape_cast %73 : vector<1x84x160xbf16> to vector<84x160xbf16>
    %cst_53 = arith.constant dense<0.000000e+00> : vector<10x160xf32>
    %75 = tpu.matmul %72, %74, %cst_53 {dimension_numbers = #tpu.dot_dimension_numbers<[1], [0], [0], [1], [0, 0, 1, 1], [], []>} : vector<10x84xbf16>, vector<84x160xbf16>, vector<10x160xf32> -> vector<10x160xf32>
    %76 = arith.addf %70, %75 : vector<10x160xf32>
    %77 = vector.extract_strided_slice %51 {offsets = [4, 0], sizes = [10, 84], strides = [1, 1]} : vector<14x84xf32> to vector<10x84xf32>
    %78 = arith.truncf %77 : vector<10x84xf32> to vector<10x84xbf16>
    %c4_54 = arith.constant 4 : index
    %c0_55 = arith.constant 0 : index
    %c0_56 = arith.constant 0 : index
    %79 = vector.load %arg6[%c4_54, %c0_55, %c0_56] : memref<5x84x160xbf16, #tpu.memory_space<vmem>>, vector<1x84x160xbf16>
    %80 = vector.shape_cast %79 : vector<1x84x160xbf16> to vector<84x160xbf16>
    %cst_57 = arith.constant dense<0.000000e+00> : vector<10x160xf32>
    %81 = tpu.matmul %78, %80, %cst_57 {dimension_numbers = #tpu.dot_dimension_numbers<[1], [0], [0], [1], [0, 0, 1, 1], [], []>} : vector<10x84xbf16>, vector<84x160xbf16>, vector<10x160xf32> -> vector<10x160xf32>
    %82 = arith.addf %76, %81 : vector<10x160xf32>
    %c0_58 = arith.constant 0 : index
    %c0_59 = arith.constant 0 : index
    %83 = vector.load %arg7[%c0_58, %c0_59] : memref<1x160xf32, #tpu.memory_space<vmem>>, vector<1x160xf32>
    %84 = vector.broadcast %83 : vector<1x160xf32> to vector<10x160xf32>
    %85 = arith.addf %82, %84 : vector<10x160xf32>
    %cst_60 = arith.constant 0.000000e+00 : f32
    %86 = vector.broadcast %cst_60 : f32 to vector<10x160xf32>
    %87 = arith.maximumf %85, %86 : vector<10x160xf32>
    %c0_61 = arith.constant 0 : index
    %c0_62 = arith.constant 0 : index
    %c0_63 = arith.constant 0 : index
    %88 = vector.load %arg8[%c0_61, %c0_62, %c0_63] : memref<2x5x10xf32, #tpu.memory_space<vmem>>, vector<1x5x10xf32>
    %89 = vector.shape_cast %88 : vector<1x5x10xf32> to vector<5x10xf32>
    %cst_64 = arith.constant dense<0.000000e+00> : vector<5x160xf32>
    %90 = tpu.matmul %89, %87, %cst_64 {dimension_numbers = #tpu.dot_dimension_numbers<[1], [0], [0], [1], [0, 0, 1, 1], [], []>} : vector<5x10xf32>, vector<10x160xf32>, vector<5x160xf32> -> vector<5x160xf32>
    %c1_65 = arith.constant 1 : index
    %c0_66 = arith.constant 0 : index
    %c0_67 = arith.constant 0 : index
    %91 = vector.load %arg8[%c1_65, %c0_66, %c0_67] : memref<2x5x10xf32, #tpu.memory_space<vmem>>, vector<1x5x10xf32>
    %92 = vector.shape_cast %91 : vector<1x5x10xf32> to vector<5x10xf32>
    %cst_68 = arith.constant dense<0.000000e+00> : vector<5x160xf32>
    %93 = tpu.matmul %92, %87, %cst_68 {dimension_numbers = #tpu.dot_dimension_numbers<[1], [0], [0], [1], [0, 0, 1, 1], [], []>} : vector<5x10xf32>, vector<10x160xf32>, vector<5x160xf32> -> vector<5x160xf32>
    %94 = arith.maximumf %90, %93 : vector<5x160xf32>
    %c0_69 = arith.constant 0 : index
    %c0_70 = arith.constant 0 : index
    %c0_71 = arith.constant 0 : index
    %95 = vector.load %arg9[%c0_69, %c0_70, %c0_71] : memref<2x160x80xf32, #tpu.memory_space<vmem>>, vector<1x160x80xf32>
    %96 = vector.shape_cast %95 : vector<1x160x80xf32> to vector<160x80xf32>
    %cst_72 = arith.constant dense<0.000000e+00> : vector<5x80xf32>
    %97 = tpu.matmul %94, %96, %cst_72 {dimension_numbers = #tpu.dot_dimension_numbers<[1], [0], [0], [1], [0, 0, 1, 1], [], []>} : vector<5x160xf32>, vector<160x80xf32>, vector<5x80xf32> -> vector<5x80xf32>
    %c1_73 = arith.constant 1 : index
    %c0_74 = arith.constant 0 : index
    %c0_75 = arith.constant 0 : index
    %98 = vector.load %arg9[%c1_73, %c0_74, %c0_75] : memref<2x160x80xf32, #tpu.memory_space<vmem>>, vector<1x160x80xf32>
    %99 = vector.shape_cast %98 : vector<1x160x80xf32> to vector<160x80xf32>
    %cst_76 = arith.constant dense<0.000000e+00> : vector<5x80xf32>
    %100 = tpu.matmul %94, %99, %cst_76 {dimension_numbers = #tpu.dot_dimension_numbers<[1], [0], [0], [1], [0, 0, 1, 1], [], []>} : vector<5x160xf32>, vector<160x80xf32>, vector<5x80xf32> -> vector<5x80xf32>
    %101 = arith.maximumf %97, %100 : vector<5x80xf32>
    %cst_77 = arith.constant 0.000000e+00 : f32
    %102 = vector.broadcast %cst_77 : f32 to vector<1x120xf32>
    %103 = vector.extract_strided_slice %101 {offsets = [0, 0], sizes = [1, 80], strides = [1, 1]} : vector<5x80xf32> to vector<1x80xf32>
    %104 = arith.truncf %103 : vector<1x80xf32> to vector<1x80xbf16>
    %c0_78 = arith.constant 0 : index
    %c0_79 = arith.constant 0 : index
    %c0_80 = arith.constant 0 : index
    %105 = vector.load %arg10[%c0_78, %c0_79, %c0_80] : memref<5x80x120xbf16, #tpu.memory_space<vmem>>, vector<1x80x120xbf16>
    %106 = vector.shape_cast %105 : vector<1x80x120xbf16> to vector<80x120xbf16>
    %cst_81 = arith.constant dense<0.000000e+00> : vector<1x120xf32>
    %107 = tpu.matmul %104, %106, %cst_81 {dimension_numbers = #tpu.dot_dimension_numbers<[1], [0], [0], [1], [0, 0, 1, 1], [], []>} : vector<1x80xbf16>, vector<80x120xbf16>, vector<1x120xf32> -> vector<1x120xf32>
    %108 = arith.addf %102, %107 : vector<1x120xf32>
    %109 = vector.extract_strided_slice %101 {offsets = [1, 0], sizes = [1, 80], strides = [1, 1]} : vector<5x80xf32> to vector<1x80xf32>
    %110 = arith.truncf %109 : vector<1x80xf32> to vector<1x80xbf16>
    %c1_82 = arith.constant 1 : index
    %c0_83 = arith.constant 0 : index
    %c0_84 = arith.constant 0 : index
    %111 = vector.load %arg10[%c1_82, %c0_83, %c0_84] : memref<5x80x120xbf16, #tpu.memory_space<vmem>>, vector<1x80x120xbf16>
    %112 = vector.shape_cast %111 : vector<1x80x120xbf16> to vector<80x120xbf16>
    %cst_85 = arith.constant dense<0.000000e+00> : vector<1x120xf32>
    %113 = tpu.matmul %110, %112, %cst_85 {dimension_numbers = #tpu.dot_dimension_numbers<[1], [0], [0], [1], [0, 0, 1, 1], [], []>} : vector<1x80xbf16>, vector<80x120xbf16>, vector<1x120xf32> -> vector<1x120xf32>
    %114 = arith.addf %108, %113 : vector<1x120xf32>
    %115 = vector.extract_strided_slice %101 {offsets = [2, 0], sizes = [1, 80], strides = [1, 1]} : vector<5x80xf32> to vector<1x80xf32>
    %116 = arith.truncf %115 : vector<1x80xf32> to vector<1x80xbf16>
    %c2_86 = arith.constant 2 : index
    %c0_87 = arith.constant 0 : index
    %c0_88 = arith.constant 0 : index
    %117 = vector.load %arg10[%c2_86, %c0_87, %c0_88] : memref<5x80x120xbf16, #tpu.memory_space<vmem>>, vector<1x80x120xbf16>
    %118 = vector.shape_cast %117 : vector<1x80x120xbf16> to vector<80x120xbf16>
    %cst_89 = arith.constant dense<0.000000e+00> : vector<1x120xf32>
    %119 = tpu.matmul %116, %118, %cst_89 {dimension_numbers = #tpu.dot_dimension_numbers<[1], [0], [0], [1], [0, 0, 1, 1], [], []>} : vector<1x80xbf16>, vector<80x120xbf16>, vector<1x120xf32> -> vector<1x120xf32>
    %120 = arith.addf %114, %119 : vector<1x120xf32>
    %121 = vector.extract_strided_slice %101 {offsets = [3, 0], sizes = [1, 80], strides = [1, 1]} : vector<5x80xf32> to vector<1x80xf32>
    %122 = arith.truncf %121 : vector<1x80xf32> to vector<1x80xbf16>
    %c3_90 = arith.constant 3 : index
    %c0_91 = arith.constant 0 : index
    %c0_92 = arith.constant 0 : index
    %123 = vector.load %arg10[%c3_90, %c0_91, %c0_92] : memref<5x80x120xbf16, #tpu.memory_space<vmem>>, vector<1x80x120xbf16>
    %124 = vector.shape_cast %123 : vector<1x80x120xbf16> to vector<80x120xbf16>
    %cst_93 = arith.constant dense<0.000000e+00> : vector<1x120xf32>
    %125 = tpu.matmul %122, %124, %cst_93 {dimension_numbers = #tpu.dot_dimension_numbers<[1], [0], [0], [1], [0, 0, 1, 1], [], []>} : vector<1x80xbf16>, vector<80x120xbf16>, vector<1x120xf32> -> vector<1x120xf32>
    %126 = arith.addf %120, %125 : vector<1x120xf32>
    %127 = vector.extract_strided_slice %101 {offsets = [4, 0], sizes = [1, 80], strides = [1, 1]} : vector<5x80xf32> to vector<1x80xf32>
    %128 = arith.truncf %127 : vector<1x80xf32> to vector<1x80xbf16>
    %c4_94 = arith.constant 4 : index
    %c0_95 = arith.constant 0 : index
    %c0_96 = arith.constant 0 : index
    %129 = vector.load %arg10[%c4_94, %c0_95, %c0_96] : memref<5x80x120xbf16, #tpu.memory_space<vmem>>, vector<1x80x120xbf16>
    %130 = vector.shape_cast %129 : vector<1x80x120xbf16> to vector<80x120xbf16>
    %cst_97 = arith.constant dense<0.000000e+00> : vector<1x120xf32>
    %131 = tpu.matmul %128, %130, %cst_97 {dimension_numbers = #tpu.dot_dimension_numbers<[1], [0], [0], [1], [0, 0, 1, 1], [], []>} : vector<1x80xbf16>, vector<80x120xbf16>, vector<1x120xf32> -> vector<1x120xf32>
    %132 = arith.addf %126, %131 : vector<1x120xf32>
    %c0_98 = arith.constant 0 : index
    %c0_99 = arith.constant 0 : index
    %133 = vector.load %arg11[%c0_98, %c0_99] : memref<1x120xf32, #tpu.memory_space<vmem>>, vector<1x120xf32>
    %134 = arith.addf %132, %133 : vector<1x120xf32>
    %cst_100 = arith.constant 0.000000e+00 : f32
    %135 = vector.broadcast %cst_100 : f32 to vector<1x120xf32>
    %136 = arith.maximumf %134, %135 : vector<1x120xf32>
    %137 = arith.truncf %136 : vector<1x120xf32> to vector<1x120xbf16>
    %c0_101 = arith.constant 0 : index
    %c0_102 = arith.constant 0 : index
    %138 = vector.load %arg12[%c0_101, %c0_102] : memref<120x84xbf16, #tpu.memory_space<vmem>>, vector<120x84xbf16>
    %cst_103 = arith.constant dense<0.000000e+00> : vector<1x84xf32>
    %139 = tpu.matmul %137, %138, %cst_103 {dimension_numbers = #tpu.dot_dimension_numbers<[1], [0], [0], [1], [0, 0, 1, 1], [], []>} : vector<1x120xbf16>, vector<120x84xbf16>, vector<1x84xf32> -> vector<1x84xf32>
    %c0_104 = arith.constant 0 : index
    %c0_105 = arith.constant 0 : index
    %140 = vector.load %arg13[%c0_104, %c0_105] : memref<1x84xf32, #tpu.memory_space<vmem>>, vector<1x84xf32>
    %141 = arith.addf %139, %140 : vector<1x84xf32>
    %cst_106 = arith.constant 0.000000e+00 : f32
    %142 = vector.broadcast %cst_106 : f32 to vector<1x84xf32>
    %143 = arith.maximumf %141, %142 : vector<1x84xf32>
    %144 = arith.truncf %143 : vector<1x84xf32> to vector<1x84xbf16>
    %c0_107 = arith.constant 0 : index
    %c0_108 = arith.constant 0 : index
    %145 = vector.load %arg14[%c0_107, %c0_108] : memref<84x10xbf16, #tpu.memory_space<vmem>>, vector<84x10xbf16>
    %cst_109 = arith.constant dense<0.000000e+00> : vector<1x10xf32>
    %146 = tpu.matmul %144, %145, %cst_109 {dimension_numbers = #tpu.dot_dimension_numbers<[1], [0], [0], [1], [0, 0, 1, 1], [], []>} : vector<1x84xbf16>, vector<84x10xbf16>, vector<1x10xf32> -> vector<1x10xf32>
    %c0_110 = arith.constant 0 : index
    %c0_111 = arith.constant 0 : index
    %147 = vector.load %arg15[%c0_110, %c0_111] : memref<1x10xf32, #tpu.memory_space<vmem>>, vector<1x10xf32>
    %148 = arith.addf %146, %147 : vector<1x10xf32>
    %c0_112 = arith.constant 0 : index
    %c0_113 = arith.constant 0 : index
    %c0_114 = arith.constant 0 : index
    %149 = vector.load %arg16[%c0_112, %c0_113, %c0_114] : memref<1x1x10xf32, #tpu.memory_space<vmem>>, vector<1x1x10xf32>
    %150 = vector.shape_cast %149 : vector<1x1x10xf32> to vector<1x10xf32>
    %151 = vector.shape_cast %148 : vector<1x10xf32> to vector<1x1x10xf32>
    tpu.vector_store %arg16[%c0_112, %c0_113, %c0_114], %151 {strides = array<i32>} : memref<1x1x10xf32, #tpu.memory_space<vmem>>, vector<1x1x10xf32>,
    return
  }
  func.func @transform_0(%arg0: i32) -> (i32, i32, i32) {
    %c0_i32 = arith.constant 0 : i32
    %c0_i32_0 = arith.constant 0 : i32
    %c0_i32_1 = arith.constant 0 : i32
    return %arg0, %c0_i32, %c0_i32_0 : i32, i32, i32
  }
  func.func @transform_1(%arg0: i32) -> (i32, i32, i32) {
    %c0_i32 = arith.constant 0 : i32
    %c0_i32_0 = arith.constant 0 : i32
    %c0_i32_1 = arith.constant 0 : i32
    %c0_i32_2 = arith.constant 0 : i32
    return %c0_i32, %c0_i32_0, %c0_i32_1 : i32, i32, i32
  }
  func.func @transform_2(%arg0: i32) -> (i32, i32) {
    %c0_i32 = arith.constant 0 : i32
    %c0_i32_0 = arith.constant 0 : i32
    %c0_i32_1 = arith.constant 0 : i32
    return %c0_i32, %c0_i32_0 : i32, i32
  }
  func.func @transform_3(%arg0: i32) -> (i32, i32, i32) {
    %c0_i32 = arith.constant 0 : i32
    %c0_i32_0 = arith.constant 0 : i32
    %c0_i32_1 = arith.constant 0 : i32
    %c0_i32_2 = arith.constant 0 : i32
    return %c0_i32, %c0_i32_0, %c0_i32_1 : i32, i32, i32
  }
  func.func @transform_4(%arg0: i32) -> (i32, i32, i32) {
    %c0_i32 = arith.constant 0 : i32
    %c0_i32_0 = arith.constant 0 : i32
    %c0_i32_1 = arith.constant 0 : i32
    %c0_i32_2 = arith.constant 0 : i32
    return %c0_i32, %c0_i32_0, %c0_i32_1 : i32, i32, i32
  }
  func.func @transform_5(%arg0: i32) -> (i32, i32, i32) {
    %c0_i32 = arith.constant 0 : i32
    %c0_i32_0 = arith.constant 0 : i32
    %c0_i32_1 = arith.constant 0 : i32
    %c0_i32_2 = arith.constant 0 : i32
    return %c0_i32, %c0_i32_0, %c0_i32_1 : i32, i32, i32
  }
  func.func @transform_6(%arg0: i32) -> (i32, i32) {
    %c0_i32 = arith.constant 0 : i32
    %c0_i32_0 = arith.constant 0 : i32
    %c0_i32_1 = arith.constant 0 : i32
    return %c0_i32, %c0_i32_0 : i32, i32
  }
  func.func @transform_7(%arg0: i32) -> (i32, i32, i32) {
    %c0_i32 = arith.constant 0 : i32
    %c0_i32_0 = arith.constant 0 : i32
    %c0_i32_1 = arith.constant 0 : i32
    %c0_i32_2 = arith.constant 0 : i32
    return %c0_i32, %c0_i32_0, %c0_i32_1 : i32, i32, i32
  }
  func.func @transform_8(%arg0: i32) -> (i32, i32, i32) {
    %c0_i32 = arith.constant 0 : i32
    %c0_i32_0 = arith.constant 0 : i32
    %c0_i32_1 = arith.constant 0 : i32
    %c0_i32_2 = arith.constant 0 : i32
    return %c0_i32, %c0_i32_0, %c0_i32_1 : i32, i32, i32
  }
  func.func @transform_9(%arg0: i32) -> (i32, i32, i32) {
    %c0_i32 = arith.constant 0 : i32
    %c0_i32_0 = arith.constant 0 : i32
    %c0_i32_1 = arith.constant 0 : i32
    %c0_i32_2 = arith.constant 0 : i32
    return %c0_i32, %c0_i32_0, %c0_i32_1 : i32, i32, i32
  }
  func.func @transform_10(%arg0: i32) -> (i32, i32) {
    %c0_i32 = arith.constant 0 : i32
    %c0_i32_0 = arith.constant 0 : i32
    %c0_i32_1 = arith.constant 0 : i32
    return %c0_i32, %c0_i32_0 : i32, i32
  }
  func.func @transform_11(%arg0: i32) -> (i32, i32) {
    %c0_i32 = arith.constant 0 : i32
    %c0_i32_0 = arith.constant 0 : i32
    %c0_i32_1 = arith.constant 0 : i32
    return %c0_i32, %c0_i32_0 : i32, i32
  }
  func.func @transform_12(%arg0: i32) -> (i32, i32) {
    %c0_i32 = arith.constant 0 : i32
    %c0_i32_0 = arith.constant 0 : i32
    %c0_i32_1 = arith.constant 0 : i32
    return %c0_i32, %c0_i32_0 : i32, i32
  }
  func.func @transform_13(%arg0: i32) -> (i32, i32) {
    %c0_i32 = arith.constant 0 : i32
    %c0_i32_0 = arith.constant 0 : i32
    %c0_i32_1 = arith.constant 0 : i32
    return %c0_i32, %c0_i32_0 : i32, i32
  }
  func.func @transform_14(%arg0: i32) -> (i32, i32) {
    %c0_i32 = arith.constant 0 : i32
    %c0_i32_0 = arith.constant 0 : i32
    %c0_i32_1 = arith.constant 0 : i32
    return %c0_i32, %c0_i32_0 : i32, i32
  }
  func.func @transform_15(%arg0: i32) -> (i32, i32, i32) {
    %c0_i32 = arith.constant 0 : i32
    %c0_i32_0 = arith.constant 0 : i32
    %c0_i32_1 = arith.constant 0 : i32
    return %arg0, %c0_i32, %c0_i32_0 : i32, i32, i32
  }
}

</mosaic_0001>

<llo_original>
// kernel: net_forward.1
$region0: #{net_forward.1}
  #allocation0 [shape = 'u32[]', space=smem, size = 0x4, offset = 0x4, fixed_abs, tag = 'smem constant byte address 0x4 - core index']
  #allocation1 [shape = 'u32[144,128]{1,0:T(1,128)}', space=vmem, size = 0x12000, scoped, tag = 'internal scratch']
  %s0 = inlined_call_operand.vmem [shape: f32[2,32,96], index: 0, kind: input, shape index: {}]
  %s1 = inlined_call_operand.vmem [shape: bf16[5,96,168], index: 1, kind: input, shape index: {}]
  %s2 = inlined_call_operand.vmem [shape: f32[1,168], index: 2, kind: input, shape index: {}]
  %s3 = inlined_call_operand.vmem [shape: f32[2,14,28], index: 3, kind: input, shape index: {}]
  %s4 = inlined_call_operand.vmem [shape: f32[2,168,84], index: 4, kind: input, shape index: {}]
  %s5 = inlined_call_operand.vmem [shape: bf16[5,84,160], index: 5, kind: input, shape index: {}]
  %s6 = inlined_call_operand.vmem [shape: f32[1,160], index: 6, kind: input, shape index: {}]
  %s7 = inlined_call_operand.vmem [shape: f32[2,5,10], index: 7, kind: input, shape index: {}]
  %s8 = inlined_call_operand.vmem [shape: f32[2,160,80], index: 8, kind: input, shape index: {}]
  %s9 = inlined_call_operand.vmem [shape: bf16[5,80,120], index: 9, kind: input, shape index: {}]
  %s10 = inlined_call_operand.vmem [shape: f32[1,120], index: 10, kind: input, shape index: {}]
  %s11 = inlined_call_operand.vmem [shape: bf16[120,84], index: 11, kind: input, shape index: {}]
  %s12 = inlined_call_operand.vmem [shape: f32[1,84], index: 12, kind: input, shape index: {}]
  %s13 = inlined_call_operand.vmem [shape: bf16[84,10], index: 13, kind: input, shape index: {}]
  %s14 = inlined_call_operand.vmem [shape: f32[1,10], index: 14, kind: input, shape index: {}]
  %s15 = inlined_call_operand.hbm [shape: f32[2,1,10], index: 15, kind: output, shape index: {}]
  %s16 = sld [smem:[#allocation0]]
  $region93: #{net_forward.1} parent=0
    _
  %s18 = ssub.s32 1, %s16
  %s19 = scalar_select 0, %s18, %s16
  $region1: #{net_forward.1} parent=0
    #allocation2 [shape = 'u8[1024]{0}', space=vmem, size = 0x400, scoped, tag = 'output window, operand 0']
    #allocation3 [shape = 's32[2]{0}', space=sflag, size = 0x8, scoped, tag = 'scoped memory for net_forward.1']
    %20 = vsyncpa [#allocation3], 0
    %s21 = scalar_lea.sflag [#allocation3], 1
    %22 = vsyncpa %s21, 0
    loop: start=0, step=1, limit=4
    $region2: #{net_forward.1} parent=1 // loop_pre_header
      _
    $region3: #{net_forward.1} parent=1 // loop_header
      %s24 = sphi 0, %s28
      %p25 = scmp.ge.s32.totalorder %s24, 4
      %s34 = sphi 0, %s36
      %s37 = sphi 0, %s34
      %s38 = sphi 0, %s37
      %s54 = sphi 0, %s38
      %s58 = sphi 0, %s58
      %s60 = sphi 0, %s58
      %s61 = sphi 0, %s60
      %s75 = sphi 0, %s61
      %s79 = sphi 0, %s79
      %s81 = sphi 0, %s79
      %s82 = sphi 0, %s81
      %s96 = sphi 0, %s82
      %s100 = sphi 0, %s100
      %s102 = sphi 0, %s100
      %s103 = sphi 0, %s102
      %s117 = sphi 0, %s103
      %s121 = sphi 0, %s121
      %s123 = sphi 0, %s121
      %s124 = sphi 0, %s123
      %s138 = sphi 0, %s124
      %s142 = sphi 0, %s142
      %s144 = sphi 0, %s142
      %s145 = sphi 0, %s144
      %s159 = sphi 0, %s145
      %s163 = sphi 0, %s163
      %s165 = sphi 0, %s163
      %s166 = sphi 0, %s165
      %s180 = sphi 0, %s166
      %s184 = sphi 0, %s184
      %s186 = sphi 0, %s184
      %s187 = sphi 0, %s186
      %s201 = sphi 0, %s187
      %s205 = sphi 0, %s205
      %s207 = sphi 0, %s205
      %s208 = sphi 0, %s207
      %s222 = sphi 0, %s208
      %s226 = sphi 0, %s226
      %s228 = sphi 0, %s226
      %s229 = sphi 0, %s228
      %s243 = sphi 0, %s229
      %s247 = sphi 0, %s247
      %s249 = sphi 0, %s247
      %s250 = sphi 0, %s249
      %s264 = sphi 0, %s250
      %s268 = sphi 0, %s268
      %s270 = sphi 0, %s268
      %s271 = sphi 0, %s270
      %s285 = sphi 0, %s271
      %s289 = sphi 0, %s289
      %s291 = sphi 0, %s289
      %s292 = sphi 0, %s291
      %s306 = sphi 0, %s292
      %s310 = sphi 0, %s310
      %s312 = sphi 0, %s310
      %s313 = sphi 0, %s312
      %s327 = sphi 0, %s313
      %s331 = sphi 0, %s331
      %s333 = sphi 0, %s331
      %s334 = sphi 0, %s333
      %s348 = sphi 0, %s334
      %s354 = sphi 0, %s356
      %s357 = sphi 0, %s354
      %s358 = sphi 0, %s357
      %s374 = sphi 0, %s358
    $region4: #{net_forward.1} parent=1 // loop_header_branch
      %27 = sbr.rel (%p25) target = $region8
    $region5: #{net_forward.1} parent=1 // loop_body
      %s29 = ssub.s32 %s24, 1
      %s30 = ssub.s32 %s24, 2
      %s31 = sadd.s32 %s24, 1
      %s32 = ssub.s32 %s24, %s31
      %p33 = scmp.eq.s32.totalorder %s32, 0
      %s35 = sadd.s32 %s34, 1
      %s36 = scalar_select %p33, %s34, %s35
      %p39 = pneg %p33
      %p40 = scmp.eq.s32.totalorder %s24, 1
      %p41 = por %p39, %p40
      %p42 = scmp.ne.s32.totalorder %s34, %s37
      %p43 = scmp.eq.s32.totalorder %s24, 0
      %p44 = por %p42, %p43
      %p45 = scmp.ne.s32.totalorder %s34, %s37
      %p46 = scmp.eq.s32.totalorder %s29, 1
      %p47 = por %p45, %p46
      %p48 = scmp.ne.s32.totalorder %s37, %s38
      %p49 = scmp.eq.s32.totalorder %s29, 0
      %p50 = por %p48, %p49
      %p51 = scmp.ne.s32.totalorder %s37, %s38
      %p52 = scmp.eq.s32.totalorder %s30, 1
      %p53 = por %p51, %p52
      %p55 = scmp.ne.s32.totalorder %s38, %s54
      %p56 = scmp.eq.s32.totalorder %s30, 0
      %p57 = por %p55, %p56
      %s59 = sadd.s32 %s58, 1
      %p62 = scmp.eq.s32.totalorder %s24, 1
      %p63 = scmp.ne.s32.totalorder %s58, %s60
      %p64 = scmp.eq.s32.totalorder %s24, 0
      %p65 = por %p63, %p64
      %p66 = scmp.ne.s32.totalorder %s58, %s60
      %p67 = scmp.eq.s32.totalorder %s29, 1
      %p68 = por %p66, %p67
      %p69 = scmp.ne.s32.totalorder %s60, %s61
      %p70 = scmp.eq.s32.totalorder %s29, 0
      %p71 = por %p69, %p70
      %p72 = scmp.ne.s32.totalorder %s60, %s61
      %p73 = scmp.eq.s32.totalorder %s30, 1
      %p74 = por %p72, %p73
      %p76 = scmp.ne.s32.totalorder %s61, %s75
      %p77 = scmp.eq.s32.totalorder %s30, 0
      %p78 = por %p76, %p77
      %s80 = sadd.s32 %s79, 1
      %p83 = scmp.eq.s32.totalorder %s24, 1
      %p84 = scmp.ne.s32.totalorder %s79, %s81
      %p85 = scmp.eq.s32.totalorder %s24, 0
      %p86 = por %p84, %p85
      %p87 = scmp.ne.s32.totalorder %s79, %s81
      %p88 = scmp.eq.s32.totalorder %s29, 1
      %p89 = por %p87, %p88
      %p90 = scmp.ne.s32.totalorder %s81, %s82
      %p91 = scmp.eq.s32.totalorder %s29, 0
      %p92 = por %p90, %p91
      %p93 = scmp.ne.s32.totalorder %s81, %s82
      %p94 = scmp.eq.s32.totalorder %s30, 1
      %p95 = por %p93, %p94
      %p97 = scmp.ne.s32.totalorder %s82, %s96
      %p98 = scmp.eq.s32.totalorder %s30, 0
      %p99 = por %p97, %p98
      %s101 = sadd.s32 %s100, 1
      %p104 = scmp.eq.s32.totalorder %s24, 1
      %p105 = scmp.ne.s32.totalorder %s100, %s102
      %p106 = scmp.eq.s32.totalorder %s24, 0
      %p107 = por %p105, %p106
      %p108 = scmp.ne.s32.totalorder %s100, %s102
      %p109 = scmp.eq.s32.totalorder %s29, 1
      %p110 = por %p108, %p109
      %p111 = scmp.ne.s32.totalorder %s102, %s103
      %p112 = scmp.eq.s32.totalorder %s29, 0
      %p113 = por %p111, %p112
      %p114 = scmp.ne.s32.totalorder %s102, %s103
      %p115 = scmp.eq.s32.totalorder %s30, 1
      %p116 = por %p114, %p115
      %p118 = scmp.ne.s32.totalorder %s103, %s117
      %p119 = scmp.eq.s32.totalorder %s30, 0
      %p120 = por %p118, %p119
      %s122 = sadd.s32 %s121, 1
      %p125 = scmp.eq.s32.totalorder %s24, 1
      %p126 = scmp.ne.s32.totalorder %s121, %s123
      %p127 = scmp.eq.s32.totalorder %s24, 0
      %p128 = por %p126, %p127
      %p129 = scmp.ne.s32.totalorder %s121, %s123
      %p130 = scmp.eq.s32.totalorder %s29, 1
      %p131 = por %p129, %p130
      %p132 = scmp.ne.s32.totalorder %s123, %s124
      %p133 = scmp.eq.s32.totalorder %s29, 0
      %p134 = por %p132, %p133
      %p135 = scmp.ne.s32.totalorder %s123, %s124
      %p136 = scmp.eq.s32.totalorder %s30, 1
      %p137 = por %p135, %p136
      %p139 = scmp.ne.s32.totalorder %s124, %s138
      %p140 = scmp.eq.s32.totalorder %s30, 0
      %p141 = por %p139, %p140
      %s143 = sadd.s32 %s142, 1
      %p146 = scmp.eq.s32.totalorder %s24, 1
      %p147 = scmp.ne.s32.totalorder %s142, %s144
      %p148 = scmp.eq.s32.totalorder %s24, 0
      %p149 = por %p147, %p148
      %p150 = scmp.ne.s32.totalorder %s142, %s144
      %p151 = scmp.eq.s32.totalorder %s29, 1
      %p152 = por %p150, %p151
      %p153 = scmp.ne.s32.totalorder %s144, %s145
      %p154 = scmp.eq.s32.totalorder %s29, 0
      %p155 = por %p153, %p154
      %p156 = scmp.ne.s32.totalorder %s144, %s145
      %p157 = scmp.eq.s32.totalorder %s30, 1
      %p158 = por %p156, %p157
      %p160 = scmp.ne.s32.totalorder %s145, %s159
      %p161 = scmp.eq.s32.totalorder %s30, 0
      %p162 = por %p160, %p161
      %s164 = sadd.s32 %s163, 1
      %p167 = scmp.eq.s32.totalorder %s24, 1
      %p168 = scmp.ne.s32.totalorder %s163, %s165
      %p169 = scmp.eq.s32.totalorder %s24, 0
      %p170 = por %p168, %p169
      %p171 = scmp.ne.s32.totalorder %s163, %s165
      %p172 = scmp.eq.s32.totalorder %s29, 1
      %p173 = por %p171, %p172
      %p174 = scmp.ne.s32.totalorder %s165, %s166
      %p175 = scmp.eq.s32.totalorder %s29, 0
      %p176 = por %p174, %p175
      %p177 = scmp.ne.s32.totalorder %s165, %s166
      %p178 = scmp.eq.s32.totalorder %s30, 1
      %p179 = por %p177, %p178
      %p181 = scmp.ne.s32.totalorder %s166, %s180
      %p182 = scmp.eq.s32.totalorder %s30, 0
      %p183 = por %p181, %p182
      %s185 = sadd.s32 %s184, 1
      %p188 = scmp.eq.s32.totalorder %s24, 1
      %p189 = scmp.ne.s32.totalorder %s184, %s186
      %p190 = scmp.eq.s32.totalorder %s24, 0
      %p191 = por %p189, %p190
      %p192 = scmp.ne.s32.totalorder %s184, %s186
      %p193 = scmp.eq.s32.totalorder %s29, 1
      %p194 = por %p192, %p193
      %p195 = scmp.ne.s32.totalorder %s186, %s187
      %p196 = scmp.eq.s32.totalorder %s29, 0
      %p197 = por %p195, %p196
      %p198 = scmp.ne.s32.totalorder %s186, %s187
      %p199 = scmp.eq.s32.totalorder %s30, 1
      %p200 = por %p198, %p199
      %p202 = scmp.ne.s32.totalorder %s187, %s201
      %p203 = scmp.eq.s32.totalorder %s30, 0
      %p204 = por %p202, %p203
      %s206 = sadd.s32 %s205, 1
      %p209 = scmp.eq.s32.totalorder %s24, 1
      %p210 = scmp.ne.s32.totalorder %s205, %s207
      %p211 = scmp.eq.s32.totalorder %s24, 0
      %p212 = por %p210, %p211
      %p213 = scmp.ne.s32.totalorder %s205, %s207
      %p214 = scmp.eq.s32.totalorder %s29, 1
      %p215 = por %p213, %p214
      %p216 = scmp.ne.s32.totalorder %s207, %s208
      %p217 = scmp.eq.s32.totalorder %s29, 0
      %p218 = por %p216, %p217
      %p219 = scmp.ne.s32.totalorder %s207, %s208
      %p220 = scmp.eq.s32.totalorder %s30, 1
      %p221 = por %p219, %p220
      %p223 = scmp.ne.s32.totalorder %s208, %s222
      %p224 = scmp.eq.s32.totalorder %s30, 0
      %p225 = por %p223, %p224
      %s227 = sadd.s32 %s226, 1
      %p230 = scmp.eq.s32.totalorder %s24, 1
      %p231 = scmp.ne.s32.totalorder %s226, %s228
      %p232 = scmp.eq.s32.totalorder %s24, 0
      %p233 = por %p231, %p232
      %p234 = scmp.ne.s32.totalorder %s226, %s228
      %p235 = scmp.eq.s32.totalorder %s29, 1
      %p236 = por %p234, %p235
      %p237 = scmp.ne.s32.totalorder %s228, %s229
      %p238 = scmp.eq.s32.totalorder %s29, 0
      %p239 = por %p237, %p238
      %p240 = scmp.ne.s32.totalorder %s228, %s229
      %p241 = scmp.eq.s32.totalorder %s30, 1
      %p242 = por %p240, %p241
      %p244 = scmp.ne.s32.totalorder %s229, %s243
      %p245 = scmp.eq.s32.totalorder %s30, 0
      %p246 = por %p244, %p245
      %s248 = sadd.s32 %s247, 1
      %p251 = scmp.eq.s32.totalorder %s24, 1
      %p252 = scmp.ne.s32.totalorder %s247, %s249
      %p253 = scmp.eq.s32.totalorder %s24, 0
      %p254 = por %p252, %p253
      %p255 = scmp.ne.s32.totalorder %s247, %s249
      %p256 = scmp.eq.s32.totalorder %s29, 1
      %p257 = por %p255, %p256
      %p258 = scmp.ne.s32.totalorder %s249, %s250
      %p259 = scmp.eq.s32.totalorder %s29, 0
      %p260 = por %p258, %p259
      %p261 = scmp.ne.s32.totalorder %s249, %s250
      %p262 = scmp.eq.s32.totalorder %s30, 1
      %p263 = por %p261, %p262
      %p265 = scmp.ne.s32.totalorder %s250, %s264
      %p266 = scmp.eq.s32.totalorder %s30, 0
      %p267 = por %p265, %p266
      %s269 = sadd.s32 %s268, 1
      %p272 = scmp.eq.s32.totalorder %s24, 1
      %p273 = scmp.ne.s32.totalorder %s268, %s270
      %p274 = scmp.eq.s32.totalorder %s24, 0
      %p275 = por %p273, %p274
      %p276 = scmp.ne.s32.totalorder %s268, %s270
      %p277 = scmp.eq.s32.totalorder %s29, 1
      %p278 = por %p276, %p277
      %p279 = scmp.ne.s32.totalorder %s270, %s271
      %p280 = scmp.eq.s32.totalorder %s29, 0
      %p281 = por %p279, %p280
      %p282 = scmp.ne.s32.totalorder %s270, %s271
      %p283 = scmp.eq.s32.totalorder %s30, 1
      %p284 = por %p282, %p283
      %p286 = scmp.ne.s32.totalorder %s271, %s285
      %p287 = scmp.eq.s32.totalorder %s30, 0
      %p288 = por %p286, %p287
      %s290 = sadd.s32 %s289, 1
      %p293 = scmp.eq.s32.totalorder %s24, 1
      %p294 = scmp.ne.s32.totalorder %s289, %s291
      %p295 = scmp.eq.s32.totalorder %s24, 0
      %p296 = por %p294, %p295
      %p297 = scmp.ne.s32.totalorder %s289, %s291
      %p298 = scmp.eq.s32.totalorder %s29, 1
      %p299 = por %p297, %p298
      %p300 = scmp.ne.s32.totalorder %s291, %s292
      %p301 = scmp.eq.s32.totalorder %s29, 0
      %p302 = por %p300, %p301
      %p303 = scmp.ne.s32.totalorder %s291, %s292
      %p304 = scmp.eq.s32.totalorder %s30, 1
      %p305 = por %p303, %p304
      %p307 = scmp.ne.s32.totalorder %s292, %s306
      %p308 = scmp.eq.s32.totalorder %s30, 0
      %p309 = por %p307, %p308
      %s311 = sadd.s32 %s310, 1
      %p314 = scmp.eq.s32.totalorder %s24, 1
      %p315 = scmp.ne.s32.totalorder %s310, %s312
      %p316 = scmp.eq.s32.totalorder %s24, 0
      %p317 = por %p315, %p316
      %p318 = scmp.ne.s32.totalorder %s310, %s312
      %p319 = scmp.eq.s32.totalorder %s29, 1
      %p320 = por %p318, %p319
      %p321 = scmp.ne.s32.totalorder %s312, %s313
      %p322 = scmp.eq.s32.totalorder %s29, 0
      %p323 = por %p321, %p322
      %p324 = scmp.ne.s32.totalorder %s312, %s313
      %p325 = scmp.eq.s32.totalorder %s30, 1
      %p326 = por %p324, %p325
      %p328 = scmp.ne.s32.totalorder %s313, %s327
      %p329 = scmp.eq.s32.totalorder %s30, 0
      %p330 = por %p328, %p329
      %s332 = sadd.s32 %s331, 1
      %p335 = scmp.eq.s32.totalorder %s24, 1
      %p336 = scmp.ne.s32.totalorder %s331, %s333
      %p337 = scmp.eq.s32.totalorder %s24, 0
      %p338 = por %p336, %p337
      %p339 = scmp.ne.s32.totalorder %s331, %s333
      %p340 = scmp.eq.s32.totalorder %s29, 1
      %p341 = por %p339, %p340
      %p342 = scmp.ne.s32.totalorder %s333, %s334
      %p343 = scmp.eq.s32.totalorder %s29, 0
      %p344 = por %p342, %p343
      %p345 = scmp.ne.s32.totalorder %s333, %s334
      %p346 = scmp.eq.s32.totalorder %s30, 1
      %p347 = por %p345, %p346
      %p349 = scmp.ne.s32.totalorder %s334, %s348
      %p350 = scmp.eq.s32.totalorder %s30, 0
      %p351 = por %p349, %p350
      %s352 = ssub.s32 %s24, %s31
      %p353 = scmp.eq.s32.totalorder %s352, 0
      %s355 = sadd.s32 %s354, 1
      %s356 = scalar_select %p353, %s354, %s355
      %p359 = pneg %p353
      %p360 = scmp.eq.s32.totalorder %s24, 1
      %p361 = por %p359, %p360
      %p362 = scmp.ne.s32.totalorder %s354, %s357
      %p363 = scmp.eq.s32.totalorder %s24, 0
      %p364 = por %p362, %p363
      %p365 = scmp.ne.s32.totalorder %s354, %s357
      %p366 = scmp.eq.s32.totalorder %s29, 1
      %p367 = por %p365, %p366
      %p368 = scmp.ne.s32.totalorder %s357, %s358
      %p369 = scmp.eq.s32.totalorder %s29, 0
      %p370 = por %p368, %p369
      %p371 = scmp.ne.s32.totalorder %s357, %s358
      %p372 = scmp.eq.s32.totalorder %s30, 1
      %p373 = por %p371, %p372
      %p375 = scmp.ne.s32.totalorder %s358, %s374
      %p376 = scmp.eq.s32.totalorder %s30, 0
      %p377 = por %p375, %p376
      %p378 = scmp.le.s32.totalorder 1, %s24
      %p379 = scmp.lt.s32.totalorder %s24, 3
      %p380 = pnand %p378, %p379
      %p381 = pneg %p380
      // Predicated region
      $region9: #{net_forward.1} parent=5 // pred_check
        _
      $region10: #{net_forward.1} parent=5 // pred_check_branch
        %383 = sbr.rel (%p380) target = $region12
      $region11: #{net_forward.1} parent=5 // pred_region
        %s384 = ssub.s32 %s24, 1
        // Predicated region
        $region13: #{net_forward.1} parent=11 // pred_check
          %p385 = pneg %p71
        $region14: #{net_forward.1} parent=11 // pred_check_branch
          %387 = sbr.rel (%p385) target = $region16
        $region15: #{net_forward.1} parent=11 // pred_region
          _
        $region16: #{net_forward.1} parent=11 // pred_fallthru
          _
        // Predicated region
        $region17: #{net_forward.1} parent=11 // pred_check
          %p388 = pneg %p92
        $region18: #{net_forward.1} parent=11 // pred_check_branch
          %390 = sbr.rel (%p388) target = $region20
        $region19: #{net_forward.1} parent=11 // pred_region
          _
        $region20: #{net_forward.1} parent=11 // pred_fallthru
          _
        // Predicated region
        $region21: #{net_forward.1} parent=11 // pred_check
          %p391 = pneg %p113
        $region22: #{net_forward.1} parent=11 // pred_check_branch
          %393 = sbr.rel (%p391) target = $region24
        $region23: #{net_forward.1} parent=11 // pred_region
          _
        $region24: #{net_forward.1} parent=11 // pred_fallthru
          _
        // Predicated region
        $region25: #{net_forward.1} parent=11 // pred_check
          %p394 = pneg %p134
        $region26: #{net_forward.1} parent=11 // pred_check_branch
          %396 = sbr.rel (%p394) target = $region28
        $region27: #{net_forward.1} parent=11 // pred_region
          _
        $region28: #{net_forward.1} parent=11 // pred_fallthru
          _
        // Predicated region
        $region29: #{net_forward.1} parent=11 // pred_check
          %p397 = pneg %p155
        $region30: #{net_forward.1} parent=11 // pred_check_branch
          %399 = sbr.rel (%p397) target = $region32
        $region31: #{net_forward.1} parent=11 // pred_region
          _
        $region32: #{net_forward.1} parent=11 // pred_fallthru
          _
        // Predicated region
        $region33: #{net_forward.1} parent=11 // pred_check
          %p400 = pneg %p176
        $region34: #{net_forward.1} parent=11 // pred_check_branch
          %402 = sbr.rel (%p400) target = $region36
        $region35: #{net_forward.1} parent=11 // pred_region
          _
        $region36: #{net_forward.1} parent=11 // pred_fallthru
          _
        // Predicated region
        $region37: #{net_forward.1} parent=11 // pred_check
          %p403 = pneg %p197
        $region38: #{net_forward.1} parent=11 // pred_check_branch
          %405 = sbr.rel (%p403) target = $region40
        $region39: #{net_forward.1} parent=11 // pred_region
          _
        $region40: #{net_forward.1} parent=11 // pred_fallthru
          _
        // Predicated region
        $region41: #{net_forward.1} parent=11 // pred_check
          %p406 = pneg %p218
        $region42: #{net_forward.1} parent=11 // pred_check_branch
          %408 = sbr.rel (%p406) target = $region44
        $region43: #{net_forward.1} parent=11 // pred_region
          _
        $region44: #{net_forward.1} parent=11 // pred_fallthru
          _
        // Predicated region
        $region45: #{net_forward.1} parent=11 // pred_check
          %p409 = pneg %p239
        $region46: #{net_forward.1} parent=11 // pred_check_branch
          %411 = sbr.rel (%p409) target = $region48
        $region47: #{net_forward.1} parent=11 // pred_region
          _
        $region48: #{net_forward.1} parent=11 // pred_fallthru
          _
        // Predicated region
        $region49: #{net_forward.1} parent=11 // pred_check
          %p412 = pneg %p260
        $region50: #{net_forward.1} parent=11 // pred_check_branch
          %414 = sbr.rel (%p412) target = $region52
        $region51: #{net_forward.1} parent=11 // pred_region
          _
        $region52: #{net_forward.1} parent=11 // pred_fallthru
          _
        // Predicated region
        $region53: #{net_forward.1} parent=11 // pred_check
          %p415 = pneg %p281
        $region54: #{net_forward.1} parent=11 // pred_check_branch
          %417 = sbr.rel (%p415) target = $region56
        $region55: #{net_forward.1} parent=11 // pred_region
          _
        $region56: #{net_forward.1} parent=11 // pred_fallthru
          _
        // Predicated region
        $region57: #{net_forward.1} parent=11 // pred_check
          %p418 = pneg %p302
        $region58: #{net_forward.1} parent=11 // pred_check_branch
          %420 = sbr.rel (%p418) target = $region60
        $region59: #{net_forward.1} parent=11 // pred_region
          _
        $region60: #{net_forward.1} parent=11 // pred_fallthru
          _
        // Predicated region
        $region61: #{net_forward.1} parent=11 // pred_check
          %p421 = pneg %p323
        $region62: #{net_forward.1} parent=11 // pred_check_branch
          %423 = sbr.rel (%p421) target = $region64
        $region63: #{net_forward.1} parent=11 // pred_region
          _
        $region64: #{net_forward.1} parent=11 // pred_fallthru
          _
        // Predicated region
        $region65: #{net_forward.1} parent=11 // pred_check
          %p424 = pneg %p344
        $region66: #{net_forward.1} parent=11 // pred_check_branch
          %426 = sbr.rel (%p424) target = $region68
        $region67: #{net_forward.1} parent=11 // pred_region
          _
        $region68: #{net_forward.1} parent=11 // pred_fallthru
          _
      $region12: #{net_forward.1} parent=5 // pred_fallthru
        _
      %p427 = scmp.lt.s32.totalorder %s24, 2
      // Predicated region
      $region69: #{net_forward.1} parent=5 // pred_check
        %p428 = pneg %p427
      $region70: #{net_forward.1} parent=5 // pred_check_branch
        %430 = sbr.rel (%p428) target = $region72
      $region71: #{net_forward.1} parent=5 // pred_region
        // Predicated region
        $region73: #{net_forward.1} parent=71 // pred_check
          %p431 = pneg %p44
        $region74: #{net_forward.1} parent=71 // pred_check_branch
          %433 = sbr.rel (%p431) target = $region76
        $region75: #{net_forward.1} parent=71 // pred_region
          %p434 = scmp.lt.s32.totalorder %s24, 1
          %s435 = scalar_select %p434, %s24, 1
          %s436 = smul.addr %s435, 4
          %s437 = smul.addr %s436, 8
          %s438 = scalar_lea.vmem %s0, %s437
        $region76: #{net_forward.1} parent=71 // pred_fallthru
          _
      $region72: #{net_forward.1} parent=5 // pred_fallthru
        _
      %p439 = scmp.le.s32.totalorder 1, %s24
      %p440 = scmp.lt.s32.totalorder %s24, 3
      %p441 = pnand %p439, %p440
      %p442 = pneg %p441
      // Predicated region
      $region77: #{net_forward.1} parent=5 // pred_check
        _
      $region78: #{net_forward.1} parent=5 // pred_check_branch
        %444 = sbr.rel (%p441) target = $region80
      $region79: #{net_forward.1} parent=5 // pred_region
        %s445 = ssub.s32 %s24, 1
        %p446 = scmp.lt.s32.totalorder %s29, 1
        %s447 = scalar_select %p446, %s29, 1
        %s448 = smul.addr %s447, 4
        %s449 = smul.addr %s448, 8
        %s450 = scalar_lea.vmem %s0, %s449
        %p451 = pneg %p50
        %p452 = pneg %p47
        %p453 = pneg %p71
        %p454 = pneg %p68
        %p455 = pneg %p92
        %p456 = pneg %p89
        %p457 = pneg %p113
        %p458 = pneg %p110
        %p459 = pneg %p134
        %p460 = pneg %p131
        %p461 = pneg %p155
        %p462 = pneg %p152
        %p463 = pneg %p176
        %p464 = pneg %p173
        %p465 = pneg %p197
        %p466 = pneg %p194
        %p467 = pneg %p218
        %p468 = pneg %p215
        %p469 = pneg %p239
        %p470 = pneg %p236
        %p471 = pneg %p260
        %p472 = pneg %p257
        %p473 = pneg %p281
        %p474 = pneg %p278
        %p475 = pneg %p302
        %p476 = pneg %p299
        %p477 = pneg %p323
        %p478 = pneg %p320
        %p479 = pneg %p344
        %p480 = pneg %p341
        %p481 = pneg %p370
        %p482 = pneg %p367
        %s483 = sand.u32 %s357, 1
        %s484 = scalar_lea.sflag [#allocation3], %s483
        %s485 = sand.u32 %s357, 1
        %s486 = scalar_lea.vmem [#allocation2], %s485
        %p487 = scmp.lt.s32.totalorder %s29, 1
        %s488 = scalar_select %p487, %s29, 1
        %s489 = smul.addr %s488, 4
        %s490 = smul.addr %s489, 8
        %s491 = scalar_lea.vmem %s0, %s490
        %v493 = vld [vmem:[%s491] sm:$0xff]
        %v494 = vld [vmem:[%s491 + $0x8] sm:$0xff]
        %v495 = vld [vmem:[%s491 + $0x10] sm:$0xff]
        %v496 = vld [vmem:[%s491 + $0x18] sm:$0xff]
        %v497 = vpack.c.bf16 %v494, %v493
        %v498 = vpack.c.bf16 %v496, %v495
        %v499 = vld [vmem:[%s1] sm:$0xff]
        %v500 = vld [vmem:[%s1 + $0x8] sm:$0xff]
        %v501 = vld [vmem:[%s1 + $0x10] sm:$0xff]
        %v502 = vld [vmem:[%s1 + $0x18] sm:$0xff]
        %v503 = vld [vmem:[%s1 + $0x20] sm:$0xff]
        %v504 = vld [vmem:[%s1 + $0x28] sm:$0xff]
        %v505 = vld [vmem:[%s1 + $0x30] sm:$0xff]
        %v506 = vld [vmem:[%s1 + $0x38] sm:$0xff]
        %v507 = vld [vmem:[%s1 + $0x40] sm:$0xff]
        %v508 = vld [vmem:[%s1 + $0x48] sm:$0xff]
        %v509 = vld [vmem:[%s1 + $0x50] sm:$0xff]
        %v510 = vld [vmem:[%s1 + $0x58] sm:$0xff]
        %s511 = scalar_lea.vmem %s1, 96
        %v512 = vld [vmem:[%s511] sm:$0xff]
        %v513 = vld [vmem:[%s511 + $0x8] sm:$0xff]
        %v514 = vld [vmem:[%s511 + $0x10] sm:$0xff]
        %v515 = vld [vmem:[%s511 + $0x18] sm:$0xff]
        %v516 = vld [vmem:[%s511 + $0x20] sm:$0xff]
        %v517 = vld [vmem:[%s511 + $0x28] sm:$0xff]
        %v518 = vld [vmem:[%s511 + $0x30] sm:$0xff]
        %v519 = vld [vmem:[%s511 + $0x38] sm:$0xff]
        %v520 = vld [vmem:[%s511 + $0x40] sm:$0xff]
        %v521 = vld [vmem:[%s511 + $0x48] sm:$0xff]
        %v522 = vld [vmem:[%s511 + $0x50] sm:$0xff]
        %v523 = vld [vmem:[%s511 + $0x58] sm:$0xff]
        %vm524 = vsmask.f32 7424
        %v526 = vshrl.u32 %v497, 16
        %v528 = vshll.u32 %v497, 16
        %v530 = vrot.slane %v528, 1
        %v531 = vor.u32 %v526, %v530
        %v533 = vshll.u32 %v498, 16
        %v535 = vrot.slane %v533, 1
        %v536 = vsel %vm524, %v531, %v535
        %v537 = vshrl.u32 %v498, 16
        %v539 = vor.u32 %v537, %v535
        %v552 = vunpack.c.l.b16 %v512
        %v553 = vunpack.c.h.b16 %v512
        %v554 = vunpack.c.l.b16 %v513
        %v555 = vunpack.c.h.b16 %v513
        %v556 = vunpack.c.l.b16 %v514
        %v557 = vunpack.c.h.b16 %v514
        %v558 = vunpack.c.l.b16 %v515
        %v559 = vunpack.c.h.b16 %v515
        %v560 = vunpack.c.l.b16 %v516
        %v561 = vunpack.c.h.b16 %v516
        %v562 = vunpack.c.l.b16 %v517
        %v563 = vunpack.c.h.b16 %v517
        %v564 = vunpack.c.l.b16 %v518
        %v565 = vunpack.c.h.b16 %v518
        %v566 = vunpack.c.l.b16 %v519
        %v567 = vunpack.c.h.b16 %v519
        %v568 = vunpack.c.l.b16 %v520
        %v569 = vunpack.c.h.b16 %v520
        %v570 = vunpack.c.l.b16 %v521
        %v571 = vunpack.c.h.b16 %v521
        %v572 = vunpack.c.l.b16 %v522
        %v573 = vunpack.c.h.b16 %v522
        %v574 = vunpack.c.l.b16 %v523
        %v575 = vunpack.c.h.b16 %v523
        %v576 = vpack.c.b16 %v554, %v552
        %v577 = vpack.c.b16 %v555, %v553
        %v578 = vpack.c.b16 %v558, %v556
        %v579 = vpack.c.b16 %v559, %v557
        %v580 = vpack.c.b16 %v562, %v560
        %v581 = vpack.c.b16 %v563, %v561
        %v582 = vpack.c.b16 %v566, %v564
        %v583 = vpack.c.b16 %v567, %v565
        %v584 = vpack.c.b16 %v570, %v568
        %v585 = vpack.c.b16 %v571, %v569
        %v586 = vpack.c.b16 %v574, %v572
        %v587 = vpack.c.b16 %v575, %v573
        %vm600 = vcmask 785408
        %v602 = vsel %vm600, %v536, 0
        %v605 = vsel %vm600, %v539, 0
        %607 = vmatprep.subr.bf16.mxu0 %v577
        %608 = vmatpush1.bf16.msra.mxu0 %v576
        %609 = vmatprep.subr.bf16.mxu0 %v579
        %610 = vmatpush1.bf16.msra.mxu0 %v578
        %611 = vmatprep.subr.bf16.mxu0 %v581
        %612 = vmatpush1.bf16.msra.mxu0 %v580
        %613 = vmatprep.subr.bf16.mxu0 %v583
        %614 = vmatpush1.bf16.msra.mxu0 %v582
        %615 = vmatprep.subr.bf16.mxu0 %v585
        %616 = vmatpush1.bf16.msra.mxu0 %v584
        %617 = vmatprep.subr.bf16.mxu0 %v587
        %618 = vmatpush1.bf16.msra.mxu0 %v586
        %619 = vmatprep.subr.bf16.mxu0 0
        %620 = vmatpush1.bf16.msra.mxu0 0
        %621 = vmatprep.subr.bf16.mxu0 0
        %622 = vmatpush1.bf16.msra.mxu0 0
        %623 = vmatprep.subr.bf16.mxu0 0
        %624 = vmatpush1.bf16.msra.mxu0 0
        %625 = vmatprep.subr.bf16.mxu0 0
        %626 = vmatpush1.bf16.msra.mxu0 0
        %627 = vmatprep.subr.bf16.mxu0 0
        %628 = vmatpush1.bf16.msra.mxu0 0
        %629 = vmatprep.subr.bf16.mxu0 0
        %630 = vmatpush1.bf16.msra.mxu0 0
        %631 = vmatprep.subr.bf16.mxu0 0
        %632 = vmatpush1.bf16.msra.mxu0 0
        %633 = vmatprep.subr.bf16.mxu0 0
        %634 = vmatpush1.bf16.msra.mxu0 0
        %635 = vmatprep.subr.bf16.mxu0 0
        %636 = vmatpush1.bf16.msra.mxu0 0
        %637 = vmatprep.subr.bf16.mxu0 0
        %638 = vmatpush1.bf16.msra.mxu0 0
        %639 = vmatprep.mubr.bf16.mxu0 0
        %640 = vmatmul.mubr.bf16.gmra.mrb[0].mxu0 %v602
        %v641 = vpop.f32.mrb[0].mxu0
        %v642 = vadd.f32 0.0, %v641
        %v643 = vpop.f32.mrb[0].mxu0
        %v644 = vadd.f32 0.0, %v643
        %v645 = vpop.f32.mrb[0].mxu0
        %v646 = vadd.f32 0.0, %v645
        %v647 = vpop.f32.mrb[0].mxu0
        %v648 = vadd.f32 0.0, %v647
        %649 = vmatprep.mubr.bf16.mxu0 0
        %650 = vmatmul.mubr.bf16.gmra.mrb[0].mxu0 %v605
        %v651 = vpop.f32.mrb[0].mxu0
        %v652 = vadd.f32 0.0, %v651
        %v653 = vpop.f32.mrb[0].mxu0
        %v654 = vadd.f32 0.0, %v653
        %v655 = vpop.f32.mrb[0].mxu0
        %v656 = vadd.f32 0.0, %v655
        %v657 = vpop.f32.mrb[0].mxu0
        %v658 = vadd.f32 0.0, %v657
        %659 = vdwg.mxu0
        %v672 = vunpack.c.l.b16 %v499
        %v673 = vunpack.c.h.b16 %v499
        %v674 = vunpack.c.l.b16 %v500
        %v675 = vunpack.c.h.b16 %v500
        %v676 = vunpack.c.l.b16 %v501
        %v677 = vunpack.c.h.b16 %v501
        %v678 = vunpack.c.l.b16 %v502
        %v679 = vunpack.c.h.b16 %v502
        %v680 = vunpack.c.l.b16 %v503
        %v681 = vunpack.c.h.b16 %v503
        %v682 = vunpack.c.l.b16 %v504
        %v683 = vunpack.c.h.b16 %v504
        %v684 = vunpack.c.l.b16 %v505
        %v685 = vunpack.c.h.b16 %v505
        %v686 = vunpack.c.l.b16 %v506
        %v687 = vunpack.c.h.b16 %v506
        %v688 = vunpack.c.l.b16 %v507
        %v689 = vunpack.c.h.b16 %v507
        %v690 = vunpack.c.l.b16 %v508
        %v691 = vunpack.c.h.b16 %v508
        %v692 = vunpack.c.l.b16 %v509
        %v693 = vunpack.c.h.b16 %v509
        %v694 = vunpack.c.l.b16 %v510
        %v695 = vunpack.c.h.b16 %v510
        %v696 = vpack.c.b16 %v674, %v672
        %v697 = vpack.c.b16 %v675, %v673
        %v698 = vpack.c.b16 %v678, %v676
        %v699 = vpack.c.b16 %v679, %v677
        %v700 = vpack.c.b16 %v682, %v680
        %v701 = vpack.c.b16 %v683, %v681
        %v702 = vpack.c.b16 %v686, %v684
        %v703 = vpack.c.b16 %v687, %v685
        %v704 = vpack.c.b16 %v690, %v688
        %v705 = vpack.c.b16 %v691, %v689
        %v706 = vpack.c.b16 %v694, %v692
        %v707 = vpack.c.b16 %v695, %v693
        %v720 = vsel %vm600, %v497, 0
        %v722 = vsel %vm600, %v498, 0
        %724 = vmatprep.subr.bf16.mxu0 %v697
        %725 = vmatpush1.bf16.msra.mxu0 %v696
        %726 = vmatprep.subr.bf16.mxu0 %v699
        %727 = vmatpush1.bf16.msra.mxu0 %v698
        %728 = vmatprep.subr.bf16.mxu0 %v701
        %729 = vmatpush1.bf16.msra.mxu0 %v700
        %730 = vmatprep.subr.bf16.mxu0 %v703
        %731 = vmatpush1.bf16.msra.mxu0 %v702
        %732 = vmatprep.subr.bf16.mxu0 %v705
        %733 = vmatpush1.bf16.msra.mxu0 %v704
        %734 = vmatprep.subr.bf16.mxu0 %v707
        %735 = vmatpush1.bf16.msra.mxu0 %v706
        %736 = vmatprep.subr.bf16.mxu0 0
        %737 = vmatpush1.bf16.msra.mxu0 0
        %738 = vmatprep.subr.bf16.mxu0 0
        %739 = vmatpush1.bf16.msra.mxu0 0
        %740 = vmatprep.subr.bf16.mxu0 0
        %741 = vmatpush1.bf16.msra.mxu0 0
        %742 = vmatprep.subr.bf16.mxu0 0
        %743 = vmatpush1.bf16.msra.mxu0 0
        %744 = vmatprep.subr.bf16.mxu0 0
        %745 = vmatpush1.bf16.msra.mxu0 0
        %746 = vmatprep.subr.bf16.mxu0 0
        %747 = vmatpush1.bf16.msra.mxu0 0
        %748 = vmatprep.subr.bf16.mxu0 0
        %749 = vmatpush1.bf16.msra.mxu0 0
        %750 = vmatprep.subr.bf16.mxu0 0
        %751 = vmatpush1.bf16.msra.mxu0 0
        %752 = vmatprep.subr.bf16.mxu0 0
        %753 = vmatpush1.bf16.msra.mxu0 0
        %754 = vmatprep.subr.bf16.mxu0 0
        %755 = vmatpush1.bf16.msra.mxu0 0
        %756 = vmatprep.mubr.bf16.mxu0 0
        %757 = vmatmul.mubr.bf16.gmra.mrb[0].mxu0 %v720
        %v758 = vpop.f32.mrb[0].mxu0
        %v759 = vadd.f32 %v642, %v758
        %v760 = vpop.f32.mrb[0].mxu0
        %v761 = vadd.f32 %v644, %v760
        %v762 = vpop.f32.mrb[0].mxu0
        %v763 = vadd.f32 %v646, %v762
        %v764 = vpop.f32.mrb[0].mxu0
        %v765 = vadd.f32 %v648, %v764
        %766 = vmatprep.mubr.bf16.mxu0 0
        %767 = vmatmul.mubr.bf16.gmra.mrb[0].mxu0 %v722
        %v768 = vpop.f32.mrb[0].mxu0
        %v769 = vadd.f32 %v652, %v768
        %v770 = vpop.f32.mrb[0].mxu0
        %v771 = vadd.f32 %v654, %v770
        %v772 = vpop.f32.mrb[0].mxu0
        %v773 = vadd.f32 %v656, %v772
        %v774 = vpop.f32.mrb[0].mxu0
        %v775 = vadd.f32 %v658, %v774
        %776 = vdwg.mxu0
        %s777 = scalar_lea.vmem %s1, 192
        %v778 = vld [vmem:[%s777] sm:$0xff]
        %v779 = vld [vmem:[%s777 + $0x8] sm:$0xff]
        %v780 = vld [vmem:[%s777 + $0x10] sm:$0xff]
        %v781 = vld [vmem:[%s777 + $0x18] sm:$0xff]
        %v782 = vld [vmem:[%s777 + $0x20] sm:$0xff]
        %v783 = vld [vmem:[%s777 + $0x28] sm:$0xff]
        %v784 = vld [vmem:[%s777 + $0x30] sm:$0xff]
        %v785 = vld [vmem:[%s777 + $0x38] sm:$0xff]
        %v786 = vld [vmem:[%s777 + $0x40] sm:$0xff]
        %v787 = vld [vmem:[%s777 + $0x48] sm:$0xff]
        %v788 = vld [vmem:[%s777 + $0x50] sm:$0xff]
        %v789 = vld [vmem:[%s777 + $0x58] sm:$0xff]
        %vm792 = vcmask 1046528
        %v793 = vrot.slane %v497, 1
        %v794 = vrot.slane %v498, 1
        %v795 = vsel %vm792, %v793, %v794
        %v808 = vunpack.c.l.b16 %v778
        %v809 = vunpack.c.h.b16 %v778
        %v810 = vunpack.c.l.b16 %v779
        %v811 = vunpack.c.h.b16 %v779
        %v812 = vunpack.c.l.b16 %v780
        %v813 = vunpack.c.h.b16 %v780
        %v814 = vunpack.c.l.b16 %v781
        %v815 = vunpack.c.h.b16 %v781
        %v816 = vunpack.c.l.b16 %v782
        %v817 = vunpack.c.h.b16 %v782
        %v818 = vunpack.c.l.b16 %v783
        %v819 = vunpack.c.h.b16 %v783
        %v820 = vunpack.c.l.b16 %v784
        %v821 = vunpack.c.h.b16 %v784
        %v822 = vunpack.c.l.b16 %v785
        %v823 = vunpack.c.h.b16 %v785
        %v824 = vunpack.c.l.b16 %v786
        %v825 = vunpack.c.h.b16 %v786
        %v826 = vunpack.c.l.b16 %v787
        %v827 = vunpack.c.h.b16 %v787
        %v828 = vunpack.c.l.b16 %v788
        %v829 = vunpack.c.h.b16 %v788
        %v830 = vunpack.c.l.b16 %v789
        %v831 = vunpack.c.h.b16 %v789
        %v832 = vpack.c.b16 %v810, %v808
        %v833 = vpack.c.b16 %v811, %v809
        %v834 = vpack.c.b16 %v814, %v812
        %v835 = vpack.c.b16 %v815, %v813
        %v836 = vpack.c.b16 %v818, %v816
        %v837 = vpack.c.b16 %v819, %v817
        %v838 = vpack.c.b16 %v822, %v820
        %v839 = vpack.c.b16 %v823, %v821
        %v840 = vpack.c.b16 %v826, %v824
        %v841 = vpack.c.b16 %v827, %v825
        %v842 = vpack.c.b16 %v830, %v828
        %v843 = vpack.c.b16 %v831, %v829
        %v857 = vsel %vm600, %v795, 0
        %v860 = vsel %vm600, %v794, 0
        %862 = vmatprep.subr.bf16.mxu0 %v833
        %863 = vmatpush1.bf16.msra.mxu0 %v832
        %864 = vmatprep.subr.bf16.mxu0 %v835
        %865 = vmatpush1.bf16.msra.mxu0 %v834
        %866 = vmatprep.subr.bf16.mxu0 %v837
        %867 = vmatpush1.bf16.msra.mxu0 %v836
        %868 = vmatprep.subr.bf16.mxu0 %v839
        %869 = vmatpush1.bf16.msra.mxu0 %v838
        %870 = vmatprep.subr.bf16.mxu0 %v841
        %871 = vmatpush1.bf16.msra.mxu0 %v840
        %872 = vmatprep.subr.bf16.mxu0 %v843
        %873 = vmatpush1.bf16.msra.mxu0 %v842
        %874 = vmatprep.subr.bf16.mxu0 0
        %875 = vmatpush1.bf16.msra.mxu0 0
        %876 = vmatprep.subr.bf16.mxu0 0
        %877 = vmatpush1.bf16.msra.mxu0 0
        %878 = vmatprep.subr.bf16.mxu0 0
        %879 = vmatpush1.bf16.msra.mxu0 0
        %880 = vmatprep.subr.bf16.mxu0 0
        %881 = vmatpush1.bf16.msra.mxu0 0
        %882 = vmatprep.subr.bf16.mxu0 0
        %883 = vmatpush1.bf16.msra.mxu0 0
        %884 = vmatprep.subr.bf16.mxu0 0
        %885 = vmatpush1.bf16.msra.mxu0 0
        %886 = vmatprep.subr.bf16.mxu0 0
        %887 = vmatpush1.bf16.msra.mxu0 0
        %888 = vmatprep.subr.bf16.mxu0 0
        %889 = vmatpush1.bf16.msra.mxu0 0
        %890 = vmatprep.subr.bf16.mxu0 0
        %891 = vmatpush1.bf16.msra.mxu0 0
        %892 = vmatprep.subr.bf16.mxu0 0
        %893 = vmatpush1.bf16.msra.mxu0 0
        %894 = vmatprep.mubr.bf16.mxu0 0
        %895 = vmatmul.mubr.bf16.gmra.mrb[0].mxu0 %v857
        %v896 = vpop.f32.mrb[0].mxu0
        %v897 = vadd.f32 0.0, %v896
        %v898 = vpop.f32.mrb[0].mxu0
        %v899 = vadd.f32 0.0, %v898
        %v900 = vpop.f32.mrb[0].mxu0
        %v901 = vadd.f32 0.0, %v900
        %v902 = vpop.f32.mrb[0].mxu0
        %v903 = vadd.f32 0.0, %v902
        %904 = vmatprep.mubr.bf16.mxu0 0
        %905 = vmatmul.mubr.bf16.gmra.mrb[0].mxu0 %v860
        %v906 = vpop.f32.mrb[0].mxu0
        %v907 = vadd.f32 0.0, %v906
        %v908 = vpop.f32.mrb[0].mxu0
        %v909 = vadd.f32 0.0, %v908
        %v910 = vpop.f32.mrb[0].mxu0
        %v911 = vadd.f32 0.0, %v910
        %v912 = vpop.f32.mrb[0].mxu0
        %v913 = vadd.f32 0.0, %v912
        %914 = vdwg.mxu0
        %v915 = vadd.f32 %v759, %v897
        %v916 = vadd.f32 %v761, %v899
        %v917 = vadd.f32 %v763, %v901
        %v918 = vadd.f32 %v765, %v903
        %v919 = vadd.f32 %v769, %v907
        %v920 = vadd.f32 %v771, %v909
        %v921 = vadd.f32 %v773, %v911
        %v922 = vadd.f32 %v775, %v913
        %s923 = scalar_lea.vmem %s1, 288
        %v924 = vld [vmem:[%s923] sm:$0xff]
        %v925 = vld [vmem:[%s923 + $0x8] sm:$0xff]
        %v926 = vld [vmem:[%s923 + $0x10] sm:$0xff]
        %v927 = vld [vmem:[%s923 + $0x18] sm:$0xff]
        %v928 = vld [vmem:[%s923 + $0x20] sm:$0xff]
        %v929 = vld [vmem:[%s923 + $0x28] sm:$0xff]
        %v930 = vld [vmem:[%s923 + $0x30] sm:$0xff]
        %v931 = vld [vmem:[%s923 + $0x38] sm:$0xff]
        %v932 = vld [vmem:[%s923 + $0x40] sm:$0xff]
        %v933 = vld [vmem:[%s923 + $0x48] sm:$0xff]
        %v934 = vld [vmem:[%s923 + $0x50] sm:$0xff]
        %v935 = vld [vmem:[%s923 + $0x58] sm:$0xff]
        %vm936 = vsmask.f32 6400
        %v937 = vrot.slane %v526, 1
        %v938 = vrot.slane %v528, 2
        %v939 = vor.u32 %v937, %v938
        %v940 = vrot.slane %v537, 1
        %v941 = vrot.slane %v533, 2
        %v942 = vor.u32 %v940, %v941
        %v943 = vsel %vm936, %v939, %v942
        %v956 = vunpack.c.l.b16 %v924
        %v957 = vunpack.c.h.b16 %v924
        %v958 = vunpack.c.l.b16 %v925
        %v959 = vunpack.c.h.b16 %v925
        %v960 = vunpack.c.l.b16 %v926
        %v961 = vunpack.c.h.b16 %v926
        %v962 = vunpack.c.l.b16 %v927
        %v963 = vunpack.c.h.b16 %v927
        %v964 = vunpack.c.l.b16 %v928
        %v965 = vunpack.c.h.b16 %v928
        %v966 = vunpack.c.l.b16 %v929
        %v967 = vunpack.c.h.b16 %v929
        %v968 = vunpack.c.l.b16 %v930
        %v969 = vunpack.c.h.b16 %v930
        %v970 = vunpack.c.l.b16 %v931
        %v971 = vunpack.c.h.b16 %v931
        %v972 = vunpack.c.l.b16 %v932
        %v973 = vunpack.c.h.b16 %v932
        %v974 = vunpack.c.l.b16 %v933
        %v975 = vunpack.c.h.b16 %v933
        %v976 = vunpack.c.l.b16 %v934
        %v977 = vunpack.c.h.b16 %v934
        %v978 = vunpack.c.l.b16 %v935
        %v979 = vunpack.c.h.b16 %v935
        %v980 = vpack.c.b16 %v958, %v956
        %v981 = vpack.c.b16 %v959, %v957
        %v982 = vpack.c.b16 %v962, %v960
        %v983 = vpack.c.b16 %v963, %v961
        %v984 = vpack.c.b16 %v966, %v964
        %v985 = vpack.c.b16 %v967, %v965
        %v986 = vpack.c.b16 %v970, %v968
        %v987 = vpack.c.b16 %v971, %v969
        %v988 = vpack.c.b16 %v974, %v972
        %v989 = vpack.c.b16 %v975, %v973
        %v990 = vpack.c.b16 %v978, %v976
        %v991 = vpack.c.b16 %v979, %v977
        %v1005 = vsel %vm600, %v943, 0
        %v1008 = vsel %vm600, %v942, 0
        %1010 = vmatprep.subr.bf16.mxu0 %v981
        %1011 = vmatpush1.bf16.msra.mxu0 %v980
        %1012 = vmatprep.subr.bf16.mxu0 %v983
        %1013 = vmatpush1.bf16.msra.mxu0 %v982
        %1014 = vmatprep.subr.bf16.mxu0 %v985
        %1015 = vmatpush1.bf16.msra.mxu0 %v984
        %1016 = vmatprep.subr.bf16.mxu0 %v987
        %1017 = vmatpush1.bf16.msra.mxu0 %v986
        %1018 = vmatprep.subr.bf16.mxu0 %v989
        %1019 = vmatpush1.bf16.msra.mxu0 %v988
        %1020 = vmatprep.subr.bf16.mxu0 %v991
        %1021 = vmatpush1.bf16.msra.mxu0 %v990
        %1022 = vmatprep.subr.bf16.mxu0 0
        %1023 = vmatpush1.bf16.msra.mxu0 0
        %1024 = vmatprep.subr.bf16.mxu0 0
        %1025 = vmatpush1.bf16.msra.mxu0 0
        %1026 = vmatprep.subr.bf16.mxu0 0
        %1027 = vmatpush1.bf16.msra.mxu0 0
        %1028 = vmatprep.subr.bf16.mxu0 0
        %1029 = vmatpush1.bf16.msra.mxu0 0
        %1030 = vmatprep.subr.bf16.mxu0 0
        %1031 = vmatpush1.bf16.msra.mxu0 0
        %1032 = vmatprep.subr.bf16.mxu0 0
        %1033 = vmatpush1.bf16.msra.mxu0 0
        %1034 = vmatprep.subr.bf16.mxu0 0
        %1035 = vmatpush1.bf16.msra.mxu0 0
        %1036 = vmatprep.subr.bf16.mxu0 0
        %1037 = vmatpush1.bf16.msra.mxu0 0
        %1038 = vmatprep.subr.bf16.mxu0 0
        %1039 = vmatpush1.bf16.msra.mxu0 0
        %1040 = vmatprep.subr.bf16.mxu0 0
        %1041 = vmatpush1.bf16.msra.mxu0 0
        %1042 = vmatprep.mubr.bf16.mxu0 0
        %1043 = vmatmul.mubr.bf16.gmra.mrb[0].mxu0 %v1005
        %v1044 = vpop.f32.mrb[0].mxu0
        %v1045 = vadd.f32 0.0, %v1044
        %v1046 = vpop.f32.mrb[0].mxu0
        %v1047 = vadd.f32 0.0, %v1046
        %v1048 = vpop.f32.mrb[0].mxu0
        %v1049 = vadd.f32 0.0, %v1048
        %v1050 = vpop.f32.mrb[0].mxu0
        %v1051 = vadd.f32 0.0, %v1050
        %1052 = vmatprep.mubr.bf16.mxu0 0
        %1053 = vmatmul.mubr.bf16.gmra.mrb[0].mxu0 %v1008
        %v1054 = vpop.f32.mrb[0].mxu0
        %v1055 = vadd.f32 0.0, %v1054
        %v1056 = vpop.f32.mrb[0].mxu0
        %v1057 = vadd.f32 0.0, %v1056
        %v1058 = vpop.f32.mrb[0].mxu0
        %v1059 = vadd.f32 0.0, %v1058
        %v1060 = vpop.f32.mrb[0].mxu0
        %v1061 = vadd.f32 0.0, %v1060
        %1062 = vdwg.mxu0
        %v1063 = vadd.f32 %v915, %v1045
        %v1064 = vadd.f32 %v916, %v1047
        %v1065 = vadd.f32 %v917, %v1049
        %v1066 = vadd.f32 %v918, %v1051
        %v1067 = vadd.f32 %v919, %v1055
        %v1068 = vadd.f32 %v920, %v1057
        %v1069 = vadd.f32 %v921, %v1059
        %v1070 = vadd.f32 %v922, %v1061
        %s1071 = scalar_lea.vmem %s1, 384
        %v1072 = vld [vmem:[%s1071] sm:$0xff]
        %v1073 = vld [vmem:[%s1071 + $0x8] sm:$0xff]
        %v1074 = vld [vmem:[%s1071 + $0x10] sm:$0xff]
        %v1075 = vld [vmem:[%s1071 + $0x18] sm:$0xff]
        %v1076 = vld [vmem:[%s1071 + $0x20] sm:$0xff]
        %v1077 = vld [vmem:[%s1071 + $0x28] sm:$0xff]
        %v1078 = vld [vmem:[%s1071 + $0x30] sm:$0xff]
        %v1079 = vld [vmem:[%s1071 + $0x38] sm:$0xff]
        %v1080 = vld [vmem:[%s1071 + $0x40] sm:$0xff]
        %v1081 = vld [vmem:[%s1071 + $0x48] sm:$0xff]
        %v1082 = vld [vmem:[%s1071 + $0x50] sm:$0xff]
        %v1083 = vld [vmem:[%s1071 + $0x58] sm:$0xff]
        %vm1084 = vcmask 1045504
        %v1085 = vrot.slane %v497, 2
        %v1086 = vrot.slane %v498, 2
        %v1087 = vsel %vm1084, %v1085, %v1086
        %v1100 = vunpack.c.l.b16 %v1072
        %v1101 = vunpack.c.h.b16 %v1072
        %v1102 = vunpack.c.l.b16 %v1073
        %v1103 = vunpack.c.h.b16 %v1073
        %v1104 = vunpack.c.l.b16 %v1074
        %v1105 = vunpack.c.h.b16 %v1074
        %v1106 = vunpack.c.l.b16 %v1075
        %v1107 = vunpack.c.h.b16 %v1075
        %v1108 = vunpack.c.l.b16 %v1076
        %v1109 = vunpack.c.h.b16 %v1076
        %v1110 = vunpack.c.l.b16 %v1077
        %v1111 = vunpack.c.h.b16 %v1077
        %v1112 = vunpack.c.l.b16 %v1078
        %v1113 = vunpack.c.h.b16 %v1078
        %v1114 = vunpack.c.l.b16 %v1079
        %v1115 = vunpack.c.h.b16 %v1079
        %v1116 = vunpack.c.l.b16 %v1080
        %v1117 = vunpack.c.h.b16 %v1080
        %v1118 = vunpack.c.l.b16 %v1081
        %v1119 = vunpack.c.h.b16 %v1081
        %v1120 = vunpack.c.l.b16 %v1082
        %v1121 = vunpack.c.h.b16 %v1082
        %v1122 = vunpack.c.l.b16 %v1083
        %v1123 = vunpack.c.h.b16 %v1083
        %v1124 = vpack.c.b16 %v1102, %v1100
        %v1125 = vpack.c.b16 %v1103, %v1101
        %v1126 = vpack.c.b16 %v1106, %v1104
        %v1127 = vpack.c.b16 %v1107, %v1105
        %v1128 = vpack.c.b16 %v1110, %v1108
        %v1129 = vpack.c.b16 %v1111, %v1109
        %v1130 = vpack.c.b16 %v1114, %v1112
        %v1131 = vpack.c.b16 %v1115, %v1113
        %v1132 = vpack.c.b16 %v1118, %v1116
        %v1133 = vpack.c.b16 %v1119, %v1117
        %v1134 = vpack.c.b16 %v1122, %v1120
        %v1135 = vpack.c.b16 %v1123, %v1121
        %v1149 = vsel %vm600, %v1087, 0
        %v1152 = vsel %vm600, %v1086, 0
        %1154 = vmatprep.subr.bf16.mxu0 %v1125
        %1155 = vmatpush1.bf16.msra.mxu0 %v1124
        %1156 = vmatprep.subr.bf16.mxu0 %v1127
        %1157 = vmatpush1.bf16.msra.mxu0 %v1126
        %1158 = vmatprep.subr.bf16.mxu0 %v1129
        %1159 = vmatpush1.bf16.msra.mxu0 %v1128
        %1160 = vmatprep.subr.bf16.mxu0 %v1131
        %1161 = vmatpush1.bf16.msra.mxu0 %v1130
        %1162 = vmatprep.subr.bf16.mxu0 %v1133
        %1163 = vmatpush1.bf16.msra.mxu0 %v1132
        %1164 = vmatprep.subr.bf16.mxu0 %v1135
        %1165 = vmatpush1.bf16.msra.mxu0 %v1134
        %1166 = vmatprep.subr.bf16.mxu0 0
        %1167 = vmatpush1.bf16.msra.mxu0 0
        %1168 = vmatprep.subr.bf16.mxu0 0
        %1169 = vmatpush1.bf16.msra.mxu0 0
        %1170 = vmatprep.subr.bf16.mxu0 0
        %1171 = vmatpush1.bf16.msra.mxu0 0
        %1172 = vmatprep.subr.bf16.mxu0 0
        %1173 = vmatpush1.bf16.msra.mxu0 0
        %1174 = vmatprep.subr.bf16.mxu0 0
        %1175 = vmatpush1.bf16.msra.mxu0 0
        %1176 = vmatprep.subr.bf16.mxu0 0
        %1177 = vmatpush1.bf16.msra.mxu0 0
        %1178 = vmatprep.subr.bf16.mxu0 0
        %1179 = vmatpush1.bf16.msra.mxu0 0
        %1180 = vmatprep.subr.bf16.mxu0 0
        %1181 = vmatpush1.bf16.msra.mxu0 0
        %1182 = vmatprep.subr.bf16.mxu0 0
        %1183 = vmatpush1.bf16.msra.mxu0 0
        %1184 = vmatprep.subr.bf16.mxu0 0
        %1185 = vmatpush1.bf16.msra.mxu0 0
        %1186 = vmatprep.mubr.bf16.mxu0 0
        %1187 = vmatmul.mubr.bf16.gmra.mrb[0].mxu0 %v1149
        %v1188 = vpop.f32.mrb[0].mxu0
        %v1189 = vadd.f32 0.0, %v1188
        %v1190 = vpop.f32.mrb[0].mxu0
        %v1191 = vadd.f32 0.0, %v1190
        %v1192 = vpop.f32.mrb[0].mxu0
        %v1193 = vadd.f32 0.0, %v1192
        %v1194 = vpop.f32.mrb[0].mxu0
        %v1195 = vadd.f32 0.0, %v1194
        %1196 = vmatprep.mubr.bf16.mxu0 0
        %1197 = vmatmul.mubr.bf16.gmra.mrb[0].mxu0 %v1152
        %v1198 = vpop.f32.mrb[0].mxu0
        %v1199 = vadd.f32 0.0, %v1198
        %v1200 = vpop.f32.mrb[0].mxu0
        %v1201 = vadd.f32 0.0, %v1200
        %v1202 = vpop.f32.mrb[0].mxu0
        %v1203 = vadd.f32 0.0, %v1202
        %v1204 = vpop.f32.mrb[0].mxu0
        %v1205 = vadd.f32 0.0, %v1204
        %1206 = vdwg.mxu0
        %v1207 = vadd.f32 %v1063, %v1189
        %v1208 = vadd.f32 %v1064, %v1191
        %v1209 = vadd.f32 %v1065, %v1193
        %v1210 = vadd.f32 %v1066, %v1195
        %v1211 = vadd.f32 %v1067, %v1199
        %v1212 = vadd.f32 %v1068, %v1201
        %v1213 = vadd.f32 %v1069, %v1203
        %v1214 = vadd.f32 %v1070, %v1205
        %v1215 = vld [vmem:[%s2] sm:$0x3]
        %v1217 = vlaneseq
        %v1218 = vshrl.u32 %v1217, 7
        %v1219 = vsub.s32 0, %v1218
        %v1220 = vrot.slane %v1215, %v1219
        %v1221 = vlaneseq
        %v1222 = vshrl.u32 %v1221, 7
        %v1223 = vsub.s32 1, %v1222
        %v1224 = vrot.slane %v1215, %v1223
        %v1227 = vadd.f32 %v1207, %v1220
        %v1228 = vadd.f32 %v1208, %v1224
        %v1229 = vadd.f32 %v1209, %v1220
        %v1230 = vadd.f32 %v1210, %v1224
        %v1231 = vadd.f32 %v1211, %v1220
        %v1232 = vadd.f32 %v1212, %v1224
        %v1233 = vadd.f32 %v1213, %v1220
        %v1234 = vadd.f32 %v1214, %v1224
        %v1235 = vmax.f32 %v1227, 0.0
        %v1236 = vmax.f32 %v1228, 0.0
        %v1237 = vmax.f32 %v1229, 0.0
        %v1238 = vmax.f32 %v1230, 0.0
        %v1239 = vmax.f32 %v1231, 0.0
        %v1240 = vmax.f32 %v1232, 0.0
        %v1241 = vmax.f32 %v1233, 0.0
        %v1242 = vmax.f32 %v1234, 0.0
        %v1243 = vld [vmem:[%s3] sm:$0xff]
        %v1244 = vld [vmem:[%s3 + $0x8] sm:$0x3f]
        %vm1245 = vcmask 228352
        %v1247 = vsel %vm1245, %v1243, 0
        %v1250 = vsel %vm1245, %v1244, 0
        %vm1252 = vcmask 1043456
        %v1254 = vsel %vm1252, %v1241, 0
        %v1257 = vsel %vm1252, %v1242, 0
        %1259 = vmatprep.subr.mxu0 %v1236
        %1260 = vmatpush1.msra.mxu0 %v1235
        %1261 = vmatprep.subr.mxu0 %v1238
        %1262 = vmatpush1.msra.mxu0 %v1237
        %1263 = vmatprep.subr.mxu0 %v1240
        %1264 = vmatpush1.msra.mxu0 %v1239
        %1265 = vmatprep.subr.mxu0 %v1257
        %1266 = vmatpush1.msra.mxu0 %v1254
        %1267 = vmatprep.subr.mxu0 0.0
        %1268 = vmatpush1.msra.mxu0 0.0
        %1269 = vmatprep.subr.mxu0 0.0
        %1270 = vmatpush1.msra.mxu0 0.0
        %1271 = vmatprep.subr.mxu0 0.0
        %1272 = vmatpush1.msra.mxu0 0.0
        %1273 = vmatprep.subr.mxu0 0.0
        %1274 = vmatpush1.msra.mxu0 0.0
        %1275 = vmatprep.subr.mxu0 0.0
        %1276 = vmatpush1.msra.mxu0 0.0
        %1277 = vmatprep.subr.mxu0 0.0
        %1278 = vmatpush1.msra.mxu0 0.0
        %1279 = vmatprep.subr.mxu0 0.0
        %1280 = vmatpush1.msra.mxu0 0.0
        %1281 = vmatprep.subr.mxu0 0.0
        %1282 = vmatpush1.msra.mxu0 0.0
        %1283 = vmatprep.subr.mxu0 0.0
        %1284 = vmatpush1.msra.mxu0 0.0
        %1285 = vmatprep.subr.mxu0 0.0
        %1286 = vmatpush1.msra.mxu0 0.0
        %1287 = vmatprep.subr.mxu0 0.0
        %1288 = vmatpush1.msra.mxu0 0.0
        %1289 = vmatprep.subr.mxu0 0.0
        %1290 = vmatpush1.msra.mxu0 0.0
        %1291 = vmatprep.subr.mxu0 0.0
        %1292 = vmatpush1.msra.mxu0 0.0
        %1293 = vmatprep.subr.mxu0 0.0
        %1294 = vmatpush1.msra.mxu0 0.0
        %1295 = vmatprep.subr.mxu0 0.0
        %1296 = vmatpush1.msra.mxu0 0.0
        %1297 = vmatprep.subr.mxu0 0.0
        %1298 = vmatpush1.msra.mxu0 0.0
        %1299 = vmatprep.subr.mxu0 0.0
        %1300 = vmatpush1.msra.mxu0 0.0
        %1301 = vmatprep.subr.mxu0 0.0
        %1302 = vmatpush1.msra.mxu0 0.0
        %1303 = vmatprep.subr.mxu0 0.0
        %1304 = vmatpush1.msra.mxu0 0.0
        %1305 = vmatprep.subr.mxu0 0.0
        %1306 = vmatpush1.msra.mxu0 0.0
        %1307 = vmatprep.subr.mxu0 0.0
        %1308 = vmatpush1.msra.mxu0 0.0
        %1309 = vmatprep.subr.mxu0 0.0
        %1310 = vmatpush1.msra.mxu0 0.0
        %1311 = vmatprep.subr.mxu0 0.0
        %1312 = vmatpush1.msra.mxu0 0.0
        %1313 = vmatprep.subr.mxu0 0.0
        %1314 = vmatpush1.msra.mxu0 0.0
        %1315 = vmatprep.subr.mxu0 0.0
        %1316 = vmatpush1.msra.mxu0 0.0
        %1317 = vmatprep.subr.mxu0 0.0
        %1318 = vmatpush1.msra.mxu0 0.0
        %1319 = vmatprep.subr.mxu0 0.0
        %1320 = vmatpush1.msra.mxu0 0.0
        %1321 = vmatprep.subr.mxu0 0.0
        %1322 = vmatpush1.msra.mxu0 0.0
        %1323 = vmatprep.mubr.f32.mxu0 0.0
        %1324 = vmatmul.mubr.f32.gmra.mrb[0].mxu0 %v1247
        %v1325 = vpop.f32.mrb[0].mxu0
        %v1326 = vadd.f32 0.0, %v1325
        %v1327 = vpop.f32.mrb[0].mxu0
        %v1328 = vadd.f32 0.0, %v1327
        %1329 = vmatprep.mubr.f32.mxu0 0.0
        %1330 = vmatmul.mubr.f32.gmra.mrb[0].mxu0 %v1250
        %v1331 = vpop.f32.mrb[0].mxu0
        %v1332 = vadd.f32 0.0, %v1331
        %v1333 = vpop.f32.mrb[0].mxu0
        %v1334 = vadd.f32 0.0, %v1333
        %1335 = vdwg.mxu0
        %s1336 = scalar_lea.vmem %s3, 16
        %v1337 = vld [vmem:[%s1336] sm:$0xff]
        %v1338 = vld [vmem:[%s1336 + $0x8] sm:$0x3f]
        %v1340 = vsel %vm1245, %v1337, 0
        %v1343 = vsel %vm1245, %v1338, 0
        %1345 = vmatprep.subr.mxu0 %v1236
        %1346 = vmatpush1.msra.mxu0 %v1235
        %1347 = vmatprep.subr.mxu0 %v1238
        %1348 = vmatpush1.msra.mxu0 %v1237
        %1349 = vmatprep.subr.mxu0 %v1240
        %1350 = vmatpush1.msra.mxu0 %v1239
        %1351 = vmatprep.subr.mxu0 %v1257
        %1352 = vmatpush1.msra.mxu0 %v1254
        %1353 = vmatprep.subr.mxu0 0.0
        %1354 = vmatpush1.msra.mxu0 0.0
        %1355 = vmatprep.subr.mxu0 0.0
        %1356 = vmatpush1.msra.mxu0 0.0
        %1357 = vmatprep.subr.mxu0 0.0
        %1358 = vmatpush1.msra.mxu0 0.0
        %1359 = vmatprep.subr.mxu0 0.0
        %1360 = vmatpush1.msra.mxu0 0.0
        %1361 = vmatprep.subr.mxu0 0.0
        %1362 = vmatpush1.msra.mxu0 0.0
        %1363 = vmatprep.subr.mxu0 0.0
        %1364 = vmatpush1.msra.mxu0 0.0
        %1365 = vmatprep.subr.mxu0 0.0
        %1366 = vmatpush1.msra.mxu0 0.0
        %1367 = vmatprep.subr.mxu0 0.0
        %1368 = vmatpush1.msra.mxu0 0.0
        %1369 = vmatprep.subr.mxu0 0.0
        %1370 = vmatpush1.msra.mxu0 0.0
        %1371 = vmatprep.subr.mxu0 0.0
        %1372 = vmatpush1.msra.mxu0 0.0
        %1373 = vmatprep.subr.mxu0 0.0
        %1374 = vmatpush1.msra.mxu0 0.0
        %1375 = vmatprep.subr.mxu0 0.0
        %1376 = vmatpush1.msra.mxu0 0.0
        %1377 = vmatprep.subr.mxu0 0.0
        %1378 = vmatpush1.msra.mxu0 0.0
        %1379 = vmatprep.subr.mxu0 0.0
        %1380 = vmatpush1.msra.mxu0 0.0
        %1381 = vmatprep.subr.mxu0 0.0
        %1382 = vmatpush1.msra.mxu0 0.0
        %1383 = vmatprep.subr.mxu0 0.0
        %1384 = vmatpush1.msra.mxu0 0.0
        %1385 = vmatprep.subr.mxu0 0.0
        %1386 = vmatpush1.msra.mxu0 0.0
        %1387 = vmatprep.subr.mxu0 0.0
        %1388 = vmatpush1.msra.mxu0 0.0
        %1389 = vmatprep.subr.mxu0 0.0
        %1390 = vmatpush1.msra.mxu0 0.0
        %1391 = vmatprep.subr.mxu0 0.0
        %1392 = vmatpush1.msra.mxu0 0.0
        %1393 = vmatprep.subr.mxu0 0.0
        %1394 = vmatpush1.msra.mxu0 0.0
        %1395 = vmatprep.subr.mxu0 0.0
        %1396 = vmatpush1.msra.mxu0 0.0
        %1397 = vmatprep.subr.mxu0 0.0
        %1398 = vmatpush1.msra.mxu0 0.0
        %1399 = vmatprep.subr.mxu0 0.0
        %1400 = vmatpush1.msra.mxu0 0.0
        %1401 = vmatprep.subr.mxu0 0.0
        %1402 = vmatpush1.msra.mxu0 0.0
        %1403 = vmatprep.subr.mxu0 0.0
        %1404 = vmatpush1.msra.mxu0 0.0
        %1405 = vmatprep.subr.mxu0 0.0
        %1406 = vmatpush1.msra.mxu0 0.0
        %1407 = vmatprep.subr.mxu0 0.0
        %1408 = vmatpush1.msra.mxu0 0.0
        %1409 = vmatprep.mubr.f32.mxu0 0.0
        %1410 = vmatmul.mubr.f32.gmra.mrb[0].mxu0 %v1340
        %v1411 = vpop.f32.mrb[0].mxu0
        %v1412 = vadd.f32 0.0, %v1411
        %v1413 = vpop.f32.mrb[0].mxu0
        %v1414 = vadd.f32 0.0, %v1413
        %1415 = vmatprep.mubr.f32.mxu0 0.0
        %1416 = vmatmul.mubr.f32.gmra.mrb[0].mxu0 %v1343
        %v1417 = vpop.f32.mrb[0].mxu0
        %v1418 = vadd.f32 0.0, %v1417
        %v1419 = vpop.f32.mrb[0].mxu0
        %v1420 = vadd.f32 0.0, %v1419
        %1421 = vdwg.mxu0
        %v1422 = vmax.f32 %v1326, %v1412
        %v1423 = vmax.f32 %v1328, %v1414
        %v1424 = vmax.f32 %v1332, %v1418
        %v1425 = vmax.f32 %v1334, %v1420
        %v1426 = vld [vmem:[%s4] sm:$0xff]
        %v1427 = vld [vmem:[%s4 + $0x8] sm:$0xff]
        %v1428 = vld [vmem:[%s4 + $0x10] sm:$0xff]
        %v1429 = vld [vmem:[%s4 + $0x18] sm:$0xff]
        %v1430 = vld [vmem:[%s4 + $0x20] sm:$0xff]
        %v1431 = vld [vmem:[%s4 + $0x28] sm:$0xff]
        %v1432 = vld [vmem:[%s4 + $0x30] sm:$0xff]
        %v1433 = vld [vmem:[%s4 + $0x38] sm:$0xff]
        %v1434 = vld [vmem:[%s4 + $0x40] sm:$0xff]
        %v1435 = vld [vmem:[%s4 + $0x48] sm:$0xff]
        %v1436 = vld [vmem:[%s4 + $0x50] sm:$0xff]
        %v1437 = vld [vmem:[%s4 + $0x58] sm:$0xff]
        %v1438 = vld [vmem:[%s4 + $0x60] sm:$0xff]
        %v1439 = vld [vmem:[%s4 + $0x68] sm:$0xff]
        %v1440 = vld [vmem:[%s4 + $0x70] sm:$0xff]
        %v1441 = vld [vmem:[%s4 + $0x78] sm:$0xff]
        %v1442 = vld [vmem:[%s4 + $0x80] sm:$0xff]
        %v1443 = vld [vmem:[%s4 + $0x88] sm:$0xff]
        %v1444 = vld [vmem:[%s4 + $0x90] sm:$0xff]
        %v1445 = vld [vmem:[%s4 + $0x98] sm:$0xff]
        %v1446 = vld [vmem:[%s4 + $0xa0] sm:$0xff]
        %vm1447 = vcmask 326656
        %v1449 = vsel %vm1447, %v1423, 0
        %v1452 = vsel %vm1447, %v1425, 0
        %1454 = vmatprep.subr.mxu0 0.0
        %1455 = vmatpush1.msra.mxu0 %v1426
        %1456 = vmatprep.subr.mxu0 0.0
        %1457 = vmatpush1.msra.mxu0 %v1427
        %1458 = vmatprep.subr.mxu0 0.0
        %1459 = vmatpush1.msra.mxu0 %v1428
        %1460 = vmatprep.subr.mxu0 0.0
        %1461 = vmatpush1.msra.mxu0 %v1429
        %1462 = vmatprep.subr.mxu0 0.0
        %1463 = vmatpush1.msra.mxu0 %v1430
        %1464 = vmatprep.subr.mxu0 0.0
        %1465 = vmatpush1.msra.mxu0 %v1431
        %1466 = vmatprep.subr.mxu0 0.0
        %1467 = vmatpush1.msra.mxu0 %v1432
        %1468 = vmatprep.subr.mxu0 0.0
        %1469 = vmatpush1.msra.mxu0 %v1433
        %1470 = vmatprep.subr.mxu0 0.0
        %1471 = vmatpush1.msra.mxu0 %v1434
        %1472 = vmatprep.subr.mxu0 0.0
        %1473 = vmatpush1.msra.mxu0 %v1435
        %1474 = vmatprep.subr.mxu0 0.0
        %1475 = vmatpush1.msra.mxu0 %v1436
        %1476 = vmatprep.subr.mxu0 0.0
        %1477 = vmatpush1.msra.mxu0 %v1437
        %1478 = vmatprep.subr.mxu0 0.0
        %1479 = vmatpush1.msra.mxu0 %v1438
        %1480 = vmatprep.subr.mxu0 0.0
        %1481 = vmatpush1.msra.mxu0 %v1439
        %1482 = vmatprep.subr.mxu0 0.0
        %1483 = vmatpush1.msra.mxu0 %v1440
        %1484 = vmatprep.subr.mxu0 0.0
        %1485 = vmatpush1.msra.mxu0 %v1441
        %1486 = vmatprep.subr.mxu0 0.0
        %1487 = vmatpush1.msra.mxu0 %v1442
        %1488 = vmatprep.subr.mxu0 0.0
        %1489 = vmatpush1.msra.mxu0 %v1443
        %1490 = vmatprep.subr.mxu0 0.0
        %1491 = vmatpush1.msra.mxu0 %v1444
        %1492 = vmatprep.subr.mxu0 0.0
        %1493 = vmatpush1.msra.mxu0 %v1445
        %1494 = vmatprep.subr.mxu0 0.0
        %1495 = vmatpush1.msra.mxu0 %v1446
        %1496 = vmatprep.subr.mxu0 0.0
        %1497 = vmatpush1.msra.mxu0 0.0
        %1498 = vmatprep.subr.mxu0 0.0
        %1499 = vmatpush1.msra.mxu0 0.0
        %1500 = vmatprep.subr.mxu0 0.0
        %1501 = vmatpush1.msra.mxu0 0.0
        %1502 = vmatprep.subr.mxu0 0.0
        %1503 = vmatpush1.msra.mxu0 0.0
        %1504 = vmatprep.subr.mxu0 0.0
        %1505 = vmatpush1.msra.mxu0 0.0
        %1506 = vmatprep.subr.mxu0 0.0
        %1507 = vmatpush1.msra.mxu0 0.0
        %1508 = vmatprep.subr.mxu0 0.0
        %1509 = vmatpush1.msra.mxu0 0.0
        %1510 = vmatprep.subr.mxu0 0.0
        %1511 = vmatpush1.msra.mxu0 0.0
        %1512 = vmatprep.subr.mxu0 0.0
        %1513 = vmatpush1.msra.mxu0 0.0
        %1514 = vmatprep.subr.mxu0 0.0
        %1515 = vmatpush1.msra.mxu0 0.0
        %1516 = vmatprep.subr.mxu0 0.0
        %1517 = vmatpush1.msra.mxu0 0.0
        %1518 = vmatprep.mubr.f32.mxu0 %v1449
        %1519 = vmatmul.mubr.f32.gmra.mrb[0].mxu0 %v1422
        %v1520 = vpop.f32.mrb[0].mxu0
        %v1521 = vadd.f32 0.0, %v1520
        %v1522 = vpop.f32.mrb[0].mxu0
        %1523 = vmatprep.mubr.f32.mxu0 %v1452
        %1524 = vmatmul.mubr.f32.gmra.mrb[0].mxu0 %v1424
        %v1525 = vpop.f32.mrb[0].mxu0
        %v1526 = vadd.f32 0.0, %v1525
        %v1527 = vpop.f32.mrb[0].mxu0
        %1528 = vdwg.mxu0
        %s1529 = scalar_lea.vmem %s4, 168
        %v1530 = vld [vmem:[%s1529] sm:$0xff]
        %v1531 = vld [vmem:[%s1529 + $0x8] sm:$0xff]
        %v1532 = vld [vmem:[%s1529 + $0x10] sm:$0xff]
        %v1533 = vld [vmem:[%s1529 + $0x18] sm:$0xff]
        %v1534 = vld [vmem:[%s1529 + $0x20] sm:$0xff]
        %v1535 = vld [vmem:[%s1529 + $0x28] sm:$0xff]
        %v1536 = vld [vmem:[%s1529 + $0x30] sm:$0xff]
        %v1537 = vld [vmem:[%s1529 + $0x38] sm:$0xff]
        %v1538 = vld [vmem:[%s1529 + $0x40] sm:$0xff]
        %v1539 = vld [vmem:[%s1529 + $0x48] sm:$0xff]
        %v1540 = vld [vmem:[%s1529 + $0x50] sm:$0xff]
        %v1541 = vld [vmem:[%s1529 + $0x58] sm:$0xff]
        %v1542 = vld [vmem:[%s1529 + $0x60] sm:$0xff]
        %v1543 = vld [vmem:[%s1529 + $0x68] sm:$0xff]
        %v1544 = vld [vmem:[%s1529 + $0x70] sm:$0xff]
        %v1545 = vld [vmem:[%s1529 + $0x78] sm:$0xff]
        %v1546 = vld [vmem:[%s1529 + $0x80] sm:$0xff]
        %v1547 = vld [vmem:[%s1529 + $0x88] sm:$0xff]
        %v1548 = vld [vmem:[%s1529 + $0x90] sm:$0xff]
        %v1549 = vld [vmem:[%s1529 + $0x98] sm:$0xff]
        %v1550 = vld [vmem:[%s1529 + $0xa0] sm:$0xff]
        %1551 = vmatprep.subr.mxu0 0.0
        %1552 = vmatpush1.msra.mxu0 %v1530
        %1553 = vmatprep.subr.mxu0 0.0
        %1554 = vmatpush1.msra.mxu0 %v1531
        %1555 = vmatprep.subr.mxu0 0.0
        %1556 = vmatpush1.msra.mxu0 %v1532
        %1557 = vmatprep.subr.mxu0 0.0
        %1558 = vmatpush1.msra.mxu0 %v1533
        %1559 = vmatprep.subr.mxu0 0.0
        %1560 = vmatpush1.msra.mxu0 %v1534
        %1561 = vmatprep.subr.mxu0 0.0
        %1562 = vmatpush1.msra.mxu0 %v1535
        %1563 = vmatprep.subr.mxu0 0.0
        %1564 = vmatpush1.msra.mxu0 %v1536
        %1565 = vmatprep.subr.mxu0 0.0
        %1566 = vmatpush1.msra.mxu0 %v1537
        %1567 = vmatprep.subr.mxu0 0.0
        %1568 = vmatpush1.msra.mxu0 %v1538
        %1569 = vmatprep.subr.mxu0 0.0
        %1570 = vmatpush1.msra.mxu0 %v1539
        %1571 = vmatprep.subr.mxu0 0.0
        %1572 = vmatpush1.msra.mxu0 %v1540
        %1573 = vmatprep.subr.mxu0 0.0
        %1574 = vmatpush1.msra.mxu0 %v1541
        %1575 = vmatprep.subr.mxu0 0.0
        %1576 = vmatpush1.msra.mxu0 %v1542
        %1577 = vmatprep.subr.mxu0 0.0
        %1578 = vmatpush1.msra.mxu0 %v1543
        %1579 = vmatprep.subr.mxu0 0.0
        %1580 = vmatpush1.msra.mxu0 %v1544
        %1581 = vmatprep.subr.mxu0 0.0
        %1582 = vmatpush1.msra.mxu0 %v1545
        %1583 = vmatprep.subr.mxu0 0.0
        %1584 = vmatpush1.msra.mxu0 %v1546
        %1585 = vmatprep.subr.mxu0 0.0
        %1586 = vmatpush1.msra.mxu0 %v1547
        %1587 = vmatprep.subr.mxu0 0.0
        %1588 = vmatpush1.msra.mxu0 %v1548
        %1589 = vmatprep.subr.mxu0 0.0
        %1590 = vmatpush1.msra.mxu0 %v1549
        %1591 = vmatprep.subr.mxu0 0.0
        %1592 = vmatpush1.msra.mxu0 %v1550
        %1593 = vmatprep.subr.mxu0 0.0
        %1594 = vmatpush1.msra.mxu0 0.0
        %1595 = vmatprep.subr.mxu0 0.0
        %1596 = vmatpush1.msra.mxu0 0.0
        %1597 = vmatprep.subr.mxu0 0.0
        %1598 = vmatpush1.msra.mxu0 0.0
        %1599 = vmatprep.subr.mxu0 0.0
        %1600 = vmatpush1.msra.mxu0 0.0
        %1601 = vmatprep.subr.mxu0 0.0
        %1602 = vmatpush1.msra.mxu0 0.0
        %1603 = vmatprep.subr.mxu0 0.0
        %1604 = vmatpush1.msra.mxu0 0.0
        %1605 = vmatprep.subr.mxu0 0.0
        %1606 = vmatpush1.msra.mxu0 0.0
        %1607 = vmatprep.subr.mxu0 0.0
        %1608 = vmatpush1.msra.mxu0 0.0
        %1609 = vmatprep.subr.mxu0 0.0
        %1610 = vmatpush1.msra.mxu0 0.0
        %1611 = vmatprep.subr.mxu0 0.0
        %1612 = vmatpush1.msra.mxu0 0.0
        %1613 = vmatprep.subr.mxu0 0.0
        %1614 = vmatpush1.msra.mxu0 0.0
        %1615 = vmatprep.mubr.f32.mxu0 %v1449
        %1616 = vmatmul.mubr.f32.gmra.mrb[0].mxu0 %v1422
        %v1617 = vpop.f32.mrb[0].mxu0
        %v1618 = vadd.f32 0.0, %v1617
        %v1619 = vpop.f32.mrb[0].mxu0
        %1620 = vmatprep.mubr.f32.mxu0 %v1452
        %1621 = vmatmul.mubr.f32.gmra.mrb[0].mxu0 %v1424
        %v1622 = vpop.f32.mrb[0].mxu0
        %v1623 = vadd.f32 0.0, %v1622
        %v1624 = vpop.f32.mrb[0].mxu0
        %1625 = vdwg.mxu0
        %v1626 = vmax.f32 %v1521, %v1618
        %v1627 = vmax.f32 %v1526, %v1623
        %v1628 = vpack.c.bf16 %v1627, %v1626
        %v1629 = vld [vmem:[%s5] sm:$0xff]
        %v1630 = vld [vmem:[%s5 + $0x8] sm:$0xff]
        %v1631 = vld [vmem:[%s5 + $0x10] sm:$0xff]
        %v1632 = vld [vmem:[%s5 + $0x18] sm:$0xff]
        %v1633 = vld [vmem:[%s5 + $0x20] sm:$0xff]
        %v1634 = vld [vmem:[%s5 + $0x28] sm:$0xff]
        %v1635 = vld [vmem:[%s5 + $0x30] sm:$0xff]
        %v1636 = vld [vmem:[%s5 + $0x38] sm:$0xff]
        %v1637 = vld [vmem:[%s5 + $0x40] sm:$0xff]
        %v1638 = vld [vmem:[%s5 + $0x48] sm:$0xff]
        %v1639 = vld [vmem:[%s5 + $0x50] sm:$0x33]
        %s1640 = scalar_lea.vmem %s5, 88
        %v1641 = vld [vmem:[%s1640] sm:$0xff]
        %v1642 = vld [vmem:[%s1640 + $0x8] sm:$0xff]
        %v1643 = vld [vmem:[%s1640 + $0x10] sm:$0xff]
        %v1644 = vld [vmem:[%s1640 + $0x18] sm:$0xff]
        %v1645 = vld [vmem:[%s1640 + $0x20] sm:$0xff]
        %v1646 = vld [vmem:[%s1640 + $0x28] sm:$0xff]
        %v1647 = vld [vmem:[%s1640 + $0x30] sm:$0xff]
        %v1648 = vld [vmem:[%s1640 + $0x38] sm:$0xff]
        %v1649 = vld [vmem:[%s1640 + $0x40] sm:$0xff]
        %v1650 = vld [vmem:[%s1640 + $0x48] sm:$0xff]
        %v1651 = vld [vmem:[%s1640 + $0x50] sm:$0x33]
        %v1653 = vshrl.u32 %v1628, 16
        %v1655 = vshll.u32 %v1628, 16
        %v1657 = vrot.slane %v1655, 1
        %v1658 = vor.u32 %v1653, %v1657
        %v1670 = vunpack.c.l.b16 %v1641
        %v1671 = vunpack.c.h.b16 %v1641
        %v1672 = vunpack.c.l.b16 %v1642
        %v1673 = vunpack.c.h.b16 %v1642
        %v1674 = vunpack.c.l.b16 %v1643
        %v1675 = vunpack.c.h.b16 %v1643
        %v1676 = vunpack.c.l.b16 %v1644
        %v1677 = vunpack.c.h.b16 %v1644
        %v1678 = vunpack.c.l.b16 %v1645
        %v1679 = vunpack.c.h.b16 %v1645
        %v1680 = vunpack.c.l.b16 %v1646
        %v1681 = vunpack.c.h.b16 %v1646
        %v1682 = vunpack.c.l.b16 %v1647
        %v1683 = vunpack.c.h.b16 %v1647
        %v1684 = vunpack.c.l.b16 %v1648
        %v1685 = vunpack.c.h.b16 %v1648
        %v1686 = vunpack.c.l.b16 %v1649
        %v1687 = vunpack.c.h.b16 %v1649
        %v1688 = vunpack.c.l.b16 %v1650
        %v1689 = vunpack.c.h.b16 %v1650
        %v1690 = vunpack.c.l.b16 %v1651
        %v1691 = vunpack.c.h.b16 %v1651
        %v1692 = vpack.c.b16 %v1672, %v1670
        %v1693 = vpack.c.b16 %v1673, %v1671
        %v1694 = vpack.c.b16 %v1676, %v1674
        %v1695 = vpack.c.b16 %v1677, %v1675
        %v1696 = vpack.c.b16 %v1680, %v1678
        %v1697 = vpack.c.b16 %v1681, %v1679
        %v1698 = vpack.c.b16 %v1684, %v1682
        %v1699 = vpack.c.b16 %v1685, %v1683
        %v1700 = vpack.c.b16 %v1688, %v1686
        %v1701 = vpack.c.b16 %v1689, %v1687
        %v1702 = vpack.c.b16 %v1690, %v1690
        %v1703 = vpack.c.b16 %v1691, %v1691
        %vm1714 = vcmask 687104
        %v1716 = vsel %vm1714, %v1658, 0
        %vm1718 = vcmask 1041408
        %v1720 = vsel %vm1718, %v1702, 0
        %v1723 = vsel %vm1718, %v1703, 0
        %1725 = vmatprep.subr.bf16.mxu0 %v1693
        %1726 = vmatpush1.bf16.msra.mxu0 %v1692
        %1727 = vmatprep.subr.bf16.mxu0 %v1695
        %1728 = vmatpush1.bf16.msra.mxu0 %v1694
        %1729 = vmatprep.subr.bf16.mxu0 %v1697
        %1730 = vmatpush1.bf16.msra.mxu0 %v1696
        %1731 = vmatprep.subr.bf16.mxu0 %v1699
        %1732 = vmatpush1.bf16.msra.mxu0 %v1698
        %1733 = vmatprep.subr.bf16.mxu0 %v1701
        %1734 = vmatpush1.bf16.msra.mxu0 %v1700
        %1735 = vmatprep.subr.bf16.mxu0 %v1723
        %1736 = vmatpush1.bf16.msra.mxu0 %v1720
        %1737 = vmatprep.subr.bf16.mxu0 0
        %1738 = vmatpush1.bf16.msra.mxu0 0
        %1739 = vmatprep.subr.bf16.mxu0 0
        %1740 = vmatpush1.bf16.msra.mxu0 0
        %1741 = vmatprep.subr.bf16.mxu0 0
        %1742 = vmatpush1.bf16.msra.mxu0 0
        %1743 = vmatprep.subr.bf16.mxu0 0
        %1744 = vmatpush1.bf16.msra.mxu0 0
        %1745 = vmatprep.subr.bf16.mxu0 0
        %1746 = vmatpush1.bf16.msra.mxu0 0
        %1747 = vmatprep.subr.bf16.mxu0 0
        %1748 = vmatpush1.bf16.msra.mxu0 0
        %1749 = vmatprep.subr.bf16.mxu0 0
        %1750 = vmatpush1.bf16.msra.mxu0 0
        %1751 = vmatprep.subr.bf16.mxu0 0
        %1752 = vmatpush1.bf16.msra.mxu0 0
        %1753 = vmatprep.subr.bf16.mxu0 0
        %1754 = vmatpush1.bf16.msra.mxu0 0
        %1755 = vmatprep.subr.bf16.mxu0 0
        %1756 = vmatpush1.bf16.msra.mxu0 0
        %1757 = vmatprep.mubr.bf16.mxu0 0
        %1758 = vmatmul.mubr.bf16.gmra.mrb[0].mxu0 %v1716
        %v1759 = vpop.f32.mrb[0].mxu0
        %v1760 = vadd.f32 0.0, %v1759
        %v1761 = vpop.f32.mrb[0].mxu0
        %v1762 = vadd.f32 0.0, %v1761
        %v1763 = vpop.f32.mrb[0].mxu0
        %v1764 = vadd.f32 0.0, %v1763
        %v1765 = vpop.f32.mrb[0].mxu0
        %v1766 = vadd.f32 0.0, %v1765
        %1767 = vdwg.mxu0
        %v1779 = vunpack.c.l.b16 %v1629
        %v1780 = vunpack.c.h.b16 %v1629
        %v1781 = vunpack.c.l.b16 %v1630
        %v1782 = vunpack.c.h.b16 %v1630
        %v1783 = vunpack.c.l.b16 %v1631
        %v1784 = vunpack.c.h.b16 %v1631
        %v1785 = vunpack.c.l.b16 %v1632
        %v1786 = vunpack.c.h.b16 %v1632
        %v1787 = vunpack.c.l.b16 %v1633
        %v1788 = vunpack.c.h.b16 %v1633
        %v1789 = vunpack.c.l.b16 %v1634
        %v1790 = vunpack.c.h.b16 %v1634
        %v1791 = vunpack.c.l.b16 %v1635
        %v1792 = vunpack.c.h.b16 %v1635
        %v1793 = vunpack.c.l.b16 %v1636
        %v1794 = vunpack.c.h.b16 %v1636
        %v1795 = vunpack.c.l.b16 %v1637
        %v1796 = vunpack.c.h.b16 %v1637
        %v1797 = vunpack.c.l.b16 %v1638
        %v1798 = vunpack.c.h.b16 %v1638
        %v1799 = vunpack.c.l.b16 %v1639
        %v1800 = vunpack.c.h.b16 %v1639
        %v1801 = vpack.c.b16 %v1781, %v1779
        %v1802 = vpack.c.b16 %v1782, %v1780
        %v1803 = vpack.c.b16 %v1785, %v1783
        %v1804 = vpack.c.b16 %v1786, %v1784
        %v1805 = vpack.c.b16 %v1789, %v1787
        %v1806 = vpack.c.b16 %v1790, %v1788
        %v1807 = vpack.c.b16 %v1793, %v1791
        %v1808 = vpack.c.b16 %v1794, %v1792
        %v1809 = vpack.c.b16 %v1797, %v1795
        %v1810 = vpack.c.b16 %v1798, %v1796
        %v1811 = vpack.c.b16 %v1799, %v1799
        %v1812 = vpack.c.b16 %v1800, %v1800
        %v1823 = vsel %vm1714, %v1628, 0
        %v1826 = vsel %vm1718, %v1811, 0
        %v1829 = vsel %vm1718, %v1812, 0
        %1831 = vmatprep.subr.bf16.mxu0 %v1802
        %1832 = vmatpush1.bf16.msra.mxu0 %v1801
        %1833 = vmatprep.subr.bf16.mxu0 %v1804
        %1834 = vmatpush1.bf16.msra.mxu0 %v1803
        %1835 = vmatprep.subr.bf16.mxu0 %v1806
        %1836 = vmatpush1.bf16.msra.mxu0 %v1805
        %1837 = vmatprep.subr.bf16.mxu0 %v1808
        %1838 = vmatpush1.bf16.msra.mxu0 %v1807
        %1839 = vmatprep.subr.bf16.mxu0 %v1810
        %1840 = vmatpush1.bf16.msra.mxu0 %v1809
        %1841 = vmatprep.subr.bf16.mxu0 %v1829
        %1842 = vmatpush1.bf16.msra.mxu0 %v1826
        %1843 = vmatprep.subr.bf16.mxu0 0
        %1844 = vmatpush1.bf16.msra.mxu0 0
        %1845 = vmatprep.subr.bf16.mxu0 0
        %1846 = vmatpush1.bf16.msra.mxu0 0
        %1847 = vmatprep.subr.bf16.mxu0 0
        %1848 = vmatpush1.bf16.msra.mxu0 0
        %1849 = vmatprep.subr.bf16.mxu0 0
        %1850 = vmatpush1.bf16.msra.mxu0 0
        %1851 = vmatprep.subr.bf16.mxu0 0
        %1852 = vmatpush1.bf16.msra.mxu0 0
        %1853 = vmatprep.subr.bf16.mxu0 0
        %1854 = vmatpush1.bf16.msra.mxu0 0
        %1855 = vmatprep.subr.bf16.mxu0 0
        %1856 = vmatpush1.bf16.msra.mxu0 0
        %1857 = vmatprep.subr.bf16.mxu0 0
        %1858 = vmatpush1.bf16.msra.mxu0 0
        %1859 = vmatprep.subr.bf16.mxu0 0
        %1860 = vmatpush1.bf16.msra.mxu0 0
        %1861 = vmatprep.subr.bf16.mxu0 0
        %1862 = vmatpush1.bf16.msra.mxu0 0
        %1863 = vmatprep.mubr.bf16.mxu0 0
        %1864 = vmatmul.mubr.bf16.gmra.mrb[0].mxu0 %v1823
        %v1865 = vpop.f32.mrb[0].mxu0
        %v1866 = vadd.f32 %v1760, %v1865
        %v1867 = vpop.f32.mrb[0].mxu0
        %v1868 = vadd.f32 %v1762, %v1867
        %v1869 = vpop.f32.mrb[0].mxu0
        %v1870 = vadd.f32 %v1764, %v1869
        %v1871 = vpop.f32.mrb[0].mxu0
        %v1872 = vadd.f32 %v1766, %v1871
        %1873 = vdwg.mxu0
        %s1874 = scalar_lea.vmem %s5, 176
        %v1875 = vld [vmem:[%s1874] sm:$0xff]
        %v1876 = vld [vmem:[%s1874 + $0x8] sm:$0xff]
        %v1877 = vld [vmem:[%s1874 + $0x10] sm:$0xff]
        %v1878 = vld [vmem:[%s1874 + $0x18] sm:$0xff]
        %v1879 = vld [vmem:[%s1874 + $0x20] sm:$0xff]
        %v1880 = vld [vmem:[%s1874 + $0x28] sm:$0xff]
        %v1881 = vld [vmem:[%s1874 + $0x30] sm:$0xff]
        %v1882 = vld [vmem:[%s1874 + $0x38] sm:$0xff]
        %v1883 = vld [vmem:[%s1874 + $0x40] sm:$0xff]
        %v1884 = vld [vmem:[%s1874 + $0x48] sm:$0xff]
        %v1885 = vld [vmem:[%s1874 + $0x50] sm:$0x33]
        %v1887 = vrot.slane %v1628, 1
        %v1899 = vunpack.c.l.b16 %v1875
        %v1900 = vunpack.c.h.b16 %v1875
        %v1901 = vunpack.c.l.b16 %v1876
        %v1902 = vunpack.c.h.b16 %v1876
        %v1903 = vunpack.c.l.b16 %v1877
        %v1904 = vunpack.c.h.b16 %v1877
        %v1905 = vunpack.c.l.b16 %v1878
        %v1906 = vunpack.c.h.b16 %v1878
        %v1907 = vunpack.c.l.b16 %v1879
        %v1908 = vunpack.c.h.b16 %v1879
        %v1909 = vunpack.c.l.b16 %v1880
        %v1910 = vunpack.c.h.b16 %v1880
        %v1911 = vunpack.c.l.b16 %v1881
        %v1912 = vunpack.c.h.b16 %v1881
        %v1913 = vunpack.c.l.b16 %v1882
        %v1914 = vunpack.c.h.b16 %v1882
        %v1915 = vunpack.c.l.b16 %v1883
        %v1916 = vunpack.c.h.b16 %v1883
        %v1917 = vunpack.c.l.b16 %v1884
        %v1918 = vunpack.c.h.b16 %v1884
        %v1919 = vunpack.c.l.b16 %v1885
        %v1920 = vunpack.c.h.b16 %v1885
        %v1921 = vpack.c.b16 %v1901, %v1899
        %v1922 = vpack.c.b16 %v1902, %v1900
        %v1923 = vpack.c.b16 %v1905, %v1903
        %v1924 = vpack.c.b16 %v1906, %v1904
        %v1925 = vpack.c.b16 %v1909, %v1907
        %v1926 = vpack.c.b16 %v1910, %v1908
        %v1927 = vpack.c.b16 %v1913, %v1911
        %v1928 = vpack.c.b16 %v1914, %v1912
        %v1929 = vpack.c.b16 %v1917, %v1915
        %v1930 = vpack.c.b16 %v1918, %v1916
        %v1931 = vpack.c.b16 %v1919, %v1919
        %v1932 = vpack.c.b16 %v1920, %v1920
        %v1944 = vsel %vm1714, %v1887, 0
        %v1947 = vsel %vm1718, %v1931, 0
        %v1950 = vsel %vm1718, %v1932, 0
        %1952 = vmatprep.subr.bf16.mxu0 %v1922
        %1953 = vmatpush1.bf16.msra.mxu0 %v1921
        %1954 = vmatprep.subr.bf16.mxu0 %v1924
        %1955 = vmatpush1.bf16.msra.mxu0 %v1923
        %1956 = vmatprep.subr.bf16.mxu0 %v1926
        %1957 = vmatpush1.bf16.msra.mxu0 %v1925
        %1958 = vmatprep.subr.bf16.mxu0 %v1928
        %1959 = vmatpush1.bf16.msra.mxu0 %v1927
        %1960 = vmatprep.subr.bf16.mxu0 %v1930
        %1961 = vmatpush1.bf16.msra.mxu0 %v1929
        %1962 = vmatprep.subr.bf16.mxu0 %v1950
        %1963 = vmatpush1.bf16.msra.mxu0 %v1947
        %1964 = vmatprep.subr.bf16.mxu0 0
        %1965 = vmatpush1.bf16.msra.mxu0 0
        %1966 = vmatprep.subr.bf16.mxu0 0
        %1967 = vmatpush1.bf16.msra.mxu0 0
        %1968 = vmatprep.subr.bf16.mxu0 0
        %1969 = vmatpush1.bf16.msra.mxu0 0
        %1970 = vmatprep.subr.bf16.mxu0 0
        %1971 = vmatpush1.bf16.msra.mxu0 0
        %1972 = vmatprep.subr.bf16.mxu0 0
        %1973 = vmatpush1.bf16.msra.mxu0 0
        %1974 = vmatprep.subr.bf16.mxu0 0
        %1975 = vmatpush1.bf16.msra.mxu0 0
        %1976 = vmatprep.subr.bf16.mxu0 0
        %1977 = vmatpush1.bf16.msra.mxu0 0
        %1978 = vmatprep.subr.bf16.mxu0 0
        %1979 = vmatpush1.bf16.msra.mxu0 0
        %1980 = vmatprep.subr.bf16.mxu0 0
        %1981 = vmatpush1.bf16.msra.mxu0 0
        %1982 = vmatprep.subr.bf16.mxu0 0
        %1983 = vmatpush1.bf16.msra.mxu0 0
        %1984 = vmatprep.mubr.bf16.mxu0 0
        %1985 = vmatmul.mubr.bf16.gmra.mrb[0].mxu0 %v1944
        %v1986 = vpop.f32.mrb[0].mxu0
        %v1987 = vadd.f32 0.0, %v1986
        %v1988 = vpop.f32.mrb[0].mxu0
        %v1989 = vadd.f32 0.0, %v1988
        %v1990 = vpop.f32.mrb[0].mxu0
        %v1991 = vadd.f32 0.0, %v1990
        %v1992 = vpop.f32.mrb[0].mxu0
        %v1993 = vadd.f32 0.0, %v1992
        %1994 = vdwg.mxu0
        %v1995 = vadd.f32 %v1866, %v1987
        %v1996 = vadd.f32 %v1868, %v1989
        %v1997 = vadd.f32 %v1870, %v1991
        %v1998 = vadd.f32 %v1872, %v1993
        %s1999 = scalar_lea.vmem %s5, 264
        %v2000 = vld [vmem:[%s1999] sm:$0xff]
        %v2001 = vld [vmem:[%s1999 + $0x8] sm:$0xff]
        %v2002 = vld [vmem:[%s1999 + $0x10] sm:$0xff]
        %v2003 = vld [vmem:[%s1999 + $0x18] sm:$0xff]
        %v2004 = vld [vmem:[%s1999 + $0x20] sm:$0xff]
        %v2005 = vld [vmem:[%s1999 + $0x28] sm:$0xff]
        %v2006 = vld [vmem:[%s1999 + $0x30] sm:$0xff]
        %v2007 = vld [vmem:[%s1999 + $0x38] sm:$0xff]
        %v2008 = vld [vmem:[%s1999 + $0x40] sm:$0xff]
        %v2009 = vld [vmem:[%s1999 + $0x48] sm:$0xff]
        %v2010 = vld [vmem:[%s1999 + $0x50] sm:$0x33]
        %v2011 = vrot.slane %v1653, 1
        %v2012 = vrot.slane %v1655, 2
        %v2013 = vor.u32 %v2011, %v2012
        %v2025 = vunpack.c.l.b16 %v2000
        %v2026 = vunpack.c.h.b16 %v2000
        %v2027 = vunpack.c.l.b16 %v2001
        %v2028 = vunpack.c.h.b16 %v2001
        %v2029 = vunpack.c.l.b16 %v2002
        %v2030 = vunpack.c.h.b16 %v2002
        %v2031 = vunpack.c.l.b16 %v2003
        %v2032 = vunpack.c.h.b16 %v2003
        %v2033 = vunpack.c.l.b16 %v2004
        %v2034 = vunpack.c.h.b16 %v2004
        %v2035 = vunpack.c.l.b16 %v2005
        %v2036 = vunpack.c.h.b16 %v2005
        %v2037 = vunpack.c.l.b16 %v2006
        %v2038 = vunpack.c.h.b16 %v2006
        %v2039 = vunpack.c.l.b16 %v2007
        %v2040 = vunpack.c.h.b16 %v2007
        %v2041 = vunpack.c.l.b16 %v2008
        %v2042 = vunpack.c.h.b16 %v2008
        %v2043 = vunpack.c.l.b16 %v2009
        %v2044 = vunpack.c.h.b16 %v2009
        %v2045 = vunpack.c.l.b16 %v2010
        %v2046 = vunpack.c.h.b16 %v2010
        %v2047 = vpack.c.b16 %v2027, %v2025
        %v2048 = vpack.c.b16 %v2028, %v2026
        %v2049 = vpack.c.b16 %v2031, %v2029
        %v2050 = vpack.c.b16 %v2032, %v2030
        %v2051 = vpack.c.b16 %v2035, %v2033
        %v2052 = vpack.c.b16 %v2036, %v2034
        %v2053 = vpack.c.b16 %v2039, %v2037
        %v2054 = vpack.c.b16 %v2040, %v2038
        %v2055 = vpack.c.b16 %v2043, %v2041
        %v2056 = vpack.c.b16 %v2044, %v2042
        %v2057 = vpack.c.b16 %v2045, %v2045
        %v2058 = vpack.c.b16 %v2046, %v2046
        %v2070 = vsel %vm1714, %v2013, 0
        %v2073 = vsel %vm1718, %v2057, 0
        %v2076 = vsel %vm1718, %v2058, 0
        %2078 = vmatprep.subr.bf16.mxu0 %v2048
        %2079 = vmatpush1.bf16.msra.mxu0 %v2047
        %2080 = vmatprep.subr.bf16.mxu0 %v2050
        %2081 = vmatpush1.bf16.msra.mxu0 %v2049
        %2082 = vmatprep.subr.bf16.mxu0 %v2052
        %2083 = vmatpush1.bf16.msra.mxu0 %v2051
        %2084 = vmatprep.subr.bf16.mxu0 %v2054
        %2085 = vmatpush1.bf16.msra.mxu0 %v2053
        %2086 = vmatprep.subr.bf16.mxu0 %v2056
        %2087 = vmatpush1.bf16.msra.mxu0 %v2055
        %2088 = vmatprep.subr.bf16.mxu0 %v2076
        %2089 = vmatpush1.bf16.msra.mxu0 %v2073
        %2090 = vmatprep.subr.bf16.mxu0 0
        %2091 = vmatpush1.bf16.msra.mxu0 0
        %2092 = vmatprep.subr.bf16.mxu0 0
        %2093 = vmatpush1.bf16.msra.mxu0 0
        %2094 = vmatprep.subr.bf16.mxu0 0
        %2095 = vmatpush1.bf16.msra.mxu0 0
        %2096 = vmatprep.subr.bf16.mxu0 0
        %2097 = vmatpush1.bf16.msra.mxu0 0
        %2098 = vmatprep.subr.bf16.mxu0 0
        %2099 = vmatpush1.bf16.msra.mxu0 0
        %2100 = vmatprep.subr.bf16.mxu0 0
        %2101 = vmatpush1.bf16.msra.mxu0 0
        %2102 = vmatprep.subr.bf16.mxu0 0
        %2103 = vmatpush1.bf16.msra.mxu0 0
        %2104 = vmatprep.subr.bf16.mxu0 0
        %2105 = vmatpush1.bf16.msra.mxu0 0
        %2106 = vmatprep.subr.bf16.mxu0 0
        %2107 = vmatpush1.bf16.msra.mxu0 0
        %2108 = vmatprep.subr.bf16.mxu0 0
        %2109 = vmatpush1.bf16.msra.mxu0 0
        %2110 = vmatprep.mubr.bf16.mxu0 0
        %2111 = vmatmul.mubr.bf16.gmra.mrb[0].mxu0 %v2070
        %v2112 = vpop.f32.mrb[0].mxu0
        %v2113 = vadd.f32 0.0, %v2112
        %v2114 = vpop.f32.mrb[0].mxu0
        %v2115 = vadd.f32 0.0, %v2114
        %v2116 = vpop.f32.mrb[0].mxu0
        %v2117 = vadd.f32 0.0, %v2116
        %v2118 = vpop.f32.mrb[0].mxu0
        %v2119 = vadd.f32 0.0, %v2118
        %2120 = vdwg.mxu0
        %v2121 = vadd.f32 %v1995, %v2113
        %v2122 = vadd.f32 %v1996, %v2115
        %v2123 = vadd.f32 %v1997, %v2117
        %v2124 = vadd.f32 %v1998, %v2119
        %s2125 = scalar_lea.vmem %s5, 352
        %v2126 = vld [vmem:[%s2125] sm:$0xff]
        %v2127 = vld [vmem:[%s2125 + $0x8] sm:$0xff]
        %v2128 = vld [vmem:[%s2125 + $0x10] sm:$0xff]
        %v2129 = vld [vmem:[%s2125 + $0x18] sm:$0xff]
        %v2130 = vld [vmem:[%s2125 + $0x20] sm:$0xff]
        %v2131 = vld [vmem:[%s2125 + $0x28] sm:$0xff]
        %v2132 = vld [vmem:[%s2125 + $0x30] sm:$0xff]
        %v2133 = vld [vmem:[%s2125 + $0x38] sm:$0xff]
        %v2134 = vld [vmem:[%s2125 + $0x40] sm:$0xff]
        %v2135 = vld [vmem:[%s2125 + $0x48] sm:$0xff]
        %v2136 = vld [vmem:[%s2125 + $0x50] sm:$0x33]
        %v2137 = vrot.slane %v1628, 2
        %v2149 = vunpack.c.l.b16 %v2126
        %v2150 = vunpack.c.h.b16 %v2126
        %v2151 = vunpack.c.l.b16 %v2127
        %v2152 = vunpack.c.h.b16 %v2127
        %v2153 = vunpack.c.l.b16 %v2128
        %v2154 = vunpack.c.h.b16 %v2128
        %v2155 = vunpack.c.l.b16 %v2129
        %v2156 = vunpack.c.h.b16 %v2129
        %v2157 = vunpack.c.l.b16 %v2130
        %v2158 = vunpack.c.h.b16 %v2130
        %v2159 = vunpack.c.l.b16 %v2131
        %v2160 = vunpack.c.h.b16 %v2131
        %v2161 = vunpack.c.l.b16 %v2132
        %v2162 = vunpack.c.h.b16 %v2132
        %v2163 = vunpack.c.l.b16 %v2133
        %v2164 = vunpack.c.h.b16 %v2133
        %v2165 = vunpack.c.l.b16 %v2134
        %v2166 = vunpack.c.h.b16 %v2134
        %v2167 = vunpack.c.l.b16 %v2135
        %v2168 = vunpack.c.h.b16 %v2135
        %v2169 = vunpack.c.l.b16 %v2136
        %v2170 = vunpack.c.h.b16 %v2136
        %v2171 = vpack.c.b16 %v2151, %v2149
        %v2172 = vpack.c.b16 %v2152, %v2150
        %v2173 = vpack.c.b16 %v2155, %v2153
        %v2174 = vpack.c.b16 %v2156, %v2154
        %v2175 = vpack.c.b16 %v2159, %v2157
        %v2176 = vpack.c.b16 %v2160, %v2158
        %v2177 = vpack.c.b16 %v2163, %v2161
        %v2178 = vpack.c.b16 %v2164, %v2162
        %v2179 = vpack.c.b16 %v2167, %v2165
        %v2180 = vpack.c.b16 %v2168, %v2166
        %v2181 = vpack.c.b16 %v2169, %v2169
        %v2182 = vpack.c.b16 %v2170, %v2170
        %v2194 = vsel %vm1714, %v2137, 0
        %v2197 = vsel %vm1718, %v2181, 0
        %v2200 = vsel %vm1718, %v2182, 0
        %2202 = vmatprep.subr.bf16.mxu0 %v2172
        %2203 = vmatpush1.bf16.msra.mxu0 %v2171
        %2204 = vmatprep.subr.bf16.mxu0 %v2174
        %2205 = vmatpush1.bf16.msra.mxu0 %v2173
        %2206 = vmatprep.subr.bf16.mxu0 %v2176
        %2207 = vmatpush1.bf16.msra.mxu0 %v2175
        %2208 = vmatprep.subr.bf16.mxu0 %v2178
        %2209 = vmatpush1.bf16.msra.mxu0 %v2177
        %2210 = vmatprep.subr.bf16.mxu0 %v2180
        %2211 = vmatpush1.bf16.msra.mxu0 %v2179
        %2212 = vmatprep.subr.bf16.mxu0 %v2200
        %2213 = vmatpush1.bf16.msra.mxu0 %v2197
        %2214 = vmatprep.subr.bf16.mxu0 0
        %2215 = vmatpush1.bf16.msra.mxu0 0
        %2216 = vmatprep.subr.bf16.mxu0 0
        %2217 = vmatpush1.bf16.msra.mxu0 0
        %2218 = vmatprep.subr.bf16.mxu0 0
        %2219 = vmatpush1.bf16.msra.mxu0 0
        %2220 = vmatprep.subr.bf16.mxu0 0
        %2221 = vmatpush1.bf16.msra.mxu0 0
        %2222 = vmatprep.subr.bf16.mxu0 0
        %2223 = vmatpush1.bf16.msra.mxu0 0
        %2224 = vmatprep.subr.bf16.mxu0 0
        %2225 = vmatpush1.bf16.msra.mxu0 0
        %2226 = vmatprep.subr.bf16.mxu0 0
        %2227 = vmatpush1.bf16.msra.mxu0 0
        %2228 = vmatprep.subr.bf16.mxu0 0
        %2229 = vmatpush1.bf16.msra.mxu0 0
        %2230 = vmatprep.subr.bf16.mxu0 0
        %2231 = vmatpush1.bf16.msra.mxu0 0
        %2232 = vmatprep.subr.bf16.mxu0 0
        %2233 = vmatpush1.bf16.msra.mxu0 0
        %2234 = vmatprep.mubr.bf16.mxu0 0
        %2235 = vmatmul.mubr.bf16.gmra.mrb[0].mxu0 %v2194
        %v2236 = vpop.f32.mrb[0].mxu0
        %v2237 = vadd.f32 0.0, %v2236
        %v2238 = vpop.f32.mrb[0].mxu0
        %v2239 = vadd.f32 0.0, %v2238
        %v2240 = vpop.f32.mrb[0].mxu0
        %v2241 = vadd.f32 0.0, %v2240
        %v2242 = vpop.f32.mrb[0].mxu0
        %v2243 = vadd.f32 0.0, %v2242
        %2244 = vdwg.mxu0
        %v2245 = vadd.f32 %v2121, %v2237
        %v2246 = vadd.f32 %v2122, %v2239
        %v2247 = vadd.f32 %v2123, %v2241
        %v2248 = vadd.f32 %v2124, %v2243
        %v2249 = vld [vmem:[%s6] sm:$0x3]
        %v2251 = vlaneseq
        %v2252 = vshrl.u32 %v2251, 7
        %v2253 = vsub.s32 0, %v2252
        %v2254 = vrot.slane %v2249, %v2253
        %v2255 = vlaneseq
        %v2256 = vshrl.u32 %v2255, 7
        %v2257 = vsub.s32 1, %v2256
        %v2258 = vrot.slane %v2249, %v2257
        %v2261 = vadd.f32 %v2245, %v2254
        %v2262 = vadd.f32 %v2246, %v2258
        %v2263 = vadd.f32 %v2247, %v2254
        %v2264 = vadd.f32 %v2248, %v2258
        %v2265 = vmax.f32 %v2261, 0.0
        %v2266 = vmax.f32 %v2262, 0.0
        %v2267 = vmax.f32 %v2263, 0.0
        %v2268 = vmax.f32 %v2264, 0.0
        %v2269 = vld [vmem:[%s7] sm:$0x1f]
        %vm2270 = vcmask 80896
        %v2272 = vsel %vm2270, %v2269, 0
        %v2275 = vsel %vm1718, %v2267, 0
        %v2278 = vsel %vm1718, %v2268, 0
        %2280 = vmatprep.subr.mxu0 %v2266
        %2281 = vmatpush1.msra.mxu0 %v2265
        %2282 = vmatprep.subr.mxu0 %v2278
        %2283 = vmatpush1.msra.mxu0 %v2275
        %2284 = vmatprep.subr.mxu0 0.0
        %2285 = vmatpush1.msra.mxu0 0.0
        %2286 = vmatprep.subr.mxu0 0.0
        %2287 = vmatpush1.msra.mxu0 0.0
        %2288 = vmatprep.subr.mxu0 0.0
        %2289 = vmatpush1.msra.mxu0 0.0
        %2290 = vmatprep.subr.mxu0 0.0
        %2291 = vmatpush1.msra.mxu0 0.0
        %2292 = vmatprep.subr.mxu0 0.0
        %2293 = vmatpush1.msra.mxu0 0.0
        %2294 = vmatprep.subr.mxu0 0.0
        %2295 = vmatpush1.msra.mxu0 0.0
        %2296 = vmatprep.subr.mxu0 0.0
        %2297 = vmatpush1.msra.mxu0 0.0
        %2298 = vmatprep.subr.mxu0 0.0
        %2299 = vmatpush1.msra.mxu0 0.0
        %2300 = vmatprep.subr.mxu0 0.0
        %2301 = vmatpush1.msra.mxu0 0.0
        %2302 = vmatprep.subr.mxu0 0.0
        %2303 = vmatpush1.msra.mxu0 0.0
        %2304 = vmatprep.subr.mxu0 0.0
        %2305 = vmatpush1.msra.mxu0 0.0
        %2306 = vmatprep.subr.mxu0 0.0
        %2307 = vmatpush1.msra.mxu0 0.0
        %2308 = vmatprep.subr.mxu0 0.0
        %2309 = vmatpush1.msra.mxu0 0.0
        %2310 = vmatprep.subr.mxu0 0.0
        %2311 = vmatpush1.msra.mxu0 0.0
        %2312 = vmatprep.subr.mxu0 0.0
        %2313 = vmatpush1.msra.mxu0 0.0
        %2314 = vmatprep.subr.mxu0 0.0
        %2315 = vmatpush1.msra.mxu0 0.0
        %2316 = vmatprep.subr.mxu0 0.0
        %2317 = vmatpush1.msra.mxu0 0.0
        %2318 = vmatprep.subr.mxu0 0.0
        %2319 = vmatpush1.msra.mxu0 0.0
        %2320 = vmatprep.subr.mxu0 0.0
        %2321 = vmatpush1.msra.mxu0 0.0
        %2322 = vmatprep.subr.mxu0 0.0
        %2323 = vmatpush1.msra.mxu0 0.0
        %2324 = vmatprep.subr.mxu0 0.0
        %2325 = vmatpush1.msra.mxu0 0.0
        %2326 = vmatprep.subr.mxu0 0.0
        %2327 = vmatpush1.msra.mxu0 0.0
        %2328 = vmatprep.subr.mxu0 0.0
        %2329 = vmatpush1.msra.mxu0 0.0
        %2330 = vmatprep.subr.mxu0 0.0
        %2331 = vmatpush1.msra.mxu0 0.0
        %2332 = vmatprep.subr.mxu0 0.0
        %2333 = vmatpush1.msra.mxu0 0.0
        %2334 = vmatprep.subr.mxu0 0.0
        %2335 = vmatpush1.msra.mxu0 0.0
        %2336 = vmatprep.subr.mxu0 0.0
        %2337 = vmatpush1.msra.mxu0 0.0
        %2338 = vmatprep.subr.mxu0 0.0
        %2339 = vmatpush1.msra.mxu0 0.0
        %2340 = vmatprep.subr.mxu0 0.0
        %2341 = vmatpush1.msra.mxu0 0.0
        %2342 = vmatprep.subr.mxu0 0.0
        %2343 = vmatpush1.msra.mxu0 0.0
        %2344 = vmatprep.mubr.f32.mxu0 0.0
        %2345 = vmatmul.mubr.f32.gmra.mrb[0].mxu0 %v2272
        %v2346 = vpop.f32.mrb[0].mxu0
        %v2347 = vadd.f32 0.0, %v2346
        %v2348 = vpop.f32.mrb[0].mxu0
        %v2349 = vadd.f32 0.0, %v2348
        %2350 = vdwg.mxu0
        %s2351 = scalar_lea.vmem %s7, 8
        %v2352 = vld [vmem:[%s2351] sm:$0x1f]
        %v2354 = vsel %vm2270, %v2352, 0
        %2356 = vmatprep.subr.mxu0 %v2266
        %2357 = vmatpush1.msra.mxu0 %v2265
        %2358 = vmatprep.subr.mxu0 %v2278
        %2359 = vmatpush1.msra.mxu0 %v2275
        %2360 = vmatprep.subr.mxu0 0.0
        %2361 = vmatpush1.msra.mxu0 0.0
        %2362 = vmatprep.subr.mxu0 0.0
        %2363 = vmatpush1.msra.mxu0 0.0
        %2364 = vmatprep.subr.mxu0 0.0
        %2365 = vmatpush1.msra.mxu0 0.0
        %2366 = vmatprep.subr.mxu0 0.0
        %2367 = vmatpush1.msra.mxu0 0.0
        %2368 = vmatprep.subr.mxu0 0.0
        %2369 = vmatpush1.msra.mxu0 0.0
        %2370 = vmatprep.subr.mxu0 0.0
        %2371 = vmatpush1.msra.mxu0 0.0
        %2372 = vmatprep.subr.mxu0 0.0
        %2373 = vmatpush1.msra.mxu0 0.0
        %2374 = vmatprep.subr.mxu0 0.0
        %2375 = vmatpush1.msra.mxu0 0.0
        %2376 = vmatprep.subr.mxu0 0.0
        %2377 = vmatpush1.msra.mxu0 0.0
        %2378 = vmatprep.subr.mxu0 0.0
        %2379 = vmatpush1.msra.mxu0 0.0
        %2380 = vmatprep.subr.mxu0 0.0
        %2381 = vmatpush1.msra.mxu0 0.0
        %2382 = vmatprep.subr.mxu0 0.0
        %2383 = vmatpush1.msra.mxu0 0.0
        %2384 = vmatprep.subr.mxu0 0.0
        %2385 = vmatpush1.msra.mxu0 0.0
        %2386 = vmatprep.subr.mxu0 0.0
        %2387 = vmatpush1.msra.mxu0 0.0
        %2388 = vmatprep.subr.mxu0 0.0
        %2389 = vmatpush1.msra.mxu0 0.0
        %2390 = vmatprep.subr.mxu0 0.0
        %2391 = vmatpush1.msra.mxu0 0.0
        %2392 = vmatprep.subr.mxu0 0.0
        %2393 = vmatpush1.msra.mxu0 0.0
        %2394 = vmatprep.subr.mxu0 0.0
        %2395 = vmatpush1.msra.mxu0 0.0
        %2396 = vmatprep.subr.mxu0 0.0
        %2397 = vmatpush1.msra.mxu0 0.0
        %2398 = vmatprep.subr.mxu0 0.0
        %2399 = vmatpush1.msra.mxu0 0.0
        %2400 = vmatprep.subr.mxu0 0.0
        %2401 = vmatpush1.msra.mxu0 0.0
        %2402 = vmatprep.subr.mxu0 0.0
        %2403 = vmatpush1.msra.mxu0 0.0
        %2404 = vmatprep.subr.mxu0 0.0
        %2405 = vmatpush1.msra.mxu0 0.0
        %2406 = vmatprep.subr.mxu0 0.0
        %2407 = vmatpush1.msra.mxu0 0.0
        %2408 = vmatprep.subr.mxu0 0.0
        %2409 = vmatpush1.msra.mxu0 0.0
        %2410 = vmatprep.subr.mxu0 0.0
        %2411 = vmatpush1.msra.mxu0 0.0
        %2412 = vmatprep.subr.mxu0 0.0
        %2413 = vmatpush1.msra.mxu0 0.0
        %2414 = vmatprep.subr.mxu0 0.0
        %2415 = vmatpush1.msra.mxu0 0.0
        %2416 = vmatprep.subr.mxu0 0.0
        %2417 = vmatpush1.msra.mxu0 0.0
        %2418 = vmatprep.subr.mxu0 0.0
        %2419 = vmatpush1.msra.mxu0 0.0
        %2420 = vmatprep.mubr.f32.mxu0 0.0
        %2421 = vmatmul.mubr.f32.gmra.mrb[0].mxu0 %v2354
        %v2422 = vpop.f32.mrb[0].mxu0
        %v2423 = vadd.f32 0.0, %v2422
        %v2424 = vpop.f32.mrb[0].mxu0
        %v2425 = vadd.f32 0.0, %v2424
        %2426 = vdwg.mxu0
        %v2427 = vmax.f32 %v2347, %v2423
        %v2428 = vmax.f32 %v2349, %v2425
        %v2429 = vld [vmem:[%s8] sm:$0xff]
        %v2430 = vld [vmem:[%s8 + $0x8] sm:$0xff]
        %v2431 = vld [vmem:[%s8 + $0x10] sm:$0xff]
        %v2432 = vld [vmem:[%s8 + $0x18] sm:$0xff]
        %v2433 = vld [vmem:[%s8 + $0x20] sm:$0xff]
        %v2434 = vld [vmem:[%s8 + $0x28] sm:$0xff]
        %v2435 = vld [vmem:[%s8 + $0x30] sm:$0xff]
        %v2436 = vld [vmem:[%s8 + $0x38] sm:$0xff]
        %v2437 = vld [vmem:[%s8 + $0x40] sm:$0xff]
        %v2438 = vld [vmem:[%s8 + $0x48] sm:$0xff]
        %v2439 = vld [vmem:[%s8 + $0x50] sm:$0xff]
        %v2440 = vld [vmem:[%s8 + $0x58] sm:$0xff]
        %v2441 = vld [vmem:[%s8 + $0x60] sm:$0xff]
        %v2442 = vld [vmem:[%s8 + $0x68] sm:$0xff]
        %v2443 = vld [vmem:[%s8 + $0x70] sm:$0xff]
        %v2444 = vld [vmem:[%s8 + $0x78] sm:$0xff]
        %v2445 = vld [vmem:[%s8 + $0x80] sm:$0xff]
        %v2446 = vld [vmem:[%s8 + $0x88] sm:$0xff]
        %v2447 = vld [vmem:[%s8 + $0x90] sm:$0xff]
        %v2448 = vld [vmem:[%s8 + $0x98] sm:$0xff]
        %vm2449 = vcmask 261120
        %v2451 = vsel %vm2449, %v2428, 0
        %2453 = vmatprep.subr.mxu0 0.0
        %2454 = vmatpush1.msra.mxu0 %v2429
        %2455 = vmatprep.subr.mxu0 0.0
        %2456 = vmatpush1.msra.mxu0 %v2430
        %2457 = vmatprep.subr.mxu0 0.0
        %2458 = vmatpush1.msra.mxu0 %v2431
        %2459 = vmatprep.subr.mxu0 0.0
        %2460 = vmatpush1.msra.mxu0 %v2432
        %2461 = vmatprep.subr.mxu0 0.0
        %2462 = vmatpush1.msra.mxu0 %v2433
        %2463 = vmatprep.subr.mxu0 0.0
        %2464 = vmatpush1.msra.mxu0 %v2434
        %2465 = vmatprep.subr.mxu0 0.0
        %2466 = vmatpush1.msra.mxu0 %v2435
        %2467 = vmatprep.subr.mxu0 0.0
        %2468 = vmatpush1.msra.mxu0 %v2436
        %2469 = vmatprep.subr.mxu0 0.0
        %2470 = vmatpush1.msra.mxu0 %v2437
        %2471 = vmatprep.subr.mxu0 0.0
        %2472 = vmatpush1.msra.mxu0 %v2438
        %2473 = vmatprep.subr.mxu0 0.0
        %2474 = vmatpush1.msra.mxu0 %v2439
        %2475 = vmatprep.subr.mxu0 0.0
        %2476 = vmatpush1.msra.mxu0 %v2440
        %2477 = vmatprep.subr.mxu0 0.0
        %2478 = vmatpush1.msra.mxu0 %v2441
        %2479 = vmatprep.subr.mxu0 0.0
        %2480 = vmatpush1.msra.mxu0 %v2442
        %2481 = vmatprep.subr.mxu0 0.0
        %2482 = vmatpush1.msra.mxu0 %v2443
        %2483 = vmatprep.subr.mxu0 0.0
        %2484 = vmatpush1.msra.mxu0 %v2444
        %2485 = vmatprep.subr.mxu0 0.0
        %2486 = vmatpush1.msra.mxu0 %v2445
        %2487 = vmatprep.subr.mxu0 0.0
        %2488 = vmatpush1.msra.mxu0 %v2446
        %2489 = vmatprep.subr.mxu0 0.0
        %2490 = vmatpush1.msra.mxu0 %v2447
        %2491 = vmatprep.subr.mxu0 0.0
        %2492 = vmatpush1.msra.mxu0 %v2448
        %2493 = vmatprep.subr.mxu0 0.0
        %2494 = vmatpush1.msra.mxu0 0.0
        %2495 = vmatprep.subr.mxu0 0.0
        %2496 = vmatpush1.msra.mxu0 0.0
        %2497 = vmatprep.subr.mxu0 0.0
        %2498 = vmatpush1.msra.mxu0 0.0
        %2499 = vmatprep.subr.mxu0 0.0
        %2500 = vmatpush1.msra.mxu0 0.0
        %2501 = vmatprep.subr.mxu0 0.0
        %2502 = vmatpush1.msra.mxu0 0.0
        %2503 = vmatprep.subr.mxu0 0.0
        %2504 = vmatpush1.msra.mxu0 0.0
        %2505 = vmatprep.subr.mxu0 0.0
        %2506 = vmatpush1.msra.mxu0 0.0
        %2507 = vmatprep.subr.mxu0 0.0
        %2508 = vmatpush1.msra.mxu0 0.0
        %2509 = vmatprep.subr.mxu0 0.0
        %2510 = vmatpush1.msra.mxu0 0.0
        %2511 = vmatprep.subr.mxu0 0.0
        %2512 = vmatpush1.msra.mxu0 0.0
        %2513 = vmatprep.subr.mxu0 0.0
        %2514 = vmatpush1.msra.mxu0 0.0
        %2515 = vmatprep.subr.mxu0 0.0
        %2516 = vmatpush1.msra.mxu0 0.0
        %2517 = vmatprep.mubr.f32.mxu0 %v2451
        %2518 = vmatmul.mubr.f32.gmra.mrb[0].mxu0 %v2427
        %v2519 = vpop.f32.mrb[0].mxu0
        %v2520 = vadd.f32 0.0, %v2519
        %v2521 = vpop.f32.mrb[0].mxu0
        %2522 = vdwg.mxu0
        %s2523 = scalar_lea.vmem %s8, 160
        %v2524 = vld [vmem:[%s2523] sm:$0xff]
        %v2525 = vld [vmem:[%s2523 + $0x8] sm:$0xff]
        %v2526 = vld [vmem:[%s2523 + $0x10] sm:$0xff]
        %v2527 = vld [vmem:[%s2523 + $0x18] sm:$0xff]
        %v2528 = vld [vmem:[%s2523 + $0x20] sm:$0xff]
        %v2529 = vld [vmem:[%s2523 + $0x28] sm:$0xff]
        %v2530 = vld [vmem:[%s2523 + $0x30] sm:$0xff]
        %v2531 = vld [vmem:[%s2523 + $0x38] sm:$0xff]
        %v2532 = vld [vmem:[%s2523 + $0x40] sm:$0xff]
        %v2533 = vld [vmem:[%s2523 + $0x48] sm:$0xff]
        %v2534 = vld [vmem:[%s2523 + $0x50] sm:$0xff]
        %v2535 = vld [vmem:[%s2523 + $0x58] sm:$0xff]
        %v2536 = vld [vmem:[%s2523 + $0x60] sm:$0xff]
        %v2537 = vld [vmem:[%s2523 + $0x68] sm:$0xff]
        %v2538 = vld [vmem:[%s2523 + $0x70] sm:$0xff]
        %v2539 = vld [vmem:[%s2523 + $0x78] sm:$0xff]
        %v2540 = vld [vmem:[%s2523 + $0x80] sm:$0xff]
        %v2541 = vld [vmem:[%s2523 + $0x88] sm:$0xff]
        %v2542 = vld [vmem:[%s2523 + $0x90] sm:$0xff]
        %v2543 = vld [vmem:[%s2523 + $0x98] sm:$0xff]
        %2544 = vmatprep.subr.mxu0 0.0
        %2545 = vmatpush1.msra.mxu0 %v2524
        %2546 = vmatprep.subr.mxu0 0.0
        %2547 = vmatpush1.msra.mxu0 %v2525
        %2548 = vmatprep.subr.mxu0 0.0
        %2549 = vmatpush1.msra.mxu0 %v2526
        %2550 = vmatprep.subr.mxu0 0.0
        %2551 = vmatpush1.msra.mxu0 %v2527
        %2552 = vmatprep.subr.mxu0 0.0
        %2553 = vmatpush1.msra.mxu0 %v2528
        %2554 = vmatprep.subr.mxu0 0.0
        %2555 = vmatpush1.msra.mxu0 %v2529
        %2556 = vmatprep.subr.mxu0 0.0
        %2557 = vmatpush1.msra.mxu0 %v2530
        %2558 = vmatprep.subr.mxu0 0.0
        %2559 = vmatpush1.msra.mxu0 %v2531
        %2560 = vmatprep.subr.mxu0 0.0
        %2561 = vmatpush1.msra.mxu0 %v2532
        %2562 = vmatprep.subr.mxu0 0.0
        %2563 = vmatpush1.msra.mxu0 %v2533
        %2564 = vmatprep.subr.mxu0 0.0
        %2565 = vmatpush1.msra.mxu0 %v2534
        %2566 = vmatprep.subr.mxu0 0.0
        %2567 = vmatpush1.msra.mxu0 %v2535
        %2568 = vmatprep.subr.mxu0 0.0
        %2569 = vmatpush1.msra.mxu0 %v2536
        %2570 = vmatprep.subr.mxu0 0.0
        %2571 = vmatpush1.msra.mxu0 %v2537
        %2572 = vmatprep.subr.mxu0 0.0
        %2573 = vmatpush1.msra.mxu0 %v2538
        %2574 = vmatprep.subr.mxu0 0.0
        %2575 = vmatpush1.msra.mxu0 %v2539
        %2576 = vmatprep.subr.mxu0 0.0
        %2577 = vmatpush1.msra.mxu0 %v2540
        %2578 = vmatprep.subr.mxu0 0.0
        %2579 = vmatpush1.msra.mxu0 %v2541
        %2580 = vmatprep.subr.mxu0 0.0
        %2581 = vmatpush1.msra.mxu0 %v2542
        %2582 = vmatprep.subr.mxu0 0.0
        %2583 = vmatpush1.msra.mxu0 %v2543
        %2584 = vmatprep.subr.mxu0 0.0
        %2585 = vmatpush1.msra.mxu0 0.0
        %2586 = vmatprep.subr.mxu0 0.0
        %2587 = vmatpush1.msra.mxu0 0.0
        %2588 = vmatprep.subr.mxu0 0.0
        %2589 = vmatpush1.msra.mxu0 0.0
        %2590 = vmatprep.subr.mxu0 0.0
        %2591 = vmatpush1.msra.mxu0 0.0
        %2592 = vmatprep.subr.mxu0 0.0
        %2593 = vmatpush1.msra.mxu0 0.0
        %2594 = vmatprep.subr.mxu0 0.0
        %2595 = vmatpush1.msra.mxu0 0.0
        %2596 = vmatprep.subr.mxu0 0.0
        %2597 = vmatpush1.msra.mxu0 0.0
        %2598 = vmatprep.subr.mxu0 0.0
        %2599 = vmatpush1.msra.mxu0 0.0
        %2600 = vmatprep.subr.mxu0 0.0
        %2601 = vmatpush1.msra.mxu0 0.0
        %2602 = vmatprep.subr.mxu0 0.0
        %2603 = vmatpush1.msra.mxu0 0.0
        %2604 = vmatprep.subr.mxu0 0.0
        %2605 = vmatpush1.msra.mxu0 0.0
        %2606 = vmatprep.subr.mxu0 0.0
        %2607 = vmatpush1.msra.mxu0 0.0
        %2608 = vmatprep.mubr.f32.mxu0 %v2451
        %2609 = vmatmul.mubr.f32.gmra.mrb[0].mxu0 %v2427
        %v2610 = vpop.f32.mrb[0].mxu0
        %v2611 = vadd.f32 0.0, %v2610
        %v2612 = vpop.f32.mrb[0].mxu0
        %2613 = vdwg.mxu0
        %v2614 = vmax.f32 %v2520, %v2611
        %v2615 = vpack.c.bf16 %v2614, %v2614
        %v2616 = vld [vmem:[%s9] sm:$0xf]
        %v2617 = vld [vmem:[%s9 + $0x4] sm:$0xf]
        %v2618 = vld [vmem:[%s9 + $0x8] sm:$0xf]
        %v2619 = vld [vmem:[%s9 + $0xc] sm:$0xf]
        %v2620 = vld [vmem:[%s9 + $0x10] sm:$0xf]
        %v2621 = vld [vmem:[%s9 + $0x14] sm:$0xf]
        %v2622 = vld [vmem:[%s9 + $0x18] sm:$0xf]
        %v2623 = vld [vmem:[%s9 + $0x1c] sm:$0xf]
        %v2624 = vld [vmem:[%s9 + $0x20] sm:$0xf]
        %v2625 = vld [vmem:[%s9 + $0x24] sm:$0xf]
        %s2626 = scalar_lea.vmem %s9, 40
        %v2627 = vld [vmem:[%s2626] sm:$0xf]
        %v2628 = vld [vmem:[%s2626 + $0x4] sm:$0xf]
        %v2629 = vld [vmem:[%s2626 + $0x8] sm:$0xf]
        %v2630 = vld [vmem:[%s2626 + $0xc] sm:$0xf]
        %v2631 = vld [vmem:[%s2626 + $0x10] sm:$0xf]
        %v2632 = vld [vmem:[%s2626 + $0x14] sm:$0xf]
        %v2633 = vld [vmem:[%s2626 + $0x18] sm:$0xf]
        %v2634 = vld [vmem:[%s2626 + $0x1c] sm:$0xf]
        %v2635 = vld [vmem:[%s2626 + $0x20] sm:$0xf]
        %v2636 = vld [vmem:[%s2626 + $0x24] sm:$0xf]
        %v2638 = vshrl.u32 %v2615, 16
        %v2650 = vunpack.c.l.b16 %v2627
        %v2651 = vunpack.c.l.b16 %v2628
        %v2652 = vunpack.c.l.b16 %v2629
        %v2653 = vunpack.c.l.b16 %v2630
        %v2654 = vunpack.c.l.b16 %v2631
        %v2655 = vunpack.c.l.b16 %v2632
        %v2656 = vunpack.c.l.b16 %v2633
        %v2657 = vunpack.c.l.b16 %v2634
        %v2658 = vunpack.c.l.b16 %v2635
        %v2659 = vunpack.c.l.b16 %v2636
        %v2660 = vpack.c.b16 %v2651, %v2650
        %v2661 = vpack.c.b16 %v2653, %v2652
        %v2662 = vpack.c.b16 %v2655, %v2654
        %v2663 = vpack.c.b16 %v2657, %v2656
        %v2664 = vpack.c.b16 %v2659, %v2658
        %vm2670 = vcmask 654336
        %v2672 = vsel %vm2670, %v2638, 0
        %2674 = vmatprep.subr.bf16.mxu0 0
        %2675 = vmatpush1.bf16.msra.mxu0 %v2660
        %2676 = vmatprep.subr.bf16.mxu0 0
        %2677 = vmatpush1.bf16.msra.mxu0 %v2661
        %2678 = vmatprep.subr.bf16.mxu0 0
        %2679 = vmatpush1.bf16.msra.mxu0 %v2662
        %2680 = vmatprep.subr.bf16.mxu0 0
        %2681 = vmatpush1.bf16.msra.mxu0 %v2663
        %2682 = vmatprep.subr.bf16.mxu0 0
        %2683 = vmatpush1.bf16.msra.mxu0 %v2664
        %2684 = vmatprep.subr.bf16.mxu0 0
        %2685 = vmatpush1.bf16.msra.mxu0 0
        %2686 = vmatprep.subr.bf16.mxu0 0
        %2687 = vmatpush1.bf16.msra.mxu0 0
        %2688 = vmatprep.subr.bf16.mxu0 0
        %2689 = vmatpush1.bf16.msra.mxu0 0
        %2690 = vmatprep.subr.bf16.mxu0 0
        %2691 = vmatpush1.bf16.msra.mxu0 0
        %2692 = vmatprep.subr.bf16.mxu0 0
        %2693 = vmatpush1.bf16.msra.mxu0 0
        %2694 = vmatprep.subr.bf16.mxu0 0
        %2695 = vmatpush1.bf16.msra.mxu0 0
        %2696 = vmatprep.subr.bf16.mxu0 0
        %2697 = vmatpush1.bf16.msra.mxu0 0
        %2698 = vmatprep.subr.bf16.mxu0 0
        %2699 = vmatpush1.bf16.msra.mxu0 0
        %2700 = vmatprep.subr.bf16.mxu0 0
        %2701 = vmatpush1.bf16.msra.mxu0 0
        %2702 = vmatprep.subr.bf16.mxu0 0
        %2703 = vmatpush1.bf16.msra.mxu0 0
        %2704 = vmatprep.subr.bf16.mxu0 0
        %2705 = vmatpush1.bf16.msra.mxu0 0
        %2706 = vmatprep.mubr.bf16.mxu0 0
        %2707 = vmatmul.mubr.bf16.gmra.mrb[0].mxu0 %v2672
        %v2708 = vpop.f32.mrb[0].mxu0
        %v2709 = vadd.f32 0.0, %v2708
        %v2710 = vpop.f32.mrb[0].mxu0
        %v2711 = vpop.f32.mrb[0].mxu0
        %v2712 = vpop.f32.mrb[0].mxu0
        %2713 = vdwg.mxu0
        %v2724 = vunpack.c.l.b16 %v2616
        %v2725 = vunpack.c.l.b16 %v2617
        %v2726 = vunpack.c.l.b16 %v2618
        %v2727 = vunpack.c.l.b16 %v2619
        %v2728 = vunpack.c.l.b16 %v2620
        %v2729 = vunpack.c.l.b16 %v2621
        %v2730 = vunpack.c.l.b16 %v2622
        %v2731 = vunpack.c.l.b16 %v2623
        %v2732 = vunpack.c.l.b16 %v2624
        %v2733 = vunpack.c.l.b16 %v2625
        %v2734 = vpack.c.b16 %v2725, %v2724
        %v2735 = vpack.c.b16 %v2727, %v2726
        %v2736 = vpack.c.b16 %v2729, %v2728
        %v2737 = vpack.c.b16 %v2731, %v2730
        %v2738 = vpack.c.b16 %v2733, %v2732
        %v2744 = vsel %vm2670, %v2615, 0
        %2746 = vmatprep.subr.bf16.mxu0 0
        %2747 = vmatpush1.bf16.msra.mxu0 %v2734
        %2748 = vmatprep.subr.bf16.mxu0 0
        %2749 = vmatpush1.bf16.msra.mxu0 %v2735
        %2750 = vmatprep.subr.bf16.mxu0 0
        %2751 = vmatpush1.bf16.msra.mxu0 %v2736
        %2752 = vmatprep.subr.bf16.mxu0 0
        %2753 = vmatpush1.bf16.msra.mxu0 %v2737
        %2754 = vmatprep.subr.bf16.mxu0 0
        %2755 = vmatpush1.bf16.msra.mxu0 %v2738
        %2756 = vmatprep.subr.bf16.mxu0 0
        %2757 = vmatpush1.bf16.msra.mxu0 0
        %2758 = vmatprep.subr.bf16.mxu0 0
        %2759 = vmatpush1.bf16.msra.mxu0 0
        %2760 = vmatprep.subr.bf16.mxu0 0
        %2761 = vmatpush1.bf16.msra.mxu0 0
        %2762 = vmatprep.subr.bf16.mxu0 0
        %2763 = vmatpush1.bf16.msra.mxu0 0
        %2764 = vmatprep.subr.bf16.mxu0 0
        %2765 = vmatpush1.bf16.msra.mxu0 0
        %2766 = vmatprep.subr.bf16.mxu0 0
        %2767 = vmatpush1.bf16.msra.mxu0 0
        %2768 = vmatprep.subr.bf16.mxu0 0
        %2769 = vmatpush1.bf16.msra.mxu0 0
        %2770 = vmatprep.subr.bf16.mxu0 0
        %2771 = vmatpush1.bf16.msra.mxu0 0
        %2772 = vmatprep.subr.bf16.mxu0 0
        %2773 = vmatpush1.bf16.msra.mxu0 0
        %2774 = vmatprep.subr.bf16.mxu0 0
        %2775 = vmatpush1.bf16.msra.mxu0 0
        %2776 = vmatprep.subr.bf16.mxu0 0
        %2777 = vmatpush1.bf16.msra.mxu0 0
        %2778 = vmatprep.mubr.bf16.mxu0 0
        %2779 = vmatmul.mubr.bf16.gmra.mrb[0].mxu0 %v2744
        %v2780 = vpop.f32.mrb[0].mxu0
        %v2781 = vadd.f32 %v2709, %v2780
        %v2782 = vpop.f32.mrb[0].mxu0
        %v2783 = vpop.f32.mrb[0].mxu0
        %v2784 = vpop.f32.mrb[0].mxu0
        %2785 = vdwg.mxu0
        %s2786 = scalar_lea.vmem %s9, 80
        %v2787 = vld [vmem:[%s2786] sm:$0xf]
        %v2788 = vld [vmem:[%s2786 + $0x4] sm:$0xf]
        %v2789 = vld [vmem:[%s2786 + $0x8] sm:$0xf]
        %v2790 = vld [vmem:[%s2786 + $0xc] sm:$0xf]
        %v2791 = vld [vmem:[%s2786 + $0x10] sm:$0xf]
        %v2792 = vld [vmem:[%s2786 + $0x14] sm:$0xf]
        %v2793 = vld [vmem:[%s2786 + $0x18] sm:$0xf]
        %v2794 = vld [vmem:[%s2786 + $0x1c] sm:$0xf]
        %v2795 = vld [vmem:[%s2786 + $0x20] sm:$0xf]
        %v2796 = vld [vmem:[%s2786 + $0x24] sm:$0xf]
        %v2798 = vrot.slane %v2615, 1
        %v2809 = vunpack.c.l.b16 %v2787
        %v2810 = vunpack.c.l.b16 %v2788
        %v2811 = vunpack.c.l.b16 %v2789
        %v2812 = vunpack.c.l.b16 %v2790
        %v2813 = vunpack.c.l.b16 %v2791
        %v2814 = vunpack.c.l.b16 %v2792
        %v2815 = vunpack.c.l.b16 %v2793
        %v2816 = vunpack.c.l.b16 %v2794
        %v2817 = vunpack.c.l.b16 %v2795
        %v2818 = vunpack.c.l.b16 %v2796
        %v2819 = vpack.c.b16 %v2810, %v2809
        %v2820 = vpack.c.b16 %v2812, %v2811
        %v2821 = vpack.c.b16 %v2814, %v2813
        %v2822 = vpack.c.b16 %v2816, %v2815
        %v2823 = vpack.c.b16 %v2818, %v2817
        %v2830 = vsel %vm2670, %v2798, 0
        %2832 = vmatprep.subr.bf16.mxu0 0
        %2833 = vmatpush1.bf16.msra.mxu0 %v2819
        %2834 = vmatprep.subr.bf16.mxu0 0
        %2835 = vmatpush1.bf16.msra.mxu0 %v2820
        %2836 = vmatprep.subr.bf16.mxu0 0
        %2837 = vmatpush1.bf16.msra.mxu0 %v2821
        %2838 = vmatprep.subr.bf16.mxu0 0
        %2839 = vmatpush1.bf16.msra.mxu0 %v2822
        %2840 = vmatprep.subr.bf16.mxu0 0
        %2841 = vmatpush1.bf16.msra.mxu0 %v2823
        %2842 = vmatprep.subr.bf16.mxu0 0
        %2843 = vmatpush1.bf16.msra.mxu0 0
        %2844 = vmatprep.subr.bf16.mxu0 0
        %2845 = vmatpush1.bf16.msra.mxu0 0
        %2846 = vmatprep.subr.bf16.mxu0 0
        %2847 = vmatpush1.bf16.msra.mxu0 0
        %2848 = vmatprep.subr.bf16.mxu0 0
        %2849 = vmatpush1.bf16.msra.mxu0 0
        %2850 = vmatprep.subr.bf16.mxu0 0
        %2851 = vmatpush1.bf16.msra.mxu0 0
        %2852 = vmatprep.subr.bf16.mxu0 0
        %2853 = vmatpush1.bf16.msra.mxu0 0
        %2854 = vmatprep.subr.bf16.mxu0 0
        %2855 = vmatpush1.bf16.msra.mxu0 0
        %2856 = vmatprep.subr.bf16.mxu0 0
        %2857 = vmatpush1.bf16.msra.mxu0 0
        %2858 = vmatprep.subr.bf16.mxu0 0
        %2859 = vmatpush1.bf16.msra.mxu0 0
        %2860 = vmatprep.subr.bf16.mxu0 0
        %2861 = vmatpush1.bf16.msra.mxu0 0
        %2862 = vmatprep.subr.bf16.mxu0 0
        %2863 = vmatpush1.bf16.msra.mxu0 0
        %2864 = vmatprep.mubr.bf16.mxu0 0
        %2865 = vmatmul.mubr.bf16.gmra.mrb[0].mxu0 %v2830
        %v2866 = vpop.f32.mrb[0].mxu0
        %v2867 = vadd.f32 0.0, %v2866
        %v2868 = vpop.f32.mrb[0].mxu0
        %v2869 = vpop.f32.mrb[0].mxu0
        %v2870 = vpop.f32.mrb[0].mxu0
        %2871 = vdwg.mxu0
        %v2872 = vadd.f32 %v2781, %v2867
        %s2873 = scalar_lea.vmem %s9, 120
        %v2874 = vld [vmem:[%s2873] sm:$0xf]
        %v2875 = vld [vmem:[%s2873 + $0x4] sm:$0xf]
        %v2876 = vld [vmem:[%s2873 + $0x8] sm:$0xf]
        %v2877 = vld [vmem:[%s2873 + $0xc] sm:$0xf]
        %v2878 = vld [vmem:[%s2873 + $0x10] sm:$0xf]
        %v2879 = vld [vmem:[%s2873 + $0x14] sm:$0xf]
        %v2880 = vld [vmem:[%s2873 + $0x18] sm:$0xf]
        %v2881 = vld [vmem:[%s2873 + $0x1c] sm:$0xf]
        %v2882 = vld [vmem:[%s2873 + $0x20] sm:$0xf]
        %v2883 = vld [vmem:[%s2873 + $0x24] sm:$0xf]
        %v2884 = vrot.slane %v2638, 1
        %v2895 = vunpack.c.l.b16 %v2874
        %v2896 = vunpack.c.l.b16 %v2875
        %v2897 = vunpack.c.l.b16 %v2876
        %v2898 = vunpack.c.l.b16 %v2877
        %v2899 = vunpack.c.l.b16 %v2878
        %v2900 = vunpack.c.l.b16 %v2879
        %v2901 = vunpack.c.l.b16 %v2880
        %v2902 = vunpack.c.l.b16 %v2881
        %v2903 = vunpack.c.l.b16 %v2882
        %v2904 = vunpack.c.l.b16 %v2883
        %v2905 = vpack.c.b16 %v2896, %v2895
        %v2906 = vpack.c.b16 %v2898, %v2897
        %v2907 = vpack.c.b16 %v2900, %v2899
        %v2908 = vpack.c.b16 %v2902, %v2901
        %v2909 = vpack.c.b16 %v2904, %v2903
        %v2916 = vsel %vm2670, %v2884, 0
        %2918 = vmatprep.subr.bf16.mxu0 0
        %2919 = vmatpush1.bf16.msra.mxu0 %v2905
        %2920 = vmatprep.subr.bf16.mxu0 0
        %2921 = vmatpush1.bf16.msra.mxu0 %v2906
        %2922 = vmatprep.subr.bf16.mxu0 0
        %2923 = vmatpush1.bf16.msra.mxu0 %v2907
        %2924 = vmatprep.subr.bf16.mxu0 0
        %2925 = vmatpush1.bf16.msra.mxu0 %v2908
        %2926 = vmatprep.subr.bf16.mxu0 0
        %2927 = vmatpush1.bf16.msra.mxu0 %v2909
        %2928 = vmatprep.subr.bf16.mxu0 0
        %2929 = vmatpush1.bf16.msra.mxu0 0
        %2930 = vmatprep.subr.bf16.mxu0 0
        %2931 = vmatpush1.bf16.msra.mxu0 0
        %2932 = vmatprep.subr.bf16.mxu0 0
        %2933 = vmatpush1.bf16.msra.mxu0 0
        %2934 = vmatprep.subr.bf16.mxu0 0
        %2935 = vmatpush1.bf16.msra.mxu0 0
        %2936 = vmatprep.subr.bf16.mxu0 0
        %2937 = vmatpush1.bf16.msra.mxu0 0
        %2938 = vmatprep.subr.bf16.mxu0 0
        %2939 = vmatpush1.bf16.msra.mxu0 0
        %2940 = vmatprep.subr.bf16.mxu0 0
        %2941 = vmatpush1.bf16.msra.mxu0 0
        %2942 = vmatprep.subr.bf16.mxu0 0
        %2943 = vmatpush1.bf16.msra.mxu0 0
        %2944 = vmatprep.subr.bf16.mxu0 0
        %2945 = vmatpush1.bf16.msra.mxu0 0
        %2946 = vmatprep.subr.bf16.mxu0 0
        %2947 = vmatpush1.bf16.msra.mxu0 0
        %2948 = vmatprep.subr.bf16.mxu0 0
        %2949 = vmatpush1.bf16.msra.mxu0 0
        %2950 = vmatprep.mubr.bf16.mxu0 0
        %2951 = vmatmul.mubr.bf16.gmra.mrb[0].mxu0 %v2916
        %v2952 = vpop.f32.mrb[0].mxu0
        %v2953 = vadd.f32 0.0, %v2952
        %v2954 = vpop.f32.mrb[0].mxu0
        %v2955 = vpop.f32.mrb[0].mxu0
        %v2956 = vpop.f32.mrb[0].mxu0
        %2957 = vdwg.mxu0
        %v2958 = vadd.f32 %v2872, %v2953
        %s2959 = scalar_lea.vmem %s9, 160
        %v2960 = vld [vmem:[%s2959] sm:$0xf]
        %v2961 = vld [vmem:[%s2959 + $0x4] sm:$0xf]
        %v2962 = vld [vmem:[%s2959 + $0x8] sm:$0xf]
        %v2963 = vld [vmem:[%s2959 + $0xc] sm:$0xf]
        %v2964 = vld [vmem:[%s2959 + $0x10] sm:$0xf]
        %v2965 = vld [vmem:[%s2959 + $0x14] sm:$0xf]
        %v2966 = vld [vmem:[%s2959 + $0x18] sm:$0xf]
        %v2967 = vld [vmem:[%s2959 + $0x1c] sm:$0xf]
        %v2968 = vld [vmem:[%s2959 + $0x20] sm:$0xf]
        %v2969 = vld [vmem:[%s2959 + $0x24] sm:$0xf]
        %v2970 = vrot.slane %v2615, 2
        %v2981 = vunpack.c.l.b16 %v2960
        %v2982 = vunpack.c.l.b16 %v2961
        %v2983 = vunpack.c.l.b16 %v2962
        %v2984 = vunpack.c.l.b16 %v2963
        %v2985 = vunpack.c.l.b16 %v2964
        %v2986 = vunpack.c.l.b16 %v2965
        %v2987 = vunpack.c.l.b16 %v2966
        %v2988 = vunpack.c.l.b16 %v2967
        %v2989 = vunpack.c.l.b16 %v2968
        %v2990 = vunpack.c.l.b16 %v2969
        %v2991 = vpack.c.b16 %v2982, %v2981
        %v2992 = vpack.c.b16 %v2984, %v2983
        %v2993 = vpack.c.b16 %v2986, %v2985
        %v2994 = vpack.c.b16 %v2988, %v2987
        %v2995 = vpack.c.b16 %v2990, %v2989
        %v3002 = vsel %vm2670, %v2970, 0
        %3004 = vmatprep.subr.bf16.mxu0 0
        %3005 = vmatpush1.bf16.msra.mxu0 %v2991
        %3006 = vmatprep.subr.bf16.mxu0 0
        %3007 = vmatpush1.bf16.msra.mxu0 %v2992
        %3008 = vmatprep.subr.bf16.mxu0 0
        %3009 = vmatpush1.bf16.msra.mxu0 %v2993
        %3010 = vmatprep.subr.bf16.mxu0 0
        %3011 = vmatpush1.bf16.msra.mxu0 %v2994
        %3012 = vmatprep.subr.bf16.mxu0 0
        %3013 = vmatpush1.bf16.msra.mxu0 %v2995
        %3014 = vmatprep.subr.bf16.mxu0 0
        %3015 = vmatpush1.bf16.msra.mxu0 0
        %3016 = vmatprep.subr.bf16.mxu0 0
        %3017 = vmatpush1.bf16.msra.mxu0 0
        %3018 = vmatprep.subr.bf16.mxu0 0
        %3019 = vmatpush1.bf16.msra.mxu0 0
        %3020 = vmatprep.subr.bf16.mxu0 0
        %3021 = vmatpush1.bf16.msra.mxu0 0
        %3022 = vmatprep.subr.bf16.mxu0 0
        %3023 = vmatpush1.bf16.msra.mxu0 0
        %3024 = vmatprep.subr.bf16.mxu0 0
        %3025 = vmatpush1.bf16.msra.mxu0 0
        %3026 = vmatprep.subr.bf16.mxu0 0
        %3027 = vmatpush1.bf16.msra.mxu0 0
        %3028 = vmatprep.subr.bf16.mxu0 0
        %3029 = vmatpush1.bf16.msra.mxu0 0
        %3030 = vmatprep.subr.bf16.mxu0 0
        %3031 = vmatpush1.bf16.msra.mxu0 0
        %3032 = vmatprep.subr.bf16.mxu0 0
        %3033 = vmatpush1.bf16.msra.mxu0 0
        %3034 = vmatprep.subr.bf16.mxu0 0
        %3035 = vmatpush1.bf16.msra.mxu0 0
        %3036 = vmatprep.mubr.bf16.mxu0 0
        %3037 = vmatmul.mubr.bf16.gmra.mrb[0].mxu0 %v3002
        %v3038 = vpop.f32.mrb[0].mxu0
        %v3039 = vadd.f32 0.0, %v3038
        %v3040 = vpop.f32.mrb[0].mxu0
        %v3041 = vpop.f32.mrb[0].mxu0
        %v3042 = vpop.f32.mrb[0].mxu0
        %3043 = vdwg.mxu0
        %v3044 = vadd.f32 %v2958, %v3039
        %v3045 = vld [vmem:[%s10] sm:$0x1]
        %v3046 = vadd.f32 %v3044, %v3045
        %v3047 = vmax.f32 %v3046, 0.0
        %v3048 = vpack.c.bf16 %v3047, %v3047
        %v3049 = vld [vmem:[%s11] sm:$0xf]
        %v3050 = vld [vmem:[%s11 + $0x4] sm:$0xf]
        %v3051 = vld [vmem:[%s11 + $0x8] sm:$0xf]
        %v3052 = vld [vmem:[%s11 + $0xc] sm:$0xf]
        %v3053 = vld [vmem:[%s11 + $0x10] sm:$0xf]
        %v3054 = vld [vmem:[%s11 + $0x14] sm:$0xf]
        %v3055 = vld [vmem:[%s11 + $0x18] sm:$0xf]
        %v3056 = vld [vmem:[%s11 + $0x1c] sm:$0xf]
        %v3057 = vld [vmem:[%s11 + $0x20] sm:$0xf]
        %v3058 = vld [vmem:[%s11 + $0x24] sm:$0xf]
        %v3059 = vld [vmem:[%s11 + $0x28] sm:$0xf]
        %v3060 = vld [vmem:[%s11 + $0x2c] sm:$0xf]
        %v3061 = vld [vmem:[%s11 + $0x30] sm:$0xf]
        %v3062 = vld [vmem:[%s11 + $0x34] sm:$0xf]
        %v3063 = vld [vmem:[%s11 + $0x38] sm:$0xf]
        %v3064 = vld [vmem:[%s12] sm:$0x1]
        %v3080 = vunpack.c.l.b16 %v3049
        %v3081 = vunpack.c.l.b16 %v3050
        %v3082 = vunpack.c.l.b16 %v3051
        %v3083 = vunpack.c.l.b16 %v3052
        %v3084 = vunpack.c.l.b16 %v3053
        %v3085 = vunpack.c.l.b16 %v3054
        %v3086 = vunpack.c.l.b16 %v3055
        %v3087 = vunpack.c.l.b16 %v3056
        %v3088 = vunpack.c.l.b16 %v3057
        %v3089 = vunpack.c.l.b16 %v3058
        %v3090 = vunpack.c.l.b16 %v3059
        %v3091 = vunpack.c.l.b16 %v3060
        %v3092 = vunpack.c.l.b16 %v3061
        %v3093 = vunpack.c.l.b16 %v3062
        %v3094 = vunpack.c.l.b16 %v3063
        %v3095 = vpack.c.b16 %v3081, %v3080
        %v3096 = vpack.c.b16 %v3083, %v3082
        %v3097 = vpack.c.b16 %v3085, %v3084
        %v3098 = vpack.c.b16 %v3087, %v3086
        %v3099 = vpack.c.b16 %v3089, %v3088
        %v3100 = vpack.c.b16 %v3091, %v3090
        %v3101 = vpack.c.b16 %v3093, %v3092
        %v3102 = vpack.c.b16 %v3094, %v3094
        %vm3110 = vcmask 982016
        %v3112 = vsel %vm3110, %v3048, 0
        %v3115 = vsel %vm1252, %v3102, 0
        %3117 = vmatprep.subr.bf16.mxu0 0
        %3118 = vmatpush1.bf16.msra.mxu0 %v3095
        %3119 = vmatprep.subr.bf16.mxu0 0
        %3120 = vmatpush1.bf16.msra.mxu0 %v3096
        %3121 = vmatprep.subr.bf16.mxu0 0
        %3122 = vmatpush1.bf16.msra.mxu0 %v3097
        %3123 = vmatprep.subr.bf16.mxu0 0
        %3124 = vmatpush1.bf16.msra.mxu0 %v3098
        %3125 = vmatprep.subr.bf16.mxu0 0
        %3126 = vmatpush1.bf16.msra.mxu0 %v3099
        %3127 = vmatprep.subr.bf16.mxu0 0
        %3128 = vmatpush1.bf16.msra.mxu0 %v3100
        %3129 = vmatprep.subr.bf16.mxu0 0
        %3130 = vmatpush1.bf16.msra.mxu0 %v3101
        %3131 = vmatprep.subr.bf16.mxu0 0
        %3132 = vmatpush1.bf16.msra.mxu0 %v3115
        %3133 = vmatprep.subr.bf16.mxu0 0
        %3134 = vmatpush1.bf16.msra.mxu0 0
        %3135 = vmatprep.subr.bf16.mxu0 0
        %3136 = vmatpush1.bf16.msra.mxu0 0
        %3137 = vmatprep.subr.bf16.mxu0 0
        %3138 = vmatpush1.bf16.msra.mxu0 0
        %3139 = vmatprep.subr.bf16.mxu0 0
        %3140 = vmatpush1.bf16.msra.mxu0 0
        %3141 = vmatprep.subr.bf16.mxu0 0
        %3142 = vmatpush1.bf16.msra.mxu0 0
        %3143 = vmatprep.subr.bf16.mxu0 0
        %3144 = vmatpush1.bf16.msra.mxu0 0
        %3145 = vmatprep.subr.bf16.mxu0 0
        %3146 = vmatpush1.bf16.msra.mxu0 0
        %3147 = vmatprep.subr.bf16.mxu0 0
        %3148 = vmatpush1.bf16.msra.mxu0 0
        %3149 = vmatprep.mubr.bf16.mxu0 0
        %3150 = vmatmul.mubr.bf16.gmra.mrb[0].mxu0 %v3112
        %v3151 = vpop.f32.mrb[0].mxu0
        %v3152 = vadd.f32 %v3064, %v3151
        %v3153 = vpop.f32.mrb[0].mxu0
        %v3154 = vpop.f32.mrb[0].mxu0
        %v3155 = vpop.f32.mrb[0].mxu0
        %3156 = vdwg.mxu0
        %v3157 = vmax.f32 %v3152, 0.0
        %v3158 = vpack.c.bf16 %v3157, %v3157
        %v3159 = vld [vmem:[%s13] sm:$0xf]
        %v3160 = vld [vmem:[%s13 + $0x4] sm:$0xf]
        %v3161 = vld [vmem:[%s13 + $0x8] sm:$0xf]
        %v3162 = vld [vmem:[%s13 + $0xc] sm:$0xf]
        %v3163 = vld [vmem:[%s13 + $0x10] sm:$0xf]
        %v3164 = vld [vmem:[%s13 + $0x14] sm:$0xf]
        %v3165 = vld [vmem:[%s13 + $0x18] sm:$0xf]
        %v3166 = vld [vmem:[%s13 + $0x1c] sm:$0xf]
        %v3167 = vld [vmem:[%s13 + $0x20] sm:$0xf]
        %v3168 = vld [vmem:[%s13 + $0x24] sm:$0xf]
        %v3169 = vld [vmem:[%s13 + $0x28] sm:$0x3]
        %v3170 = vld [vmem:[%s14] sm:$0x1]
        %v3182 = vunpack.c.l.b16 %v3159
        %v3183 = vunpack.c.l.b16 %v3160
        %v3184 = vunpack.c.l.b16 %v3161
        %v3185 = vunpack.c.l.b16 %v3162
        %v3186 = vunpack.c.l.b16 %v3163
        %v3187 = vunpack.c.l.b16 %v3164
        %v3188 = vunpack.c.l.b16 %v3165
        %v3189 = vunpack.c.l.b16 %v3166
        %v3190 = vunpack.c.l.b16 %v3167
        %v3191 = vunpack.c.l.b16 %v3168
        %v3192 = vunpack.c.l.b16 %v3169
        %v3193 = vpack.c.b16 %v3183, %v3182
        %v3194 = vpack.c.b16 %v3185, %v3184
        %v3195 = vpack.c.b16 %v3187, %v3186
        %v3196 = vpack.c.b16 %v3189, %v3188
        %v3197 = vpack.c.b16 %v3191, %v3190
        %v3198 = vpack.c.b16 %v3192, %v3192
        %v3205 = vsel %vm1714, %v3158, 0
        %v3208 = vsel %vm1718, %v3198, 0
        %3210 = vmatprep.subr.bf16.mxu0 0
        %3211 = vmatpush1.bf16.msra.mxu0 %v3193
        %3212 = vmatprep.subr.bf16.mxu0 0
        %3213 = vmatpush1.bf16.msra.mxu0 %v3194
        %3214 = vmatprep.subr.bf16.mxu0 0
        %3215 = vmatpush1.bf16.msra.mxu0 %v3195
        %3216 = vmatprep.subr.bf16.mxu0 0
        %3217 = vmatpush1.bf16.msra.mxu0 %v3196
        %3218 = vmatprep.subr.bf16.mxu0 0
        %3219 = vmatpush1.bf16.msra.mxu0 %v3197
        %3220 = vmatprep.subr.bf16.mxu0 0
        %3221 = vmatpush1.bf16.msra.mxu0 %v3208
        %3222 = vmatprep.subr.bf16.mxu0 0
        %3223 = vmatpush1.bf16.msra.mxu0 0
        %3224 = vmatprep.subr.bf16.mxu0 0
        %3225 = vmatpush1.bf16.msra.mxu0 0
        %3226 = vmatprep.subr.bf16.mxu0 0
        %3227 = vmatpush1.bf16.msra.mxu0 0
        %3228 = vmatprep.subr.bf16.mxu0 0
        %3229 = vmatpush1.bf16.msra.mxu0 0
        %3230 = vmatprep.subr.bf16.mxu0 0
        %3231 = vmatpush1.bf16.msra.mxu0 0
        %3232 = vmatprep.subr.bf16.mxu0 0
        %3233 = vmatpush1.bf16.msra.mxu0 0
        %3234 = vmatprep.subr.bf16.mxu0 0
        %3235 = vmatpush1.bf16.msra.mxu0 0
        %3236 = vmatprep.subr.bf16.mxu0 0
        %3237 = vmatpush1.bf16.msra.mxu0 0
        %3238 = vmatprep.subr.bf16.mxu0 0
        %3239 = vmatpush1.bf16.msra.mxu0 0
        %3240 = vmatprep.subr.bf16.mxu0 0
        %3241 = vmatpush1.bf16.msra.mxu0 0
        %3242 = vmatprep.mubr.bf16.mxu0 0
        %3243 = vmatmul.mubr.bf16.gmra.mrb[0].mxu0 %v3205
        %v3244 = vpop.f32.mrb[0].mxu0
        %v3245 = vadd.f32 %v3170, %v3244
        %v3246 = vpop.f32.mrb[0].mxu0
        %v3247 = vpop.f32.mrb[0].mxu0
        %v3248 = vpop.f32.mrb[0].mxu0
        %3249 = vdwg.mxu0
        %vm3250 = vcmask 73728
        %3251 = vst.msk [vmem:[%s486] sm:$0x1] %vm3250, %v3245
        %s3252 = sand.u32 %s357, 1
        %s3253 = scalar_lea.sflag [#allocation3], %s3252
        %s3254 = sand.u32 %s357, 1
        %s3255 = scalar_lea.vmem [#allocation2], %s3254
        // Predicated region
        $region81: #{net_forward.1} parent=79 // pred_check
          %p3256 = pneg %p367
        $region82: #{net_forward.1} parent=79 // pred_check_branch
          %3258 = sbr.rel (%p3256) target = $region84
        $region83: #{net_forward.1} parent=79 // pred_region
          %s3260 = ssub.s32 16, 16
          %3261 = vsyncadd %s3253, %s3260
          %s3262 = smul.addr %s29, 16
          %s3263 = scalar_lea.hbm %s15, %s3262
          %s3265 = sshll.u32 %s3255, 4
          %s3266 = int_to_ptr.vmem [resolvable:$true] %s3265
          %3268 = dma.vmem_to_hbm [thread:$0]  %s3266, 16, %s3263, %s3253
        $region84: #{net_forward.1} parent=79 // pred_fallthru
          _
      $region80: #{net_forward.1} parent=5 // pred_fallthru
        _
      %p3269 = scmp.le.s32.totalorder 2, %s24
      // Predicated region
      $region85: #{net_forward.1} parent=5 // pred_check
        %p3270 = pneg %p3269
      $region86: #{net_forward.1} parent=5 // pred_check_branch
        %3272 = sbr.rel (%p3270) target = $region88
      $region87: #{net_forward.1} parent=5 // pred_region
        %s3273 = ssub.s32 %s24, 2
        // Predicated region
        $region89: #{net_forward.1} parent=87 // pred_check
          %p3274 = pneg %p373
        $region90: #{net_forward.1} parent=87 // pred_check_branch
          %3276 = sbr.rel (%p3274) target = $region92
        $region91: #{net_forward.1} parent=87 // pred_region
          %s3277 = sand.u32 %s358, 1
          %s3278 = scalar_lea.sflag [#allocation3], %s3277
          %s3279 = sand.u32 %s358, 1
          %s3280 = scalar_lea.vmem [#allocation2], %s3279
          %3281 = dma.done %s3278, 16
        $region92: #{net_forward.1} parent=87 // pred_fallthru
          _
      $region88: #{net_forward.1} parent=5 // pred_fallthru
        _
    $region6: #{net_forward.1} parent=1 // loop_footer
      %s28 = sadd.s32 1, %s24
    $region7: #{net_forward.1} parent=1 // loop_footer_branch
      %23 = sbr.rel target = $region3
    $region8: #{net_forward.1} parent=1 // loop_exit
      _
    %3282 = vsyncpa [#allocation3], 1
    %s3283 = scalar_lea.sflag [#allocation3], 1
    %3284 = vsyncpa %s3283, 1

</llo_original>
